<compile_context>
chip_gen: v6e
topology: v6e:2x2x1
jax: 0.10.0
libtpu: 0.0.40
codegen_flags: <defaults>
</compile_context>

<pallas_src>
import jax
import jax.numpy as jnp
from jax import lax
from jax.experimental import pallas as pl
from jax.experimental.pallas import tpu as pltpu


def _make_block_kernel(*, N, W, C, C_out, PAD, eps, inv_count, norm, use_ss):
    def kernel(*refs):
        idx = 0
        x_ref = refs[idx]; idx += 1
        if norm:
            gamma_ref, beta_ref, gmask_ref = refs[idx], refs[idx + 1], refs[idx + 2]
            idx += 3
        if use_ss:
            scale_ref, shift_ref = refs[idx], refs[idx + 1]
            idx += 2
        w_ref, bias_ref, out_ref, ypad_ref = (
            refs[idx], refs[idx + 1], refs[idx + 2], refs[idx + 3])

        x = x_ref[0]                                         # (N, C) f32

        # ---- GroupNorm (biased variance, matches torch.nn.GroupNorm) ----
        if norm:
            gsum = jnp.sum(
                jnp.dot(x, gmask_ref[...], preferred_element_type=jnp.float32),
                axis=0, keepdims=True)                       # (1, C) group sums, per-channel bcast
            gsumsq = jnp.sum(
                jnp.dot(x * x, gmask_ref[...], preferred_element_type=jnp.float32),
                axis=0, keepdims=True)
            mean = gsum * inv_count
            var = gsumsq * inv_count - mean * mean
            y = (x - mean) * lax.rsqrt(var + eps)
            y = y * gamma_ref[...] + beta_ref[...]
        else:
            y = x

        # ---- optional FiLM-style scale/shift: x * (scale + 1) + shift ----
        if use_ss:
            y = y * (scale_ref[0] + 1.0) + shift_ref[0]

        # ---- SiLU ----
        y = y * (1.0 / (1.0 + jnp.exp(-y)))

        # ---- 3x3 conv (padding=1) as 9 shifted matmuls ----
        # Zero the (aligned) halo every grid step (megacore-safe), store the
        # activated slab in the centre, then read shifted windows.
        ypad_ref[pl.ds(0, PAD), :] = jnp.zeros((PAD, C), jnp.float32)
        ypad_ref[pl.ds(PAD + N, PAD), :] = jnp.zeros((PAD, C), jnp.float32)
        ypad_ref[pl.ds(PAD, N), :] = y

        col = lax.broadcasted_iota(jnp.int32, (N, 1), 0) % W
        left_ok = col >= 1            # source column w-1 exists
        right_ok = col < (W - 1)      # source column w+1 exists

        acc = jnp.zeros((N, C_out), jnp.float32)
        for ky in range(3):
            for kx in range(3):
                dy, dx = ky - 1, kx - 1
                shift = dy * W + dx
                patch = ypad_ref[pl.ds(PAD + shift, N), :]   # (N, C), zero outside image rows
                if dx == -1:
                    patch = jnp.where(left_ok, patch, 0.0)
                elif dx == 1:
                    patch = jnp.where(right_ok, patch, 0.0)
                k = ky * 3 + kx
                w_tap = w_ref[pl.ds(k * C, C), :]            # (C, C_out)
                acc = acc + jnp.dot(patch, w_tap, preferred_element_type=jnp.float32)

        out_ref[0] = (acc + bias_ref[...]).astype(out_ref.dtype)

    return kernel


def block_forward(x_nchw, gamma, beta, conv_w, conv_b, scale_shift=None, *,
                  groups=8, eps=1e-5, norm=True):
    """Pallas TPU forward of Block.  x_nchw: (B, C, H, W)."""
    B, C, H, W = x_nchw.shape
    C_out = conv_w.shape[0]
    N = H * W
    use_ss = scale_shift is not None

    # Channels-last, spatial flattened (channels on lanes = contraction dim).
    x3 = jnp.transpose(x_nchw, (0, 2, 3, 1)).reshape(B, N, C).astype(jnp.float32)

    # Trace-time constants (nothing static recomputed in-kernel).
    PAD = ((W + 1 + 7) // 8) * 8                               # >= W+1, 8-aligned
    w2 = jnp.transpose(conv_w, (2, 3, 1, 0)).reshape(9 * C, C_out).astype(jnp.float32)
    b2 = conv_b.reshape(1, C_out).astype(jnp.float32)

    inputs = [x3]
    in_specs = [pl.BlockSpec((1, N, C), lambda b: (b, 0, 0))]
    inv_count = 1.0
    if norm:
        assert C % groups == 0, "GroupNorm requires C % groups == 0"
        cpg = C // groups
        inv_count = 1.0 / float(cpg * N)
        gidx = jnp.arange(C) // cpg
        gmask = (gidx[:, None] == gidx[None, :]).astype(jnp.float32)   # (C, C) 0/1
        inputs += [gamma.reshape(1, C).astype(jnp.float32),
                   beta.reshape(1, C).astype(jnp.float32),
                   gmask]
        in_specs += [pl.BlockSpec((1, C), lambda b: (0, 0)),
                     pl.BlockSpec((1, C), lambda b: (0, 0)),
                     pl.BlockSpec((C, C), lambda b: (0, 0))]
    if use_ss:
        scale, shift = scale_shift
        inputs += [scale.reshape(B, 1, C).astype(jnp.float32),
                   shift.reshape(B, 1, C).astype(jnp.float32)]
        in_specs += [pl.BlockSpec((1, 1, C), lambda b: (b, 0, 0)),
                     pl.BlockSpec((1, 1, C), lambda b: (b, 0, 0))]
    inputs += [w2, b2]
    in_specs += [pl.BlockSpec((9 * C, C_out), lambda b: (0, 0)),
                 pl.BlockSpec((1, C_out), lambda b: (0, 0))]

    kernel = _make_block_kernel(N=N, W=W, C=C, C_out=C_out, PAD=PAD, eps=eps,
                                inv_count=inv_count, norm=norm, use_ss=use_ss)

    cost = pl.CostEstimate(
        flops=2 * 9 * B * N * C * C_out + 12 * B * N * C,
        transcendentals=B * N * C + B * C,
        bytes_accessed=4 * (B * N * C + B * N * C_out + 9 * C * C_out
                            + C * C + 4 * C + 2 * C_out),
    )

    out3 = pl.pallas_call(
        kernel,
        out_shape=jax.ShapeDtypeStruct((B, N, C_out), jnp.float32),
        grid_spec=pltpu.PrefetchScalarGridSpec(
            num_scalar_prefetch=0,
            grid=(B,),
            in_specs=in_specs,
            out_specs=pl.BlockSpec((1, N, C_out), lambda b: (b, 0, 0)),
            scratch_shapes=[pltpu.VMEM((N + 2 * PAD, C), jnp.float32)],
        ),
        compiler_params=pltpu.CompilerParams(dimension_semantics=("parallel",)),
        cost_estimate=cost,
    )(*inputs)

    return jnp.transpose(out3.reshape(B, H, W, C_out), (0, 3, 1, 2))


def block_ref(x, gamma, beta, conv_w, conv_b, scale_shift=None, *,
              groups=8, eps=1e-5, norm=True):
    """Pure-JAX reference mirroring the PyTorch Block.forward."""
    B, C, H, W = x.shape
    C_out = conv_w.shape[0]
    h = x.astype(jnp.float32)
    if norm:
        cpg = C // groups
        xr = h.reshape(B, groups, cpg, H, W)
        mean = jnp.mean(xr, axis=(2, 3, 4), keepdims=True)
        var = jnp.var(xr, axis=(2, 3, 4), keepdims=True)
        h = ((xr - mean) * lax.rsqrt(var + eps)).reshape(B, C, H, W)
        h = h * gamma.reshape(1, C, 1, 1) + beta.reshape(1, C, 1, 1)
    if scale_shift is not None:
        scale, shift = scale_shift
        h = h * (scale.reshape(B, C, 1, 1) + 1.0) + shift.reshape(B, C, 1, 1)
    h = h * jax.nn.sigmoid(h)
    out = lax.conv_general_dilated(
        h, conv_w.astype(jnp.float32), window_strides=(1, 1),
        padding=((1, 1), (1, 1)), dimension_numbers=("NCHW", "OIHW", "NCHW"),
        precision=lax.Precision.HIGHEST)
    return out + conv_b.reshape(1, C_out, 1, 1)


if __name__ == "__main__":
    B, C, C_out, H, W, groups = 2, 32, 32, 16, 16, 8
    key = jax.random.PRNGKey(0)
    ks = jax.random.split(key, 7)
    x = jax.random.normal(ks[0], (B, C, H, W), jnp.float32)
    gamma = 1.0 + 0.1 * jax.random.normal(ks[1], (C,), jnp.float32)
    beta = 0.1 * jax.random.normal(ks[2], (C,), jnp.float32)
    conv_w = 0.1 * jax.random.normal(ks[3], (C_out, C, 3, 3), jnp.float32)
    conv_b = 0.1 * jax.random.normal(ks[4], (C_out,), jnp.float32)
    scale = 0.1 * jax.random.normal(ks[5], (B, C), jnp.float32)
    shift = 0.1 * jax.random.normal(ks[6], (B, C), jnp.float32)

    # TPU f32 matmuls may use reduced-precision MXU passes, so allow a few e-3.
    tol = dict(atol=2e-2, rtol=2e-2)

    # 1) norm=True with scale_shift (the ResnetBlock time-embedding path).
    out = jax.block_until_ready(
        block_forward(x, gamma, beta, conv_w, conv_b,
                      scale_shift=(scale, shift), groups=groups))
    ref = block_ref(x, gamma, beta, conv_w, conv_b,
                    scale_shift=(scale, shift), groups=groups)
    assert out.shape == (B, C_out, H, W), out.shape
    assert out.dtype == jnp.float32, out.dtype
    assert jnp.allclose(out, ref, **tol), float(jnp.max(jnp.abs(out - ref)))

    # 2) norm=True, no scale_shift.
    out2 = jax.block_until_ready(
        block_forward(x, gamma, beta, conv_w, conv_b, groups=groups))
    ref2 = block_ref(x, gamma, beta, conv_w, conv_b, groups=groups)
    assert jnp.allclose(out2, ref2, **tol), float(jnp.max(jnp.abs(out2 - ref2)))

    # 3) norm=False (Identity groupnorm) with scale_shift.
    out3 = jax.block_until_ready(
        block_forward(x, None, None, conv_w, conv_b,
                      scale_shift=(scale, shift), norm=False))
    ref3 = block_ref(x, None, None, conv_w, conv_b,
                     scale_shift=(scale, shift), norm=False)
    assert jnp.allclose(out3, ref3, **tol), float(jnp.max(jnp.abs(out3 - ref3)))

    print("KERNEL_OK")
</pallas_src>

<mosaic_0001>
module attributes {stable_mosaic.version = 11 : i64} {
  func.func @kernel(%arg0: i32, %arg1: memref<1x256x32xf32, #tpu.memory_space<vmem>>, %arg2: memref<1x32xf32, #tpu.memory_space<vmem>>, %arg3: memref<1x32xf32, #tpu.memory_space<vmem>>, %arg4: memref<32x32xf32, #tpu.memory_space<vmem>>, %arg5: memref<1x1x32xf32, #tpu.memory_space<vmem>>, %arg6: memref<1x1x32xf32, #tpu.memory_space<vmem>>, %arg7: memref<288x32xf32, #tpu.memory_space<vmem>>, %arg8: memref<1x32xf32, #tpu.memory_space<vmem>>, %arg9: memref<1x256x32xf32, #tpu.memory_space<vmem>>, %arg10: memref<304x32xf32, #tpu.memory_space<vmem>>) attributes {dimension_semantics = [#tpu.dimension_semantics<parallel>], iteration_bounds = array<i64: 2>, scalar_prefetch = 0 : i64, scratch_operands = 1 : i64, tpu.core_type = #tpu.core_type<tc>, window_params = [{transform_indices = @transform_0, window_bounds = array<i64: 1, 256, 32>}, {pipeline_mode = #tpu.pipeline_mode<synchronous>, transform_indices = @transform_1, window_bounds = array<i64: 1, 32>}, {pipeline_mode = #tpu.pipeline_mode<synchronous>, transform_indices = @transform_2, window_bounds = array<i64: 1, 32>}, {pipeline_mode = #tpu.pipeline_mode<synchronous>, transform_indices = @transform_3, window_bounds = array<i64: 32, 32>}, {transform_indices = @transform_4, window_bounds = array<i64: 1, 1, 32>}, {transform_indices = @transform_5, window_bounds = array<i64: 1, 1, 32>}, {pipeline_mode = #tpu.pipeline_mode<synchronous>, transform_indices = @transform_6, window_bounds = array<i64: 288, 32>}, {pipeline_mode = #tpu.pipeline_mode<synchronous>, transform_indices = @transform_7, window_bounds = array<i64: 1, 32>}, {transform_indices = @transform_8, window_bounds = array<i64: 1, 256, 32>}]} {
    %c0 = arith.constant 0 : index
    %c0_0 = arith.constant 0 : index
    %c0_1 = arith.constant 0 : index
    %0 = vector.load %arg1[%c0, %c0_0, %c0_1] : memref<1x256x32xf32, #tpu.memory_space<vmem>>, vector<1x256x32xf32>
    %1 = vector.shape_cast %0 : vector<1x256x32xf32> to vector<256x32xf32>
    %c0_2 = arith.constant 0 : index
    %c0_3 = arith.constant 0 : index
    %2 = vector.load %arg4[%c0_2, %c0_3] : memref<32x32xf32, #tpu.memory_space<vmem>>, vector<32x32xf32>
    %cst = arith.constant dense<0.000000e+00> : vector<256x32xf32>
    %3 = tpu.matmul %1, %2, %cst {dimension_numbers = #tpu.dot_dimension_numbers<[1], [0], [0], [1], [0, 0, 1, 1], [], []>} : vector<256x32xf32>, vector<32x32xf32>, vector<256x32xf32> -> vector<256x32xf32>
    %cst_4 = arith.constant dense<0.000000e+00> : vector<32xf32>
    %4 = vector.multi_reduction <add>, %3, %cst_4 [0] : vector<256x32xf32> to vector<32xf32>
    %5 = vector.shape_cast %4 : vector<32xf32> to vector<1x32xf32>
    %6 = arith.mulf %1, %1 : vector<256x32xf32>
    %c0_5 = arith.constant 0 : index
    %c0_6 = arith.constant 0 : index
    %7 = vector.load %arg4[%c0_5, %c0_6] : memref<32x32xf32, #tpu.memory_space<vmem>>, vector<32x32xf32>
    %cst_7 = arith.constant dense<0.000000e+00> : vector<256x32xf32>
    %8 = tpu.matmul %6, %7, %cst_7 {dimension_numbers = #tpu.dot_dimension_numbers<[1], [0], [0], [1], [0, 0, 1, 1], [], []>} : vector<256x32xf32>, vector<32x32xf32>, vector<256x32xf32> -> vector<256x32xf32>
    %cst_8 = arith.constant dense<0.000000e+00> : vector<32xf32>
    %9 = vector.multi_reduction <add>, %8, %cst_8 [0] : vector<256x32xf32> to vector<32xf32>
    %10 = vector.shape_cast %9 : vector<32xf32> to vector<1x32xf32>
    %cst_9 = arith.constant 9.765625E-4 : f32
    %11 = vector.broadcast %cst_9 : f32 to vector<1x32xf32>
    %12 = arith.mulf %5, %11 : vector<1x32xf32>
    %cst_10 = arith.constant 9.765625E-4 : f32
    %13 = vector.broadcast %cst_10 : f32 to vector<1x32xf32>
    %14 = arith.mulf %10, %13 : vector<1x32xf32>
    %15 = arith.mulf %12, %12 : vector<1x32xf32>
    %16 = arith.subf %14, %15 : vector<1x32xf32>
    %17 = vector.broadcast %12 : vector<1x32xf32> to vector<256x32xf32>
    %18 = arith.subf %1, %17 : vector<256x32xf32>
    %cst_11 = arith.constant 9.99999974E-6 : f32
    %19 = vector.broadcast %cst_11 : f32 to vector<1x32xf32>
    %20 = arith.addf %16, %19 : vector<1x32xf32>
    %21 = math.rsqrt %20 : vector<1x32xf32>
    %22 = vector.broadcast %21 : vector<1x32xf32> to vector<256x32xf32>
    %23 = arith.mulf %18, %22 : vector<256x32xf32>
    %c0_12 = arith.constant 0 : index
    %c0_13 = arith.constant 0 : index
    %24 = vector.load %arg2[%c0_12, %c0_13] : memref<1x32xf32, #tpu.memory_space<vmem>>, vector<1x32xf32>
    %25 = vector.broadcast %24 : vector<1x32xf32> to vector<256x32xf32>
    %26 = arith.mulf %23, %25 : vector<256x32xf32>
    %c0_14 = arith.constant 0 : index
    %c0_15 = arith.constant 0 : index
    %27 = vector.load %arg3[%c0_14, %c0_15] : memref<1x32xf32, #tpu.memory_space<vmem>>, vector<1x32xf32>
    %28 = vector.broadcast %27 : vector<1x32xf32> to vector<256x32xf32>
    %29 = arith.addf %26, %28 : vector<256x32xf32>
    %c0_16 = arith.constant 0 : index
    %c0_17 = arith.constant 0 : index
    %c0_18 = arith.constant 0 : index
    %30 = vector.load %arg5[%c0_16, %c0_17, %c0_18] : memref<1x1x32xf32, #tpu.memory_space<vmem>>, vector<1x1x32xf32>
    %31 = vector.shape_cast %30 : vector<1x1x32xf32> to vector<1x32xf32>
    %cst_19 = arith.constant 1.000000e+00 : f32
    %32 = vector.broadcast %cst_19 : f32 to vector<1x32xf32>
    %33 = arith.addf %31, %32 : vector<1x32xf32>
    %34 = vector.broadcast %33 : vector<1x32xf32> to vector<256x32xf32>
    %35 = arith.mulf %29, %34 : vector<256x32xf32>
    %c0_20 = arith.constant 0 : index
    %c0_21 = arith.constant 0 : index
    %c0_22 = arith.constant 0 : index
    %36 = vector.load %arg6[%c0_20, %c0_21, %c0_22] : memref<1x1x32xf32, #tpu.memory_space<vmem>>, vector<1x1x32xf32>
    %37 = vector.shape_cast %36 : vector<1x1x32xf32> to vector<1x32xf32>
    %38 = vector.broadcast %37 : vector<1x32xf32> to vector<256x32xf32>
    %39 = arith.addf %35, %38 : vector<256x32xf32>
    %cst_23 = arith.constant 0.000000e+00 : f32
    %40 = vector.broadcast %cst_23 : f32 to vector<256x32xf32>
    %41 = arith.subf %40, %39 : vector<256x32xf32>
    %42 = math.exp %41 : vector<256x32xf32>
    %cst_24 = arith.constant 1.000000e+00 : f32
    %43 = vector.broadcast %cst_24 : f32 to vector<256x32xf32>
    %44 = arith.addf %43, %42 : vector<256x32xf32>
    %cst_25 = arith.constant 1.000000e+00 : f32
    %45 = vector.broadcast %cst_25 : f32 to vector<256x32xf32>
    %46 = arith.divf %45, %44 : vector<256x32xf32>
    %47 = arith.mulf %39, %46 : vector<256x32xf32>
    %cst_26 = arith.constant 0.000000e+00 : f32
    %48 = vector.broadcast %cst_26 : f32 to vector<24x32xf32>
    %c0_27 = arith.constant 0 : index
    %c0_28 = arith.constant 0 : index
    %49 = vector.load %arg10[%c0_27, %c0_28] : memref<304x32xf32, #tpu.memory_space<vmem>>, vector<24x32xf32>
    tpu.vector_store %arg10[%c0_27, %c0_28], %48 {strides = array<i32>} : memref<304x32xf32, #tpu.memory_space<vmem>>, vector<24x32xf32>,
    %cst_29 = arith.constant 0.000000e+00 : f32
    %50 = vector.broadcast %cst_29 : f32 to vector<24x32xf32>
    %c280 = arith.constant 280 : index
    %c0_30 = arith.constant 0 : index
    %51 = vector.load %arg10[%c280, %c0_30] : memref<304x32xf32, #tpu.memory_space<vmem>>, vector<24x32xf32>
    tpu.vector_store %arg10[%c280, %c0_30], %50 {strides = array<i32>} : memref<304x32xf32, #tpu.memory_space<vmem>>, vector<24x32xf32>,
    %c24 = arith.constant 24 : index
    %c0_31 = arith.constant 0 : index
    %52 = vector.load %arg10[%c24, %c0_31] : memref<304x32xf32, #tpu.memory_space<vmem>>, vector<256x32xf32>
    tpu.vector_store %arg10[%c24, %c0_31], %47 {strides = array<i32>} : memref<304x32xf32, #tpu.memory_space<vmem>>, vector<256x32xf32>,
    %53 = tpu.iota {dimensions = array<i32: 0>} : vector<256x1xi32>
    %c16_i32 = arith.constant 16 : i32
    %c0_i32 = arith.constant 0 : i32
    %54 = arith.cmpi eq, %c16_i32, %c0_i32 : i32
    %c1_i32 = arith.constant 1 : i32
    %55 = arith.select %54, %c1_i32, %c16_i32 : i32
    %56 = vector.broadcast %55 : i32 to vector<256x1xi32>
    %57 = arith.remsi %53, %56 : vector<256x1xi32>
    %c0_i32_32 = arith.constant 0 : i32
    %58 = vector.broadcast %c0_i32_32 : i32 to vector<256x1xi32>
    %59 = arith.cmpi ne, %57, %58 : vector<256x1xi32>
    %c0_i32_33 = arith.constant 0 : i32
    %60 = vector.broadcast %c0_i32_33 : i32 to vector<256x1xi32>
    %61 = arith.cmpi slt, %57, %60 : vector<256x1xi32>
    %c0_i32_34 = arith.constant 0 : i32
    %62 = arith.cmpi slt, %55, %c0_i32_34 : i32
    %63 = vector.broadcast %62 : i1 to vector<256x1xi1>
    %64 = vector.broadcast %63 : vector<256x1xi1> to vector<256x1xi1>
    %65 = arith.xori %61, %64 : vector<256x1xi1>
    %66 = arith.andi %65, %59 : vector<256x1xi1>
    %67 = vector.broadcast %55 : i32 to vector<256x1xi32>
    %68 = arith.addi %57, %67 : vector<256x1xi32>
    %69 = arith.select %66, %68, %57 : vector<256x1xi1>, vector<256x1xi32>
    %c1_i32_35 = arith.constant 1 : i32
    %70 = vector.broadcast %c1_i32_35 : i32 to vector<256x1xi32>
    %71 = arith.cmpi sge, %69, %70 : vector<256x1xi32>
    %c15_i32 = arith.constant 15 : i32
    %72 = vector.broadcast %c15_i32 : i32 to vector<256x1xi32>
    %73 = arith.cmpi slt, %69, %72 : vector<256x1xi32>
    %cst_36 = arith.constant 0.000000e+00 : f32
    %74 = vector.broadcast %cst_36 : f32 to vector<256x32xf32>
    %c7 = arith.constant 7 : index
    %c0_37 = arith.constant 0 : index
    %75 = vector.load %arg10[%c7, %c0_37] : memref<304x32xf32, #tpu.memory_space<vmem>>, vector<256x32xf32>
    %cst_38 = arith.constant 0.000000e+00 : f32
    %76 = vector.shape_cast %71 : vector<256x1xi1> to vector<256x1xi1>
    %77 = vector.broadcast %76 : vector<256x1xi1> to vector<256x32xi1>
    %78 = vector.broadcast %cst_38 : f32 to vector<256x32xf32>
    %79 = arith.select %77, %75, %78 : vector<256x32xi1>, vector<256x32xf32>
    %c0_39 = arith.constant 0 : index
    %c0_40 = arith.constant 0 : index
    %80 = vector.load %arg7[%c0_39, %c0_40] : memref<288x32xf32, #tpu.memory_space<vmem>>, vector<32x32xf32>
    %cst_41 = arith.constant dense<0.000000e+00> : vector<256x32xf32>
    %81 = tpu.matmul %79, %80, %cst_41 {dimension_numbers = #tpu.dot_dimension_numbers<[1], [0], [0], [1], [0, 0, 1, 1], [], []>} : vector<256x32xf32>, vector<32x32xf32>, vector<256x32xf32> -> vector<256x32xf32>
    %82 = arith.addf %74, %81 : vector<256x32xf32>
    %c8 = arith.constant 8 : index
    %c0_42 = arith.constant 0 : index
    %83 = vector.load %arg10[%c8, %c0_42] : memref<304x32xf32, #tpu.memory_space<vmem>>, vector<256x32xf32>
    %c32 = arith.constant 32 : index
    %c0_43 = arith.constant 0 : index
    %84 = vector.load %arg7[%c32, %c0_43] : memref<288x32xf32, #tpu.memory_space<vmem>>, vector<32x32xf32>
    %cst_44 = arith.constant dense<0.000000e+00> : vector<256x32xf32>
    %85 = tpu.matmul %83, %84, %cst_44 {dimension_numbers = #tpu.dot_dimension_numbers<[1], [0], [0], [1], [0, 0, 1, 1], [], []>} : vector<256x32xf32>, vector<32x32xf32>, vector<256x32xf32> -> vector<256x32xf32>
    %86 = arith.addf %82, %85 : vector<256x32xf32>
    %c9 = arith.constant 9 : index
    %c0_45 = arith.constant 0 : index
    %87 = vector.load %arg10[%c9, %c0_45] : memref<304x32xf32, #tpu.memory_space<vmem>>, vector<256x32xf32>
    %cst_46 = arith.constant 0.000000e+00 : f32
    %88 = vector.shape_cast %73 : vector<256x1xi1> to vector<256x1xi1>
    %89 = vector.broadcast %88 : vector<256x1xi1> to vector<256x32xi1>
    %90 = vector.broadcast %cst_46 : f32 to vector<256x32xf32>
    %91 = arith.select %89, %87, %90 : vector<256x32xi1>, vector<256x32xf32>
    %c64 = arith.constant 64 : index
    %c0_47 = arith.constant 0 : index
    %92 = vector.load %arg7[%c64, %c0_47] : memref<288x32xf32, #tpu.memory_space<vmem>>, vector<32x32xf32>
    %cst_48 = arith.constant dense<0.000000e+00> : vector<256x32xf32>
    %93 = tpu.matmul %91, %92, %cst_48 {dimension_numbers = #tpu.dot_dimension_numbers<[1], [0], [0], [1], [0, 0, 1, 1], [], []>} : vector<256x32xf32>, vector<32x32xf32>, vector<256x32xf32> -> vector<256x32xf32>
    %94 = arith.addf %86, %93 : vector<256x32xf32>
    %c23 = arith.constant 23 : index
    %c0_49 = arith.constant 0 : index
    %95 = vector.load %arg10[%c23, %c0_49] : memref<304x32xf32, #tpu.memory_space<vmem>>, vector<256x32xf32>
    %cst_50 = arith.constant 0.000000e+00 : f32
    %96 = vector.shape_cast %71 : vector<256x1xi1> to vector<256x1xi1>
    %97 = vector.broadcast %96 : vector<256x1xi1> to vector<256x32xi1>
    %98 = vector.broadcast %cst_50 : f32 to vector<256x32xf32>
    %99 = arith.select %97, %95, %98 : vector<256x32xi1>, vector<256x32xf32>
    %c96 = arith.constant 96 : index
    %c0_51 = arith.constant 0 : index
    %100 = vector.load %arg7[%c96, %c0_51] : memref<288x32xf32, #tpu.memory_space<vmem>>, vector<32x32xf32>
    %cst_52 = arith.constant dense<0.000000e+00> : vector<256x32xf32>
    %101 = tpu.matmul %99, %100, %cst_52 {dimension_numbers = #tpu.dot_dimension_numbers<[1], [0], [0], [1], [0, 0, 1, 1], [], []>} : vector<256x32xf32>, vector<32x32xf32>, vector<256x32xf32> -> vector<256x32xf32>
    %102 = arith.addf %94, %101 : vector<256x32xf32>
    %c24_53 = arith.constant 24 : index
    %c0_54 = arith.constant 0 : index
    %103 = vector.load %arg10[%c24_53, %c0_54] : memref<304x32xf32, #tpu.memory_space<vmem>>, vector<256x32xf32>
    %c128 = arith.constant 128 : index
    %c0_55 = arith.constant 0 : index
    %104 = vector.load %arg7[%c128, %c0_55] : memref<288x32xf32, #tpu.memory_space<vmem>>, vector<32x32xf32>
    %cst_56 = arith.constant dense<0.000000e+00> : vector<256x32xf32>
    %105 = tpu.matmul %103, %104, %cst_56 {dimension_numbers = #tpu.dot_dimension_numbers<[1], [0], [0], [1], [0, 0, 1, 1], [], []>} : vector<256x32xf32>, vector<32x32xf32>, vector<256x32xf32> -> vector<256x32xf32>
    %106 = arith.addf %102, %105 : vector<256x32xf32>
    %c25 = arith.constant 25 : index
    %c0_57 = arith.constant 0 : index
    %107 = vector.load %arg10[%c25, %c0_57] : memref<304x32xf32, #tpu.memory_space<vmem>>, vector<256x32xf32>
    %cst_58 = arith.constant 0.000000e+00 : f32
    %108 = vector.shape_cast %73 : vector<256x1xi1> to vector<256x1xi1>
    %109 = vector.broadcast %108 : vector<256x1xi1> to vector<256x32xi1>
    %110 = vector.broadcast %cst_58 : f32 to vector<256x32xf32>
    %111 = arith.select %109, %107, %110 : vector<256x32xi1>, vector<256x32xf32>
    %c160 = arith.constant 160 : index
    %c0_59 = arith.constant 0 : index
    %112 = vector.load %arg7[%c160, %c0_59] : memref<288x32xf32, #tpu.memory_space<vmem>>, vector<32x32xf32>
    %cst_60 = arith.constant dense<0.000000e+00> : vector<256x32xf32>
    %113 = tpu.matmul %111, %112, %cst_60 {dimension_numbers = #tpu.dot_dimension_numbers<[1], [0], [0], [1], [0, 0, 1, 1], [], []>} : vector<256x32xf32>, vector<32x32xf32>, vector<256x32xf32> -> vector<256x32xf32>
    %114 = arith.addf %106, %113 : vector<256x32xf32>
    %c39 = arith.constant 39 : index
    %c0_61 = arith.constant 0 : index
    %115 = vector.load %arg10[%c39, %c0_61] : memref<304x32xf32, #tpu.memory_space<vmem>>, vector<256x32xf32>
    %cst_62 = arith.constant 0.000000e+00 : f32
    %116 = vector.shape_cast %71 : vector<256x1xi1> to vector<256x1xi1>
    %117 = vector.broadcast %116 : vector<256x1xi1> to vector<256x32xi1>
    %118 = vector.broadcast %cst_62 : f32 to vector<256x32xf32>
    %119 = arith.select %117, %115, %118 : vector<256x32xi1>, vector<256x32xf32>
    %c192 = arith.constant 192 : index
    %c0_63 = arith.constant 0 : index
    %120 = vector.load %arg7[%c192, %c0_63] : memref<288x32xf32, #tpu.memory_space<vmem>>, vector<32x32xf32>
    %cst_64 = arith.constant dense<0.000000e+00> : vector<256x32xf32>
    %121 = tpu.matmul %119, %120, %cst_64 {dimension_numbers = #tpu.dot_dimension_numbers<[1], [0], [0], [1], [0, 0, 1, 1], [], []>} : vector<256x32xf32>, vector<32x32xf32>, vector<256x32xf32> -> vector<256x32xf32>
    %122 = arith.addf %114, %121 : vector<256x32xf32>
    %c40 = arith.constant 40 : index
    %c0_65 = arith.constant 0 : index
    %123 = vector.load %arg10[%c40, %c0_65] : memref<304x32xf32, #tpu.memory_space<vmem>>, vector<256x32xf32>
    %c224 = arith.constant 224 : index
    %c0_66 = arith.constant 0 : index
    %124 = vector.load %arg7[%c224, %c0_66] : memref<288x32xf32, #tpu.memory_space<vmem>>, vector<32x32xf32>
    %cst_67 = arith.constant dense<0.000000e+00> : vector<256x32xf32>
    %125 = tpu.matmul %123, %124, %cst_67 {dimension_numbers = #tpu.dot_dimension_numbers<[1], [0], [0], [1], [0, 0, 1, 1], [], []>} : vector<256x32xf32>, vector<32x32xf32>, vector<256x32xf32> -> vector<256x32xf32>
    %126 = arith.addf %122, %125 : vector<256x32xf32>
    %c41 = arith.constant 41 : index
    %c0_68 = arith.constant 0 : index
    %127 = vector.load %arg10[%c41, %c0_68] : memref<304x32xf32, #tpu.memory_space<vmem>>, vector<256x32xf32>
    %cst_69 = arith.constant 0.000000e+00 : f32
    %128 = vector.shape_cast %73 : vector<256x1xi1> to vector<256x1xi1>
    %129 = vector.broadcast %128 : vector<256x1xi1> to vector<256x32xi1>
    %130 = vector.broadcast %cst_69 : f32 to vector<256x32xf32>
    %131 = arith.select %129, %127, %130 : vector<256x32xi1>, vector<256x32xf32>
    %c256 = arith.constant 256 : index
    %c0_70 = arith.constant 0 : index
    %132 = vector.load %arg7[%c256, %c0_70] : memref<288x32xf32, #tpu.memory_space<vmem>>, vector<32x32xf32>
    %cst_71 = arith.constant dense<0.000000e+00> : vector<256x32xf32>
    %133 = tpu.matmul %131, %132, %cst_71 {dimension_numbers = #tpu.dot_dimension_numbers<[1], [0], [0], [1], [0, 0, 1, 1], [], []>} : vector<256x32xf32>, vector<32x32xf32>, vector<256x32xf32> -> vector<256x32xf32>
    %134 = arith.addf %126, %133 : vector<256x32xf32>
    %c0_72 = arith.constant 0 : index
    %c0_73 = arith.constant 0 : index
    %135 = vector.load %arg8[%c0_72, %c0_73] : memref<1x32xf32, #tpu.memory_space<vmem>>, vector<1x32xf32>
    %136 = vector.broadcast %135 : vector<1x32xf32> to vector<256x32xf32>
    %137 = arith.addf %134, %136 : vector<256x32xf32>
    %c0_74 = arith.constant 0 : index
    %c0_75 = arith.constant 0 : index
    %c0_76 = arith.constant 0 : index
    %138 = vector.load %arg9[%c0_74, %c0_75, %c0_76] : memref<1x256x32xf32, #tpu.memory_space<vmem>>, vector<1x256x32xf32>
    %139 = vector.shape_cast %138 : vector<1x256x32xf32> to vector<256x32xf32>
    %140 = vector.shape_cast %137 : vector<256x32xf32> to vector<1x256x32xf32>
    tpu.vector_store %arg9[%c0_74, %c0_75, %c0_76], %140 {strides = array<i32>} : memref<1x256x32xf32, #tpu.memory_space<vmem>>, vector<1x256x32xf32>,
    return
  }
  func.func @transform_0(%arg0: i32) -> (i32, i32, i32) {
    %c0_i32 = arith.constant 0 : i32
    %c0_i32_0 = arith.constant 0 : i32
    %c0_i32_1 = arith.constant 0 : i32
    return %arg0, %c0_i32, %c0_i32_0 : i32, i32, i32
  }
  func.func @transform_1(%arg0: i32) -> (i32, i32) {
    %c0_i32 = arith.constant 0 : i32
    %c0_i32_0 = arith.constant 0 : i32
    %c0_i32_1 = arith.constant 0 : i32
    return %c0_i32, %c0_i32_0 : i32, i32
  }
  func.func @transform_2(%arg0: i32) -> (i32, i32) {
    %c0_i32 = arith.constant 0 : i32
    %c0_i32_0 = arith.constant 0 : i32
    %c0_i32_1 = arith.constant 0 : i32
    return %c0_i32, %c0_i32_0 : i32, i32
  }
  func.func @transform_3(%arg0: i32) -> (i32, i32) {
    %c0_i32 = arith.constant 0 : i32
    %c0_i32_0 = arith.constant 0 : i32
    %c0_i32_1 = arith.constant 0 : i32
    return %c0_i32, %c0_i32_0 : i32, i32
  }
  func.func @transform_4(%arg0: i32) -> (i32, i32, i32) {
    %c0_i32 = arith.constant 0 : i32
    %c0_i32_0 = arith.constant 0 : i32
    %c0_i32_1 = arith.constant 0 : i32
    return %arg0, %c0_i32, %c0_i32_0 : i32, i32, i32
  }
  func.func @transform_5(%arg0: i32) -> (i32, i32, i32) {
    %c0_i32 = arith.constant 0 : i32
    %c0_i32_0 = arith.constant 0 : i32
    %c0_i32_1 = arith.constant 0 : i32
    return %arg0, %c0_i32, %c0_i32_0 : i32, i32, i32
  }
  func.func @transform_6(%arg0: i32) -> (i32, i32) {
    %c0_i32 = arith.constant 0 : i32
    %c0_i32_0 = arith.constant 0 : i32
    %c0_i32_1 = arith.constant 0 : i32
    return %c0_i32, %c0_i32_0 : i32, i32
  }
  func.func @transform_7(%arg0: i32) -> (i32, i32) {
    %c0_i32 = arith.constant 0 : i32
    %c0_i32_0 = arith.constant 0 : i32
    %c0_i32_1 = arith.constant 0 : i32
    return %c0_i32, %c0_i32_0 : i32, i32
  }
  func.func @transform_8(%arg0: i32) -> (i32, i32, i32) {
    %c0_i32 = arith.constant 0 : i32
    %c0_i32_0 = arith.constant 0 : i32
    %c0_i32_1 = arith.constant 0 : i32
    return %arg0, %c0_i32, %c0_i32_0 : i32, i32, i32
  }
}

</mosaic_0001>

<llo_original>
// kernel: tpu_custom_call.1
$region0: #{tpu_custom_call.1}
  #allocation0 [shape = 'u32[]', space=smem, size = 0x4, offset = 0x4, fixed_abs, tag = 'smem constant byte address 0x4 - core index']
  #allocation1 [shape = 'u32[144,128]{1,0:T(1,128)}', space=vmem, size = 0x12000, scoped, tag = 'internal scratch']
  #allocation2 [shape = 'f32[304,32]{1,0:T(8,128)}', space=vmem, size = 0x26000, scoped, tag = 'scratch operand']
  %s0 = inlined_call_operand.vmem [shape: f32[2,256,32], index: 0, kind: input, shape index: {}]
  %s1 = inlined_call_operand.vmem [shape: f32[1,32], index: 1, kind: input, shape index: {}]
  %s2 = inlined_call_operand.vmem [shape: f32[1,32], index: 2, kind: input, shape index: {}]
  %s3 = inlined_call_operand.vmem [shape: f32[32,32], index: 3, kind: input, shape index: {}]
  %s4 = inlined_call_operand.vmem [shape: f32[2,1,32], index: 4, kind: input, shape index: {}]
  %s5 = inlined_call_operand.vmem [shape: f32[2,1,32], index: 5, kind: input, shape index: {}]
  %s6 = inlined_call_operand.vmem [shape: f32[288,32], index: 6, kind: input, shape index: {}]
  %s7 = inlined_call_operand.vmem [shape: f32[1,32], index: 7, kind: input, shape index: {}]
  %s8 = inlined_call_operand.vmem [shape: f32[2,256,32], index: 8, kind: output, shape index: {}]
  %s9 = sld [smem:[#allocation0]]
  $region65: #{tpu_custom_call.1} parent=0
    _
  %s11 = ssub.s32 1, %s9
  %s12 = scalar_select 0, %s11, %s9
  loop: start=0, step=1, limit=4
  $region2: #{tpu_custom_call.1} parent=0 // loop_pre_header
    _
  $region3: #{tpu_custom_call.1} parent=0 // loop_header
    %s14 = sphi 0, %s18
    %p15 = scmp.ge.s32.totalorder %s14, 4
    %s24 = sphi 0, %s26
    %s27 = sphi 0, %s24
    %s28 = sphi 0, %s27
    %s44 = sphi 0, %s28
    %s48 = sphi 0, %s48
    %s50 = sphi 0, %s48
    %s51 = sphi 0, %s50
    %s65 = sphi 0, %s51
    %s69 = sphi 0, %s69
    %s71 = sphi 0, %s69
    %s72 = sphi 0, %s71
    %s86 = sphi 0, %s72
    %s90 = sphi 0, %s90
    %s92 = sphi 0, %s90
    %s93 = sphi 0, %s92
    %s107 = sphi 0, %s93
    %s113 = sphi 0, %s115
    %s116 = sphi 0, %s113
    %s117 = sphi 0, %s116
    %s133 = sphi 0, %s117
    %s139 = sphi 0, %s141
    %s142 = sphi 0, %s139
    %s143 = sphi 0, %s142
    %s159 = sphi 0, %s143
    %s163 = sphi 0, %s163
    %s165 = sphi 0, %s163
    %s166 = sphi 0, %s165
    %s180 = sphi 0, %s166
    %s184 = sphi 0, %s184
    %s186 = sphi 0, %s184
    %s187 = sphi 0, %s186
    %s201 = sphi 0, %s187
    %s207 = sphi 0, %s209
    %s210 = sphi 0, %s207
    %s211 = sphi 0, %s210
    %s227 = sphi 0, %s211
  $region4: #{tpu_custom_call.1} parent=0 // loop_header_branch
    %17 = sbr.rel (%p15) target = $region8
  $region5: #{tpu_custom_call.1} parent=0 // loop_body
    %s19 = ssub.s32 %s14, 1
    %s20 = ssub.s32 %s14, 2
    %s21 = sadd.s32 %s14, 1
    %s22 = ssub.s32 %s14, %s21
    %p23 = scmp.eq.s32.totalorder %s22, 0
    %s25 = sadd.s32 %s24, 1
    %s26 = scalar_select %p23, %s24, %s25
    %p29 = pneg %p23
    %p30 = scmp.eq.s32.totalorder %s14, 1
    %p31 = por %p29, %p30
    %p32 = scmp.ne.s32.totalorder %s24, %s27
    %p33 = scmp.eq.s32.totalorder %s14, 0
    %p34 = por %p32, %p33
    %p35 = scmp.ne.s32.totalorder %s24, %s27
    %p36 = scmp.eq.s32.totalorder %s19, 1
    %p37 = por %p35, %p36
    %p38 = scmp.ne.s32.totalorder %s27, %s28
    %p39 = scmp.eq.s32.totalorder %s19, 0
    %p40 = por %p38, %p39
    %p41 = scmp.ne.s32.totalorder %s27, %s28
    %p42 = scmp.eq.s32.totalorder %s20, 1
    %p43 = por %p41, %p42
    %p45 = scmp.ne.s32.totalorder %s28, %s44
    %p46 = scmp.eq.s32.totalorder %s20, 0
    %p47 = por %p45, %p46
    %s49 = sadd.s32 %s48, 1
    %p52 = scmp.eq.s32.totalorder %s14, 1
    %p53 = scmp.ne.s32.totalorder %s48, %s50
    %p54 = scmp.eq.s32.totalorder %s14, 0
    %p55 = por %p53, %p54
    %p56 = scmp.ne.s32.totalorder %s48, %s50
    %p57 = scmp.eq.s32.totalorder %s19, 1
    %p58 = por %p56, %p57
    %p59 = scmp.ne.s32.totalorder %s50, %s51
    %p60 = scmp.eq.s32.totalorder %s19, 0
    %p61 = por %p59, %p60
    %p62 = scmp.ne.s32.totalorder %s50, %s51
    %p63 = scmp.eq.s32.totalorder %s20, 1
    %p64 = por %p62, %p63
    %p66 = scmp.ne.s32.totalorder %s51, %s65
    %p67 = scmp.eq.s32.totalorder %s20, 0
    %p68 = por %p66, %p67
    %s70 = sadd.s32 %s69, 1
    %p73 = scmp.eq.s32.totalorder %s14, 1
    %p74 = scmp.ne.s32.totalorder %s69, %s71
    %p75 = scmp.eq.s32.totalorder %s14, 0
    %p76 = por %p74, %p75
    %p77 = scmp.ne.s32.totalorder %s69, %s71
    %p78 = scmp.eq.s32.totalorder %s19, 1
    %p79 = por %p77, %p78
    %p80 = scmp.ne.s32.totalorder %s71, %s72
    %p81 = scmp.eq.s32.totalorder %s19, 0
    %p82 = por %p80, %p81
    %p83 = scmp.ne.s32.totalorder %s71, %s72
    %p84 = scmp.eq.s32.totalorder %s20, 1
    %p85 = por %p83, %p84
    %p87 = scmp.ne.s32.totalorder %s72, %s86
    %p88 = scmp.eq.s32.totalorder %s20, 0
    %p89 = por %p87, %p88
    %s91 = sadd.s32 %s90, 1
    %p94 = scmp.eq.s32.totalorder %s14, 1
    %p95 = scmp.ne.s32.totalorder %s90, %s92
    %p96 = scmp.eq.s32.totalorder %s14, 0
    %p97 = por %p95, %p96
    %p98 = scmp.ne.s32.totalorder %s90, %s92
    %p99 = scmp.eq.s32.totalorder %s19, 1
    %p100 = por %p98, %p99
    %p101 = scmp.ne.s32.totalorder %s92, %s93
    %p102 = scmp.eq.s32.totalorder %s19, 0
    %p103 = por %p101, %p102
    %p104 = scmp.ne.s32.totalorder %s92, %s93
    %p105 = scmp.eq.s32.totalorder %s20, 1
    %p106 = por %p104, %p105
    %p108 = scmp.ne.s32.totalorder %s93, %s107
    %p109 = scmp.eq.s32.totalorder %s20, 0
    %p110 = por %p108, %p109
    %s111 = ssub.s32 %s14, %s21
    %p112 = scmp.eq.s32.totalorder %s111, 0
    %s114 = sadd.s32 %s113, 1
    %s115 = scalar_select %p112, %s113, %s114
    %p118 = pneg %p112
    %p119 = scmp.eq.s32.totalorder %s14, 1
    %p120 = por %p118, %p119
    %p121 = scmp.ne.s32.totalorder %s113, %s116
    %p122 = scmp.eq.s32.totalorder %s14, 0
    %p123 = por %p121, %p122
    %p124 = scmp.ne.s32.totalorder %s113, %s116
    %p125 = scmp.eq.s32.totalorder %s19, 1
    %p126 = por %p124, %p125
    %p127 = scmp.ne.s32.totalorder %s116, %s117
    %p128 = scmp.eq.s32.totalorder %s19, 0
    %p129 = por %p127, %p128
    %p130 = scmp.ne.s32.totalorder %s116, %s117
    %p131 = scmp.eq.s32.totalorder %s20, 1
    %p132 = por %p130, %p131
    %p134 = scmp.ne.s32.totalorder %s117, %s133
    %p135 = scmp.eq.s32.totalorder %s20, 0
    %p136 = por %p134, %p135
    %s137 = ssub.s32 %s14, %s21
    %p138 = scmp.eq.s32.totalorder %s137, 0
    %s140 = sadd.s32 %s139, 1
    %s141 = scalar_select %p138, %s139, %s140
    %p144 = pneg %p138
    %p145 = scmp.eq.s32.totalorder %s14, 1
    %p146 = por %p144, %p145
    %p147 = scmp.ne.s32.totalorder %s139, %s142
    %p148 = scmp.eq.s32.totalorder %s14, 0
    %p149 = por %p147, %p148
    %p150 = scmp.ne.s32.totalorder %s139, %s142
    %p151 = scmp.eq.s32.totalorder %s19, 1
    %p152 = por %p150, %p151
    %p153 = scmp.ne.s32.totalorder %s142, %s143
    %p154 = scmp.eq.s32.totalorder %s19, 0
    %p155 = por %p153, %p154
    %p156 = scmp.ne.s32.totalorder %s142, %s143
    %p157 = scmp.eq.s32.totalorder %s20, 1
    %p158 = por %p156, %p157
    %p160 = scmp.ne.s32.totalorder %s143, %s159
    %p161 = scmp.eq.s32.totalorder %s20, 0
    %p162 = por %p160, %p161
    %s164 = sadd.s32 %s163, 1
    %p167 = scmp.eq.s32.totalorder %s14, 1
    %p168 = scmp.ne.s32.totalorder %s163, %s165
    %p169 = scmp.eq.s32.totalorder %s14, 0
    %p170 = por %p168, %p169
    %p171 = scmp.ne.s32.totalorder %s163, %s165
    %p172 = scmp.eq.s32.totalorder %s19, 1
    %p173 = por %p171, %p172
    %p174 = scmp.ne.s32.totalorder %s165, %s166
    %p175 = scmp.eq.s32.totalorder %s19, 0
    %p176 = por %p174, %p175
    %p177 = scmp.ne.s32.totalorder %s165, %s166
    %p178 = scmp.eq.s32.totalorder %s20, 1
    %p179 = por %p177, %p178
    %p181 = scmp.ne.s32.totalorder %s166, %s180
    %p182 = scmp.eq.s32.totalorder %s20, 0
    %p183 = por %p181, %p182
    %s185 = sadd.s32 %s184, 1
    %p188 = scmp.eq.s32.totalorder %s14, 1
    %p189 = scmp.ne.s32.totalorder %s184, %s186
    %p190 = scmp.eq.s32.totalorder %s14, 0
    %p191 = por %p189, %p190
    %p192 = scmp.ne.s32.totalorder %s184, %s186
    %p193 = scmp.eq.s32.totalorder %s19, 1
    %p194 = por %p192, %p193
    %p195 = scmp.ne.s32.totalorder %s186, %s187
    %p196 = scmp.eq.s32.totalorder %s19, 0
    %p197 = por %p195, %p196
    %p198 = scmp.ne.s32.totalorder %s186, %s187
    %p199 = scmp.eq.s32.totalorder %s20, 1
    %p200 = por %p198, %p199
    %p202 = scmp.ne.s32.totalorder %s187, %s201
    %p203 = scmp.eq.s32.totalorder %s20, 0
    %p204 = por %p202, %p203
    %s205 = ssub.s32 %s14, %s21
    %p206 = scmp.eq.s32.totalorder %s205, 0
    %s208 = sadd.s32 %s207, 1
    %s209 = scalar_select %p206, %s207, %s208
    %p212 = pneg %p206
    %p213 = scmp.eq.s32.totalorder %s14, 1
    %p214 = por %p212, %p213
    %p215 = scmp.ne.s32.totalorder %s207, %s210
    %p216 = scmp.eq.s32.totalorder %s14, 0
    %p217 = por %p215, %p216
    %p218 = scmp.ne.s32.totalorder %s207, %s210
    %p219 = scmp.eq.s32.totalorder %s19, 1
    %p220 = por %p218, %p219
    %p221 = scmp.ne.s32.totalorder %s210, %s211
    %p222 = scmp.eq.s32.totalorder %s19, 0
    %p223 = por %p221, %p222
    %p224 = scmp.ne.s32.totalorder %s210, %s211
    %p225 = scmp.eq.s32.totalorder %s20, 1
    %p226 = por %p224, %p225
    %p228 = scmp.ne.s32.totalorder %s211, %s227
    %p229 = scmp.eq.s32.totalorder %s20, 0
    %p230 = por %p228, %p229
    %p231 = scmp.le.s32.totalorder 1, %s14
    %p232 = scmp.lt.s32.totalorder %s14, 3
    %p233 = pnand %p231, %p232
    %p234 = pneg %p233
    // Predicated region
    $region9: #{tpu_custom_call.1} parent=5 // pred_check
      _
    $region10: #{tpu_custom_call.1} parent=5 // pred_check_branch
      %236 = sbr.rel (%p233) target = $region12
    $region11: #{tpu_custom_call.1} parent=5 // pred_region
      %s237 = ssub.s32 %s14, 1
      // Predicated region
      $region13: #{tpu_custom_call.1} parent=11 // pred_check
        %p238 = pneg %p61
      $region14: #{tpu_custom_call.1} parent=11 // pred_check_branch
        %240 = sbr.rel (%p238) target = $region16
      $region15: #{tpu_custom_call.1} parent=11 // pred_region
        _
      $region16: #{tpu_custom_call.1} parent=11 // pred_fallthru
        _
      // Predicated region
      $region17: #{tpu_custom_call.1} parent=11 // pred_check
        %p241 = pneg %p82
      $region18: #{tpu_custom_call.1} parent=11 // pred_check_branch
        %243 = sbr.rel (%p241) target = $region20
      $region19: #{tpu_custom_call.1} parent=11 // pred_region
        _
      $region20: #{tpu_custom_call.1} parent=11 // pred_fallthru
        _
      // Predicated region
      $region21: #{tpu_custom_call.1} parent=11 // pred_check
        %p244 = pneg %p103
      $region22: #{tpu_custom_call.1} parent=11 // pred_check_branch
        %246 = sbr.rel (%p244) target = $region24
      $region23: #{tpu_custom_call.1} parent=11 // pred_region
        _
      $region24: #{tpu_custom_call.1} parent=11 // pred_fallthru
        _
      // Predicated region
      $region25: #{tpu_custom_call.1} parent=11 // pred_check
        %p247 = pneg %p176
      $region26: #{tpu_custom_call.1} parent=11 // pred_check_branch
        %249 = sbr.rel (%p247) target = $region28
      $region27: #{tpu_custom_call.1} parent=11 // pred_region
        _
      $region28: #{tpu_custom_call.1} parent=11 // pred_fallthru
        _
      // Predicated region
      $region29: #{tpu_custom_call.1} parent=11 // pred_check
        %p250 = pneg %p197
      $region30: #{tpu_custom_call.1} parent=11 // pred_check_branch
        %252 = sbr.rel (%p250) target = $region32
      $region31: #{tpu_custom_call.1} parent=11 // pred_region
        _
      $region32: #{tpu_custom_call.1} parent=11 // pred_fallthru
        _
    $region12: #{tpu_custom_call.1} parent=5 // pred_fallthru
      _
    %p253 = scmp.lt.s32.totalorder %s14, 2
    // Predicated region
    $region33: #{tpu_custom_call.1} parent=5 // pred_check
      %p254 = pneg %p253
    $region34: #{tpu_custom_call.1} parent=5 // pred_check_branch
      %256 = sbr.rel (%p254) target = $region36
    $region35: #{tpu_custom_call.1} parent=5 // pred_region
      // Predicated region
      $region37: #{tpu_custom_call.1} parent=35 // pred_check
        %p257 = pneg %p34
      $region38: #{tpu_custom_call.1} parent=35 // pred_check_branch
        %259 = sbr.rel (%p257) target = $region40
      $region39: #{tpu_custom_call.1} parent=35 // pred_region
        %p260 = scmp.lt.s32.totalorder %s14, 1
        %s261 = scalar_select %p260, %s14, 1
        %s262 = smul.addr %s261, 32
        %s263 = smul.addr %s262, 8
        %s264 = scalar_lea.vmem %s0, %s263
      $region40: #{tpu_custom_call.1} parent=35 // pred_fallthru
        _
      // Predicated region
      $region41: #{tpu_custom_call.1} parent=35 // pred_check
        %p265 = pneg %p123
      $region42: #{tpu_custom_call.1} parent=35 // pred_check_branch
        %267 = sbr.rel (%p265) target = $region44
      $region43: #{tpu_custom_call.1} parent=35 // pred_region
        %p268 = scmp.lt.s32.totalorder %s14, 1
        %s269 = scalar_select %p268, %s14, 1
        %s270 = scalar_lea.vmem %s4, %s269
      $region44: #{tpu_custom_call.1} parent=35 // pred_fallthru
        _
      // Predicated region
      $region45: #{tpu_custom_call.1} parent=35 // pred_check
        %p271 = pneg %p149
      $region46: #{tpu_custom_call.1} parent=35 // pred_check_branch
        %273 = sbr.rel (%p271) target = $region48
      $region47: #{tpu_custom_call.1} parent=35 // pred_region
        %p274 = scmp.lt.s32.totalorder %s14, 1
        %s275 = scalar_select %p274, %s14, 1
        %s276 = scalar_lea.vmem %s5, %s275
      $region48: #{tpu_custom_call.1} parent=35 // pred_fallthru
        _
    $region36: #{tpu_custom_call.1} parent=5 // pred_fallthru
      _
    %p277 = scmp.le.s32.totalorder 1, %s14
    %p278 = scmp.lt.s32.totalorder %s14, 3
    %p279 = pnand %p277, %p278
    %p280 = pneg %p279
    // Predicated region
    $region49: #{tpu_custom_call.1} parent=5 // pred_check
      _
    $region50: #{tpu_custom_call.1} parent=5 // pred_check_branch
      %282 = sbr.rel (%p279) target = $region52
    $region51: #{tpu_custom_call.1} parent=5 // pred_region
      %s283 = ssub.s32 %s14, 1
      %p284 = scmp.lt.s32.totalorder %s19, 1
      %s285 = scalar_select %p284, %s19, 1
      %s286 = smul.addr %s285, 32
      %s287 = smul.addr %s286, 8
      %s288 = scalar_lea.vmem %s0, %s287
      %p289 = pneg %p40
      %p290 = pneg %p37
      %p291 = pneg %p61
      %p292 = pneg %p58
      %p293 = pneg %p82
      %p294 = pneg %p79
      %p295 = pneg %p103
      %p296 = pneg %p100
      %p297 = scmp.lt.s32.totalorder %s19, 1
      %s298 = scalar_select %p297, %s19, 1
      %s299 = scalar_lea.vmem %s4, %s298
      %p300 = pneg %p129
      %p301 = pneg %p126
      %p302 = scmp.lt.s32.totalorder %s19, 1
      %s303 = scalar_select %p302, %s19, 1
      %s304 = scalar_lea.vmem %s5, %s303
      %p305 = pneg %p155
      %p306 = pneg %p152
      %p307 = pneg %p176
      %p308 = pneg %p173
      %p309 = pneg %p197
      %p310 = pneg %p194
      %p311 = pneg %p223
      %p312 = pneg %p220
      %p313 = scmp.lt.s32.totalorder %s19, 1
      %s314 = scalar_select %p313, %s19, 1
      %s315 = smul.addr %s314, 32
      %s316 = smul.addr %s315, 8
      %s317 = scalar_lea.vmem %s8, %s316
      %p318 = scmp.lt.s32.totalorder %s19, 1
      %s319 = scalar_select %p318, %s19, 1
      %s320 = smul.addr %s319, 32
      %s321 = smul.addr %s320, 8
      %s322 = scalar_lea.vmem %s0, %s321
      %p323 = scmp.lt.s32.totalorder %s19, 1
      %s324 = scalar_select %p323, %s19, 1
      %s325 = scalar_lea.vmem %s4, %s324
      %p326 = scmp.lt.s32.totalorder %s19, 1
      %s327 = scalar_select %p326, %s19, 1
      %s328 = scalar_lea.vmem %s5, %s327
      %p329 = scmp.lt.s32.totalorder %s19, 1
      %s330 = scalar_select %p329, %s19, 1
      %s331 = smul.addr %s330, 32
      %s332 = smul.addr %s331, 8
      %s333 = scalar_lea.vmem %s8, %s332
      %v334 = vld [vmem:[%s322] sm:$0xff]
      %v335 = vld [vmem:[%s322 + $0x8] sm:$0xff]
      %v336 = vld [vmem:[%s322 + $0x10] sm:$0xff]
      %v337 = vld [vmem:[%s322 + $0x18] sm:$0xff]
      %v338 = vld [vmem:[%s322 + $0x20] sm:$0xff]
      %v339 = vld [vmem:[%s322 + $0x28] sm:$0xff]
      %v340 = vld [vmem:[%s322 + $0x30] sm:$0xff]
      %v341 = vld [vmem:[%s322 + $0x38] sm:$0xff]
      %v342 = vld [vmem:[%s322 + $0x40] sm:$0xff]
      %v343 = vld [vmem:[%s322 + $0x48] sm:$0xff]
      %v344 = vld [vmem:[%s322 + $0x50] sm:$0xff]
      %v345 = vld [vmem:[%s322 + $0x58] sm:$0xff]
      %v346 = vld [vmem:[%s322 + $0x60] sm:$0xff]
      %v347 = vld [vmem:[%s322 + $0x68] sm:$0xff]
      %v348 = vld [vmem:[%s322 + $0x70] sm:$0xff]
      %v349 = vld [vmem:[%s322 + $0x78] sm:$0xff]
      %v350 = vld [vmem:[%s322 + $0x80] sm:$0xff]
      %v351 = vld [vmem:[%s322 + $0x88] sm:$0xff]
      %v352 = vld [vmem:[%s322 + $0x90] sm:$0xff]
      %v353 = vld [vmem:[%s322 + $0x98] sm:$0xff]
      %v354 = vld [vmem:[%s322 + $0xa0] sm:$0xff]
      %v355 = vld [vmem:[%s322 + $0xa8] sm:$0xff]
      %v356 = vld [vmem:[%s322 + $0xb0] sm:$0xff]
      %v357 = vld [vmem:[%s322 + $0xb8] sm:$0xff]
      %v358 = vld [vmem:[%s322 + $0xc0] sm:$0xff]
      %v359 = vld [vmem:[%s322 + $0xc8] sm:$0xff]
      %v360 = vld [vmem:[%s322 + $0xd0] sm:$0xff]
      %v361 = vld [vmem:[%s322 + $0xd8] sm:$0xff]
      %v362 = vld [vmem:[%s322 + $0xe0] sm:$0xff]
      %v363 = vld [vmem:[%s322 + $0xe8] sm:$0xff]
      %v364 = vld [vmem:[%s322 + $0xf0] sm:$0xff]
      %v365 = vld [vmem:[%s322 + $0xf8] sm:$0xff]
      %v366 = vld [vmem:[%s3] sm:$0xff]
      %v367 = vld [vmem:[%s3 + $0x8] sm:$0xff]
      %v368 = vld [vmem:[%s3 + $0x10] sm:$0xff]
      %v369 = vld [vmem:[%s3 + $0x18] sm:$0xff]
      %vm370 = vcmask 261120
      %v372 = vsel %vm370, %v334, 0
      %v375 = vsel %vm370, %v335, 0
      %v378 = vsel %vm370, %v336, 0
      %v381 = vsel %vm370, %v337, 0
      %v384 = vsel %vm370, %v338, 0
      %v387 = vsel %vm370, %v339, 0
      %v390 = vsel %vm370, %v340, 0
      %v393 = vsel %vm370, %v341, 0
      %v396 = vsel %vm370, %v342, 0
      %v399 = vsel %vm370, %v343, 0
      %v402 = vsel %vm370, %v344, 0
      %v405 = vsel %vm370, %v345, 0
      %v408 = vsel %vm370, %v346, 0
      %v411 = vsel %vm370, %v347, 0
      %v414 = vsel %vm370, %v348, 0
      %v417 = vsel %vm370, %v349, 0
      %v420 = vsel %vm370, %v350, 0
      %v423 = vsel %vm370, %v351, 0
      %v426 = vsel %vm370, %v352, 0
      %v429 = vsel %vm370, %v353, 0
      %v432 = vsel %vm370, %v354, 0
      %v435 = vsel %vm370, %v355, 0
      %v438 = vsel %vm370, %v356, 0
      %v441 = vsel %vm370, %v357, 0
      %v444 = vsel %vm370, %v358, 0
      %v447 = vsel %vm370, %v359, 0
      %v450 = vsel %vm370, %v360, 0
      %v453 = vsel %vm370, %v361, 0
      %v456 = vsel %vm370, %v362, 0
      %v459 = vsel %vm370, %v363, 0
      %v462 = vsel %vm370, %v364, 0
      %v465 = vsel %vm370, %v365, 0
      %467 = vmatprep.subr.mxu0 0.0
      %468 = vmatpush1.msra.mxu0 0.0
      %469 = vmatprep.subr.mxu0 0.0
      %470 = vmatpush1.msra.mxu0 0.0
      %471 = vmatprep.subr.mxu0 0.0
      %472 = vmatpush1.msra.mxu0 0.0
      %473 = vmatprep.subr.mxu0 0.0
      %474 = vmatpush1.msra.mxu0 0.0
      %475 = vmatprep.subr.mxu0 0.0
      %476 = vmatpush1.msra.mxu0 0.0
      %477 = vmatprep.subr.mxu0 0.0
      %478 = vmatpush1.msra.mxu0 0.0
      %479 = vmatprep.subr.mxu0 0.0
      %480 = vmatpush1.msra.mxu0 0.0
      %481 = vmatprep.subr.mxu0 0.0
      %482 = vmatpush1.msra.mxu0 0.0
      %483 = vmatprep.subr.mxu0 0.0
      %484 = vmatpush1.msra.mxu0 0.0
      %485 = vmatprep.subr.mxu0 0.0
      %486 = vmatpush1.msra.mxu0 0.0
      %487 = vmatprep.subr.mxu0 0.0
      %488 = vmatpush1.msra.mxu0 0.0
      %489 = vmatprep.subr.mxu0 0.0
      %490 = vmatpush1.msra.mxu0 0.0
      %491 = vmatprep.subr.mxu0 0.0
      %492 = vmatpush1.msra.mxu0 %v369
      %493 = vmatprep.subr.mxu0 0.0
      %494 = vmatpush1.msra.mxu0 %v368
      %495 = vmatprep.subr.mxu0 0.0
      %496 = vmatpush1.msra.mxu0 %v367
      %497 = vmatprep.subr.mxu0 0.0
      %498 = vmatpush1.msra.mxu0 %v366
      %499 = vmatprep.subr.mxu0 0.0
      %500 = vmatpush2.msra.mxu0 0.0
      %501 = vmatprep.subr.mxu0 0.0
      %502 = vmatpush2.msra.mxu0 0.0
      %503 = vmatprep.subr.mxu0 0.0
      %504 = vmatpush2.msra.mxu0 0.0
      %505 = vmatprep.subr.mxu0 0.0
      %506 = vmatpush2.msra.mxu0 0.0
      %507 = vmatprep.subr.mxu0 0.0
      %508 = vmatpush2.msra.mxu0 0.0
      %509 = vmatprep.subr.mxu0 0.0
      %510 = vmatpush2.msra.mxu0 0.0
      %511 = vmatprep.subr.mxu0 0.0
      %512 = vmatpush2.msra.mxu0 0.0
      %513 = vmatprep.subr.mxu0 0.0
      %514 = vmatpush2.msra.mxu0 0.0
      %515 = vmatprep.subr.mxu0 0.0
      %516 = vmatpush2.msra.mxu0 0.0
      %517 = vmatprep.subr.mxu0 0.0
      %518 = vmatpush2.msra.mxu0 0.0
      %519 = vmatprep.subr.mxu0 0.0
      %520 = vmatpush2.msra.mxu0 0.0
      %521 = vmatprep.subr.mxu0 0.0
      %522 = vmatpush2.msra.mxu0 0.0
      %523 = vmatprep.subr.mxu0 0.0
      %524 = vmatpush2.msra.mxu0 0.0
      %525 = vmatprep.subr.mxu0 0.0
      %526 = vmatpush2.msra.mxu0 0.0
      %527 = vmatprep.subr.mxu0 0.0
      %528 = vmatpush2.msra.mxu0 0.0
      %529 = vmatprep.subr.mxu0 0.0
      %530 = vmatpush2.msra.mxu0 0.0
      %531 = vmatprep.mubr.f32.mxu0 0.0
      %532 = vmatmul.mubr.f32.gmra.mxu0 %v372
      %v533 = vpop.f32.mrf.mxu0
      %v534 = vadd.f32 0.0, %v533
      %v535 = vpop.f32.mrf.mxu0
      %536 = vmatprep.mubr.f32.mxu0 0.0
      %537 = vmatmul.mubr.f32.gmra.mxu0 %v375
      %v538 = vpop.f32.mrf.mxu0
      %v539 = vadd.f32 0.0, %v538
      %v540 = vpop.f32.mrf.mxu0
      %541 = vmatprep.mubr.f32.mxu0 0.0
      %542 = vmatmul.mubr.f32.gmra.mxu0 %v378
      %v543 = vpop.f32.mrf.mxu0
      %v544 = vadd.f32 0.0, %v543
      %v545 = vpop.f32.mrf.mxu0
      %546 = vmatprep.mubr.f32.mxu0 0.0
      %547 = vmatmul.mubr.f32.gmra.mxu0 %v381
      %v548 = vpop.f32.mrf.mxu0
      %v549 = vadd.f32 0.0, %v548
      %v550 = vpop.f32.mrf.mxu0
      %551 = vmatprep.mubr.f32.mxu0 0.0
      %552 = vmatmul.mubr.f32.gmra.mxu0 %v384
      %v553 = vpop.f32.mrf.mxu0
      %v554 = vadd.f32 0.0, %v553
      %v555 = vpop.f32.mrf.mxu0
      %556 = vmatprep.mubr.f32.mxu0 0.0
      %557 = vmatmul.mubr.f32.gmra.mxu0 %v387
      %v558 = vpop.f32.mrf.mxu0
      %v559 = vadd.f32 0.0, %v558
      %v560 = vpop.f32.mrf.mxu0
      %561 = vmatprep.mubr.f32.mxu0 0.0
      %562 = vmatmul.mubr.f32.gmra.mxu0 %v390
      %v563 = vpop.f32.mrf.mxu0
      %v564 = vadd.f32 0.0, %v563
      %v565 = vpop.f32.mrf.mxu0
      %566 = vmatprep.mubr.f32.mxu0 0.0
      %567 = vmatmul.mubr.f32.gmra.mxu0 %v393
      %v568 = vpop.f32.mrf.mxu0
      %v569 = vadd.f32 0.0, %v568
      %v570 = vpop.f32.mrf.mxu0
      %571 = vmatprep.mubr.f32.mxu0 0.0
      %572 = vmatmul.mubr.f32.gmra.mxu0 %v396
      %v573 = vpop.f32.mrf.mxu0
      %v574 = vadd.f32 0.0, %v573
      %v575 = vpop.f32.mrf.mxu0
      %576 = vmatprep.mubr.f32.mxu0 0.0
      %577 = vmatmul.mubr.f32.gmra.mxu0 %v399
      %v578 = vpop.f32.mrf.mxu0
      %v579 = vadd.f32 0.0, %v578
      %v580 = vpop.f32.mrf.mxu0
      %581 = vmatprep.mubr.f32.mxu0 0.0
      %582 = vmatmul.mubr.f32.gmra.mxu0 %v402
      %v583 = vpop.f32.mrf.mxu0
      %v584 = vadd.f32 0.0, %v583
      %v585 = vpop.f32.mrf.mxu0
      %586 = vmatprep.mubr.f32.mxu0 0.0
      %587 = vmatmul.mubr.f32.gmra.mxu0 %v405
      %v588 = vpop.f32.mrf.mxu0
      %v589 = vadd.f32 0.0, %v588
      %v590 = vpop.f32.mrf.mxu0
      %591 = vmatprep.mubr.f32.mxu0 0.0
      %592 = vmatmul.mubr.f32.gmra.mxu0 %v408
      %v593 = vpop.f32.mrf.mxu0
      %v594 = vadd.f32 0.0, %v593
      %v595 = vpop.f32.mrf.mxu0
      %596 = vmatprep.mubr.f32.mxu0 0.0
      %597 = vmatmul.mubr.f32.gmra.mxu0 %v411
      %v598 = vpop.f32.mrf.mxu0
      %v599 = vadd.f32 0.0, %v598
      %v600 = vpop.f32.mrf.mxu0
      %601 = vmatprep.mubr.f32.mxu0 0.0
      %602 = vmatmul.mubr.f32.gmra.mxu0 %v414
      %v603 = vpop.f32.mrf.mxu0
      %v604 = vadd.f32 0.0, %v603
      %v605 = vpop.f32.mrf.mxu0
      %606 = vmatprep.mubr.f32.mxu0 0.0
      %607 = vmatmul.mubr.f32.gmra.mxu0 %v417
      %v608 = vpop.f32.mrf.mxu0
      %v609 = vadd.f32 0.0, %v608
      %v610 = vpop.f32.mrf.mxu0
      %611 = vmatprep.mubr.f32.mxu0 0.0
      %612 = vmatmul.mubr.f32.gmra.mxu0 %v420
      %v613 = vpop.f32.mrf.mxu0
      %v614 = vadd.f32 0.0, %v613
      %v615 = vpop.f32.mrf.mxu0
      %616 = vmatprep.mubr.f32.mxu0 0.0
      %617 = vmatmul.mubr.f32.gmra.mxu0 %v423
      %v618 = vpop.f32.mrf.mxu0
      %v619 = vadd.f32 0.0, %v618
      %v620 = vpop.f32.mrf.mxu0
      %621 = vmatprep.mubr.f32.mxu0 0.0
      %622 = vmatmul.mubr.f32.gmra.mxu0 %v426
      %v623 = vpop.f32.mrf.mxu0
      %v624 = vadd.f32 0.0, %v623
      %v625 = vpop.f32.mrf.mxu0
      %626 = vmatprep.mubr.f32.mxu0 0.0
      %627 = vmatmul.mubr.f32.gmra.mxu0 %v429
      %v628 = vpop.f32.mrf.mxu0
      %v629 = vadd.f32 0.0, %v628
      %v630 = vpop.f32.mrf.mxu0
      %631 = vmatprep.mubr.f32.mxu0 0.0
      %632 = vmatmul.mubr.f32.gmra.mxu0 %v432
      %v633 = vpop.f32.mrf.mxu0
      %v634 = vadd.f32 0.0, %v633
      %v635 = vpop.f32.mrf.mxu0
      %636 = vmatprep.mubr.f32.mxu0 0.0
      %637 = vmatmul.mubr.f32.gmra.mxu0 %v435
      %v638 = vpop.f32.mrf.mxu0
      %v639 = vadd.f32 0.0, %v638
      %v640 = vpop.f32.mrf.mxu0
      %641 = vmatprep.mubr.f32.mxu0 0.0
      %642 = vmatmul.mubr.f32.gmra.mxu0 %v438
      %v643 = vpop.f32.mrf.mxu0
      %v644 = vadd.f32 0.0, %v643
      %v645 = vpop.f32.mrf.mxu0
      %646 = vmatprep.mubr.f32.mxu0 0.0
      %647 = vmatmul.mubr.f32.gmra.mxu0 %v441
      %v648 = vpop.f32.mrf.mxu0
      %v649 = vadd.f32 0.0, %v648
      %v650 = vpop.f32.mrf.mxu0
      %651 = vmatprep.mubr.f32.mxu0 0.0
      %652 = vmatmul.mubr.f32.gmra.mxu0 %v444
      %v653 = vpop.f32.mrf.mxu0
      %v654 = vadd.f32 0.0, %v653
      %v655 = vpop.f32.mrf.mxu0
      %656 = vmatprep.mubr.f32.mxu0 0.0
      %657 = vmatmul.mubr.f32.gmra.mxu0 %v447
      %v658 = vpop.f32.mrf.mxu0
      %v659 = vadd.f32 0.0, %v658
      %v660 = vpop.f32.mrf.mxu0
      %661 = vmatprep.mubr.f32.mxu0 0.0
      %662 = vmatmul.mubr.f32.gmra.mxu0 %v450
      %v663 = vpop.f32.mrf.mxu0
      %v664 = vadd.f32 0.0, %v663
      %v665 = vpop.f32.mrf.mxu0
      %666 = vmatprep.mubr.f32.mxu0 0.0
      %667 = vmatmul.mubr.f32.gmra.mxu0 %v453
      %v668 = vpop.f32.mrf.mxu0
      %v669 = vadd.f32 0.0, %v668
      %v670 = vpop.f32.mrf.mxu0
      %671 = vmatprep.mubr.f32.mxu0 0.0
      %672 = vmatmul.mubr.f32.gmra.mxu0 %v456
      %v673 = vpop.f32.mrf.mxu0
      %v674 = vadd.f32 0.0, %v673
      %v675 = vpop.f32.mrf.mxu0
      %676 = vmatprep.mubr.f32.mxu0 0.0
      %677 = vmatmul.mubr.f32.gmra.mxu0 %v459
      %v678 = vpop.f32.mrf.mxu0
      %v679 = vadd.f32 0.0, %v678
      %v680 = vpop.f32.mrf.mxu0
      %681 = vmatprep.mubr.f32.mxu0 0.0
      %682 = vmatmul.mubr.f32.gmra.mxu0 %v462
      %v683 = vpop.f32.mrf.mxu0
      %v684 = vadd.f32 0.0, %v683
      %v685 = vpop.f32.mrf.mxu0
      %686 = vmatprep.mubr.f32.mxu0 0.0
      %687 = vmatmul.mubr.f32.gmra.mxu0 %v465
      %v688 = vpop.f32.mrf.mxu0
      %v689 = vadd.f32 0.0, %v688
      %v690 = vpop.f32.mrf.mxu0
      %691 = vdwg.mxu0
      %v692 = vsel %vm370, %v534, 0.0
      %v693 = vsel %vm370, %v539, 0.0
      %v694 = vadd.f32 %v692, %v693
      %v695 = vsel %vm370, %v544, 0.0
      %v696 = vadd.f32 %v694, %v695
      %v697 = vsel %vm370, %v549, 0.0
      %v698 = vadd.f32 %v696, %v697
      %v699 = vsel %vm370, %v554, 0.0
      %v700 = vadd.f32 %v698, %v699
      %v701 = vsel %vm370, %v559, 0.0
      %v702 = vadd.f32 %v700, %v701
      %v703 = vsel %vm370, %v564, 0.0
      %v704 = vadd.f32 %v702, %v703
      %v705 = vsel %vm370, %v569, 0.0
      %v706 = vadd.f32 %v704, %v705
      %v707 = vsel %vm370, %v574, 0.0
      %v708 = vadd.f32 %v706, %v707
      %v709 = vsel %vm370, %v579, 0.0
      %v710 = vadd.f32 %v708, %v709
      %v711 = vsel %vm370, %v584, 0.0
      %v712 = vadd.f32 %v710, %v711
      %v713 = vsel %vm370, %v589, 0.0
      %v714 = vadd.f32 %v712, %v713
      %v715 = vsel %vm370, %v594, 0.0
      %v716 = vadd.f32 %v714, %v715
      %v717 = vsel %vm370, %v599, 0.0
      %v718 = vadd.f32 %v716, %v717
      %v719 = vsel %vm370, %v604, 0.0
      %v720 = vadd.f32 %v718, %v719
      %v721 = vsel %vm370, %v609, 0.0
      %v722 = vadd.f32 %v720, %v721
      %v723 = vsel %vm370, %v614, 0.0
      %v724 = vadd.f32 %v722, %v723
      %v725 = vsel %vm370, %v619, 0.0
      %v726 = vadd.f32 %v724, %v725
      %v727 = vsel %vm370, %v624, 0.0
      %v728 = vadd.f32 %v726, %v727
      %v729 = vsel %vm370, %v629, 0.0
      %v730 = vadd.f32 %v728, %v729
      %v731 = vsel %vm370, %v634, 0.0
      %v732 = vadd.f32 %v730, %v731
      %v733 = vsel %vm370, %v639, 0.0
      %v734 = vadd.f32 %v732, %v733
      %v735 = vsel %vm370, %v644, 0.0
      %v736 = vadd.f32 %v734, %v735
      %v737 = vsel %vm370, %v649, 0.0
      %v738 = vadd.f32 %v736, %v737
      %v739 = vsel %vm370, %v654, 0.0
      %v740 = vadd.f32 %v738, %v739
      %v741 = vsel %vm370, %v659, 0.0
      %v742 = vadd.f32 %v740, %v741
      %v743 = vsel %vm370, %v664, 0.0
      %v744 = vadd.f32 %v742, %v743
      %v745 = vsel %vm370, %v669, 0.0
      %v746 = vadd.f32 %v744, %v745
      %v747 = vsel %vm370, %v674, 0.0
      %v748 = vadd.f32 %v746, %v747
      %v749 = vsel %vm370, %v679, 0.0
      %v750 = vadd.f32 %v748, %v749
      %v751 = vsel %vm370, %v684, 0.0
      %v752 = vadd.f32 %v750, %v751
      %v753 = vsel %vm370, %v689, 0.0
      %v754 = vadd.f32 %v752, %v753
      %v755 = vrot.slane %v754, 4
      %v756 = vadd.f32 %v754, %v755
      %v757 = vrot.slane %v756, 2
      %v758 = vadd.f32 %v756, %v757
      %v759 = vrot.slane %v758, 1
      %v760 = vadd.f32 %v758, %v759
      %v761 = vmul.f32 %v334, %v334
      %v762 = vmul.f32 %v335, %v335
      %v763 = vmul.f32 %v336, %v336
      %v764 = vmul.f32 %v337, %v337
      %v765 = vmul.f32 %v338, %v338
      %v766 = vmul.f32 %v339, %v339
      %v767 = vmul.f32 %v340, %v340
      %v768 = vmul.f32 %v341, %v341
      %v769 = vmul.f32 %v342, %v342
      %v770 = vmul.f32 %v343, %v343
      %v771 = vmul.f32 %v344, %v344
      %v772 = vmul.f32 %v345, %v345
      %v773 = vmul.f32 %v346, %v346
      %v774 = vmul.f32 %v347, %v347
      %v775 = vmul.f32 %v348, %v348
      %v776 = vmul.f32 %v349, %v349
      %v777 = vmul.f32 %v350, %v350
      %v778 = vmul.f32 %v351, %v351
      %v779 = vmul.f32 %v352, %v352
      %v780 = vmul.f32 %v353, %v353
      %v781 = vmul.f32 %v354, %v354
      %v782 = vmul.f32 %v355, %v355
      %v783 = vmul.f32 %v356, %v356
      %v784 = vmul.f32 %v357, %v357
      %v785 = vmul.f32 %v358, %v358
      %v786 = vmul.f32 %v359, %v359
      %v787 = vmul.f32 %v360, %v360
      %v788 = vmul.f32 %v361, %v361
      %v789 = vmul.f32 %v362, %v362
      %v790 = vmul.f32 %v363, %v363
      %v791 = vmul.f32 %v364, %v364
      %v792 = vmul.f32 %v365, %v365
      %v794 = vsel %vm370, %v761, 0
      %v797 = vsel %vm370, %v762, 0
      %v800 = vsel %vm370, %v763, 0
      %v803 = vsel %vm370, %v764, 0
      %v806 = vsel %vm370, %v765, 0
      %v809 = vsel %vm370, %v766, 0
      %v812 = vsel %vm370, %v767, 0
      %v815 = vsel %vm370, %v768, 0
      %v818 = vsel %vm370, %v769, 0
      %v821 = vsel %vm370, %v770, 0
      %v824 = vsel %vm370, %v771, 0
      %v827 = vsel %vm370, %v772, 0
      %v830 = vsel %vm370, %v773, 0
      %v833 = vsel %vm370, %v774, 0
      %v836 = vsel %vm370, %v775, 0
      %v839 = vsel %vm370, %v776, 0
      %v842 = vsel %vm370, %v777, 0
      %v845 = vsel %vm370, %v778, 0
      %v848 = vsel %vm370, %v779, 0
      %v851 = vsel %vm370, %v780, 0
      %v854 = vsel %vm370, %v781, 0
      %v857 = vsel %vm370, %v782, 0
      %v860 = vsel %vm370, %v783, 0
      %v863 = vsel %vm370, %v784, 0
      %v866 = vsel %vm370, %v785, 0
      %v869 = vsel %vm370, %v786, 0
      %v872 = vsel %vm370, %v787, 0
      %v875 = vsel %vm370, %v788, 0
      %v878 = vsel %vm370, %v789, 0
      %v881 = vsel %vm370, %v790, 0
      %v884 = vsel %vm370, %v791, 0
      %v887 = vsel %vm370, %v792, 0
      %889 = vmatprep.subr.mxu0 0.0
      %890 = vmatpush1.msra.mxu0 0.0
      %891 = vmatprep.subr.mxu0 0.0
      %892 = vmatpush1.msra.mxu0 0.0
      %893 = vmatprep.subr.mxu0 0.0
      %894 = vmatpush1.msra.mxu0 0.0
      %895 = vmatprep.subr.mxu0 0.0
      %896 = vmatpush1.msra.mxu0 0.0
      %897 = vmatprep.subr.mxu0 0.0
      %898 = vmatpush1.msra.mxu0 0.0
      %899 = vmatprep.subr.mxu0 0.0
      %900 = vmatpush1.msra.mxu0 0.0
      %901 = vmatprep.subr.mxu0 0.0
      %902 = vmatpush1.msra.mxu0 0.0
      %903 = vmatprep.subr.mxu0 0.0
      %904 = vmatpush1.msra.mxu0 0.0
      %905 = vmatprep.subr.mxu0 0.0
      %906 = vmatpush1.msra.mxu0 0.0
      %907 = vmatprep.subr.mxu0 0.0
      %908 = vmatpush1.msra.mxu0 0.0
      %909 = vmatprep.subr.mxu0 0.0
      %910 = vmatpush1.msra.mxu0 0.0
      %911 = vmatprep.subr.mxu0 0.0
      %912 = vmatpush1.msra.mxu0 0.0
      %913 = vmatprep.subr.mxu0 0.0
      %914 = vmatpush1.msra.mxu0 %v369
      %915 = vmatprep.subr.mxu0 0.0
      %916 = vmatpush1.msra.mxu0 %v368
      %917 = vmatprep.subr.mxu0 0.0
      %918 = vmatpush1.msra.mxu0 %v367
      %919 = vmatprep.subr.mxu0 0.0
      %920 = vmatpush1.msra.mxu0 %v366
      %921 = vmatprep.subr.mxu0 0.0
      %922 = vmatpush2.msra.mxu0 0.0
      %923 = vmatprep.subr.mxu0 0.0
      %924 = vmatpush2.msra.mxu0 0.0
      %925 = vmatprep.subr.mxu0 0.0
      %926 = vmatpush2.msra.mxu0 0.0
      %927 = vmatprep.subr.mxu0 0.0
      %928 = vmatpush2.msra.mxu0 0.0
      %929 = vmatprep.subr.mxu0 0.0
      %930 = vmatpush2.msra.mxu0 0.0
      %931 = vmatprep.subr.mxu0 0.0
      %932 = vmatpush2.msra.mxu0 0.0
      %933 = vmatprep.subr.mxu0 0.0
      %934 = vmatpush2.msra.mxu0 0.0
      %935 = vmatprep.subr.mxu0 0.0
      %936 = vmatpush2.msra.mxu0 0.0
      %937 = vmatprep.subr.mxu0 0.0
      %938 = vmatpush2.msra.mxu0 0.0
      %939 = vmatprep.subr.mxu0 0.0
      %940 = vmatpush2.msra.mxu0 0.0
      %941 = vmatprep.subr.mxu0 0.0
      %942 = vmatpush2.msra.mxu0 0.0
      %943 = vmatprep.subr.mxu0 0.0
      %944 = vmatpush2.msra.mxu0 0.0
      %945 = vmatprep.subr.mxu0 0.0
      %946 = vmatpush2.msra.mxu0 0.0
      %947 = vmatprep.subr.mxu0 0.0
      %948 = vmatpush2.msra.mxu0 0.0
      %949 = vmatprep.subr.mxu0 0.0
      %950 = vmatpush2.msra.mxu0 0.0
      %951 = vmatprep.subr.mxu0 0.0
      %952 = vmatpush2.msra.mxu0 0.0
      %953 = vmatprep.mubr.f32.mxu0 0.0
      %954 = vmatmul.mubr.f32.gmra.mxu0 %v794
      %v955 = vpop.f32.mrf.mxu0
      %v956 = vadd.f32 0.0, %v955
      %v957 = vpop.f32.mrf.mxu0
      %958 = vmatprep.mubr.f32.mxu0 0.0
      %959 = vmatmul.mubr.f32.gmra.mxu0 %v797
      %v960 = vpop.f32.mrf.mxu0
      %v961 = vadd.f32 0.0, %v960
      %v962 = vpop.f32.mrf.mxu0
      %963 = vmatprep.mubr.f32.mxu0 0.0
      %964 = vmatmul.mubr.f32.gmra.mxu0 %v800
      %v965 = vpop.f32.mrf.mxu0
      %v966 = vadd.f32 0.0, %v965
      %v967 = vpop.f32.mrf.mxu0
      %968 = vmatprep.mubr.f32.mxu0 0.0
      %969 = vmatmul.mubr.f32.gmra.mxu0 %v803
      %v970 = vpop.f32.mrf.mxu0
      %v971 = vadd.f32 0.0, %v970
      %v972 = vpop.f32.mrf.mxu0
      %973 = vmatprep.mubr.f32.mxu0 0.0
      %974 = vmatmul.mubr.f32.gmra.mxu0 %v806
      %v975 = vpop.f32.mrf.mxu0
      %v976 = vadd.f32 0.0, %v975
      %v977 = vpop.f32.mrf.mxu0
      %978 = vmatprep.mubr.f32.mxu0 0.0
      %979 = vmatmul.mubr.f32.gmra.mxu0 %v809
      %v980 = vpop.f32.mrf.mxu0
      %v981 = vadd.f32 0.0, %v980
      %v982 = vpop.f32.mrf.mxu0
      %983 = vmatprep.mubr.f32.mxu0 0.0
      %984 = vmatmul.mubr.f32.gmra.mxu0 %v812
      %v985 = vpop.f32.mrf.mxu0
      %v986 = vadd.f32 0.0, %v985
      %v987 = vpop.f32.mrf.mxu0
      %988 = vmatprep.mubr.f32.mxu0 0.0
      %989 = vmatmul.mubr.f32.gmra.mxu0 %v815
      %v990 = vpop.f32.mrf.mxu0
      %v991 = vadd.f32 0.0, %v990
      %v992 = vpop.f32.mrf.mxu0
      %993 = vmatprep.mubr.f32.mxu0 0.0
      %994 = vmatmul.mubr.f32.gmra.mxu0 %v818
      %v995 = vpop.f32.mrf.mxu0
      %v996 = vadd.f32 0.0, %v995
      %v997 = vpop.f32.mrf.mxu0
      %998 = vmatprep.mubr.f32.mxu0 0.0
      %999 = vmatmul.mubr.f32.gmra.mxu0 %v821
      %v1000 = vpop.f32.mrf.mxu0
      %v1001 = vadd.f32 0.0, %v1000
      %v1002 = vpop.f32.mrf.mxu0
      %1003 = vmatprep.mubr.f32.mxu0 0.0
      %1004 = vmatmul.mubr.f32.gmra.mxu0 %v824
      %v1005 = vpop.f32.mrf.mxu0
      %v1006 = vadd.f32 0.0, %v1005
      %v1007 = vpop.f32.mrf.mxu0
      %1008 = vmatprep.mubr.f32.mxu0 0.0
      %1009 = vmatmul.mubr.f32.gmra.mxu0 %v827
      %v1010 = vpop.f32.mrf.mxu0
      %v1011 = vadd.f32 0.0, %v1010
      %v1012 = vpop.f32.mrf.mxu0
      %1013 = vmatprep.mubr.f32.mxu0 0.0
      %1014 = vmatmul.mubr.f32.gmra.mxu0 %v830
      %v1015 = vpop.f32.mrf.mxu0
      %v1016 = vadd.f32 0.0, %v1015
      %v1017 = vpop.f32.mrf.mxu0
      %1018 = vmatprep.mubr.f32.mxu0 0.0
      %1019 = vmatmul.mubr.f32.gmra.mxu0 %v833
      %v1020 = vpop.f32.mrf.mxu0
      %v1021 = vadd.f32 0.0, %v1020
      %v1022 = vpop.f32.mrf.mxu0
      %1023 = vmatprep.mubr.f32.mxu0 0.0
      %1024 = vmatmul.mubr.f32.gmra.mxu0 %v836
      %v1025 = vpop.f32.mrf.mxu0
      %v1026 = vadd.f32 0.0, %v1025
      %v1027 = vpop.f32.mrf.mxu0
      %1028 = vmatprep.mubr.f32.mxu0 0.0
      %1029 = vmatmul.mubr.f32.gmra.mxu0 %v839
      %v1030 = vpop.f32.mrf.mxu0
      %v1031 = vadd.f32 0.0, %v1030
      %v1032 = vpop.f32.mrf.mxu0
      %1033 = vmatprep.mubr.f32.mxu0 0.0
      %1034 = vmatmul.mubr.f32.gmra.mxu0 %v842
      %v1035 = vpop.f32.mrf.mxu0
      %v1036 = vadd.f32 0.0, %v1035
      %v1037 = vpop.f32.mrf.mxu0
      %1038 = vmatprep.mubr.f32.mxu0 0.0
      %1039 = vmatmul.mubr.f32.gmra.mxu0 %v845
      %v1040 = vpop.f32.mrf.mxu0
      %v1041 = vadd.f32 0.0, %v1040
      %v1042 = vpop.f32.mrf.mxu0
      %1043 = vmatprep.mubr.f32.mxu0 0.0
      %1044 = vmatmul.mubr.f32.gmra.mxu0 %v848
      %v1045 = vpop.f32.mrf.mxu0
      %v1046 = vadd.f32 0.0, %v1045
      %v1047 = vpop.f32.mrf.mxu0
      %1048 = vmatprep.mubr.f32.mxu0 0.0
      %1049 = vmatmul.mubr.f32.gmra.mxu0 %v851
      %v1050 = vpop.f32.mrf.mxu0
      %v1051 = vadd.f32 0.0, %v1050
      %v1052 = vpop.f32.mrf.mxu0
      %1053 = vmatprep.mubr.f32.mxu0 0.0
      %1054 = vmatmul.mubr.f32.gmra.mxu0 %v854
      %v1055 = vpop.f32.mrf.mxu0
      %v1056 = vadd.f32 0.0, %v1055
      %v1057 = vpop.f32.mrf.mxu0
      %1058 = vmatprep.mubr.f32.mxu0 0.0
      %1059 = vmatmul.mubr.f32.gmra.mxu0 %v857
      %v1060 = vpop.f32.mrf.mxu0
      %v1061 = vadd.f32 0.0, %v1060
      %v1062 = vpop.f32.mrf.mxu0
      %1063 = vmatprep.mubr.f32.mxu0 0.0
      %1064 = vmatmul.mubr.f32.gmra.mxu0 %v860
      %v1065 = vpop.f32.mrf.mxu0
      %v1066 = vadd.f32 0.0, %v1065
      %v1067 = vpop.f32.mrf.mxu0
      %1068 = vmatprep.mubr.f32.mxu0 0.0
      %1069 = vmatmul.mubr.f32.gmra.mxu0 %v863
      %v1070 = vpop.f32.mrf.mxu0
      %v1071 = vadd.f32 0.0, %v1070
      %v1072 = vpop.f32.mrf.mxu0
      %1073 = vmatprep.mubr.f32.mxu0 0.0
      %1074 = vmatmul.mubr.f32.gmra.mxu0 %v866
      %v1075 = vpop.f32.mrf.mxu0
      %v1076 = vadd.f32 0.0, %v1075
      %v1077 = vpop.f32.mrf.mxu0
      %1078 = vmatprep.mubr.f32.mxu0 0.0
      %1079 = vmatmul.mubr.f32.gmra.mxu0 %v869
      %v1080 = vpop.f32.mrf.mxu0
      %v1081 = vadd.f32 0.0, %v1080
      %v1082 = vpop.f32.mrf.mxu0
      %1083 = vmatprep.mubr.f32.mxu0 0.0
      %1084 = vmatmul.mubr.f32.gmra.mxu0 %v872
      %v1085 = vpop.f32.mrf.mxu0
      %v1086 = vadd.f32 0.0, %v1085
      %v1087 = vpop.f32.mrf.mxu0
      %1088 = vmatprep.mubr.f32.mxu0 0.0
      %1089 = vmatmul.mubr.f32.gmra.mxu0 %v875
      %v1090 = vpop.f32.mrf.mxu0
      %v1091 = vadd.f32 0.0, %v1090
      %v1092 = vpop.f32.mrf.mxu0
      %1093 = vmatprep.mubr.f32.mxu0 0.0
      %1094 = vmatmul.mubr.f32.gmra.mxu0 %v878
      %v1095 = vpop.f32.mrf.mxu0
      %v1096 = vadd.f32 0.0, %v1095
      %v1097 = vpop.f32.mrf.mxu0
      %1098 = vmatprep.mubr.f32.mxu0 0.0
      %1099 = vmatmul.mubr.f32.gmra.mxu0 %v881
      %v1100 = vpop.f32.mrf.mxu0
      %v1101 = vadd.f32 0.0, %v1100
      %v1102 = vpop.f32.mrf.mxu0
      %1103 = vmatprep.mubr.f32.mxu0 0.0
      %1104 = vmatmul.mubr.f32.gmra.mxu0 %v884
      %v1105 = vpop.f32.mrf.mxu0
      %v1106 = vadd.f32 0.0, %v1105
      %v1107 = vpop.f32.mrf.mxu0
      %1108 = vmatprep.mubr.f32.mxu0 0.0
      %1109 = vmatmul.mubr.f32.gmra.mxu0 %v887
      %v1110 = vpop.f32.mrf.mxu0
      %v1111 = vadd.f32 0.0, %v1110
      %v1112 = vpop.f32.mrf.mxu0
      %1113 = vdwg.mxu0
      %v1114 = vsel %vm370, %v956, 0.0
      %v1115 = vsel %vm370, %v961, 0.0
      %v1116 = vadd.f32 %v1114, %v1115
      %v1117 = vsel %vm370, %v966, 0.0
      %v1118 = vadd.f32 %v1116, %v1117
      %v1119 = vsel %vm370, %v971, 0.0
      %v1120 = vadd.f32 %v1118, %v1119
      %v1121 = vsel %vm370, %v976, 0.0
      %v1122 = vadd.f32 %v1120, %v1121
      %v1123 = vsel %vm370, %v981, 0.0
      %v1124 = vadd.f32 %v1122, %v1123
      %v1125 = vsel %vm370, %v986, 0.0
      %v1126 = vadd.f32 %v1124, %v1125
      %v1127 = vsel %vm370, %v991, 0.0
      %v1128 = vadd.f32 %v1126, %v1127
      %v1129 = vsel %vm370, %v996, 0.0
      %v1130 = vadd.f32 %v1128, %v1129
      %v1131 = vsel %vm370, %v1001, 0.0
      %v1132 = vadd.f32 %v1130, %v1131
      %v1133 = vsel %vm370, %v1006, 0.0
      %v1134 = vadd.f32 %v1132, %v1133
      %v1135 = vsel %vm370, %v1011, 0.0
      %v1136 = vadd.f32 %v1134, %v1135
      %v1137 = vsel %vm370, %v1016, 0.0
      %v1138 = vadd.f32 %v1136, %v1137
      %v1139 = vsel %vm370, %v1021, 0.0
      %v1140 = vadd.f32 %v1138, %v1139
      %v1141 = vsel %vm370, %v1026, 0.0
      %v1142 = vadd.f32 %v1140, %v1141
      %v1143 = vsel %vm370, %v1031, 0.0
      %v1144 = vadd.f32 %v1142, %v1143
      %v1145 = vsel %vm370, %v1036, 0.0
      %v1146 = vadd.f32 %v1144, %v1145
      %v1147 = vsel %vm370, %v1041, 0.0
      %v1148 = vadd.f32 %v1146, %v1147
      %v1149 = vsel %vm370, %v1046, 0.0
      %v1150 = vadd.f32 %v1148, %v1149
      %v1151 = vsel %vm370, %v1051, 0.0
      %v1152 = vadd.f32 %v1150, %v1151
      %v1153 = vsel %vm370, %v1056, 0.0
      %v1154 = vadd.f32 %v1152, %v1153
      %v1155 = vsel %vm370, %v1061, 0.0
      %v1156 = vadd.f32 %v1154, %v1155
      %v1157 = vsel %vm370, %v1066, 0.0
      %v1158 = vadd.f32 %v1156, %v1157
      %v1159 = vsel %vm370, %v1071, 0.0
      %v1160 = vadd.f32 %v1158, %v1159
      %v1161 = vsel %vm370, %v1076, 0.0
      %v1162 = vadd.f32 %v1160, %v1161
      %v1163 = vsel %vm370, %v1081, 0.0
      %v1164 = vadd.f32 %v1162, %v1163
      %v1165 = vsel %vm370, %v1086, 0.0
      %v1166 = vadd.f32 %v1164, %v1165
      %v1167 = vsel %vm370, %v1091, 0.0
      %v1168 = vadd.f32 %v1166, %v1167
      %v1169 = vsel %vm370, %v1096, 0.0
      %v1170 = vadd.f32 %v1168, %v1169
      %v1171 = vsel %vm370, %v1101, 0.0
      %v1172 = vadd.f32 %v1170, %v1171
      %v1173 = vsel %vm370, %v1106, 0.0
      %v1174 = vadd.f32 %v1172, %v1173
      %v1175 = vsel %vm370, %v1111, 0.0
      %v1176 = vadd.f32 %v1174, %v1175
      %v1177 = vrot.slane %v1176, 4
      %v1178 = vadd.f32 %v1176, %v1177
      %v1179 = vrot.slane %v1178, 2
      %v1180 = vadd.f32 %v1178, %v1179
      %v1181 = vrot.slane %v1180, 1
      %v1182 = vadd.f32 %v1180, %v1181
      %v1183 = vmul.f32 %v760, 0.0009765625
      %v1184 = vmul.f32 %v1182, 0.0009765625
      %v1185 = vmul.f32 %v1183, %v1183
      %v1186 = vsub.f32 %v1184, %v1185
      %v1187 = vsub.f32 %v334, %v1183
      %v1188 = vsub.f32 %v335, %v1183
      %v1189 = vsub.f32 %v336, %v1183
      %v1190 = vsub.f32 %v337, %v1183
      %v1191 = vsub.f32 %v338, %v1183
      %v1192 = vsub.f32 %v339, %v1183
      %v1193 = vsub.f32 %v340, %v1183
      %v1194 = vsub.f32 %v341, %v1183
      %v1195 = vsub.f32 %v342, %v1183
      %v1196 = vsub.f32 %v343, %v1183
      %v1197 = vsub.f32 %v344, %v1183
      %v1198 = vsub.f32 %v345, %v1183
      %v1199 = vsub.f32 %v346, %v1183
      %v1200 = vsub.f32 %v347, %v1183
      %v1201 = vsub.f32 %v348, %v1183
      %v1202 = vsub.f32 %v349, %v1183
      %v1203 = vsub.f32 %v350, %v1183
      %v1204 = vsub.f32 %v351, %v1183
      %v1205 = vsub.f32 %v352, %v1183
      %v1206 = vsub.f32 %v353, %v1183
      %v1207 = vsub.f32 %v354, %v1183
      %v1208 = vsub.f32 %v355, %v1183
      %v1209 = vsub.f32 %v356, %v1183
      %v1210 = vsub.f32 %v357, %v1183
      %v1211 = vsub.f32 %v358, %v1183
      %v1212 = vsub.f32 %v359, %v1183
      %v1213 = vsub.f32 %v360, %v1183
      %v1214 = vsub.f32 %v361, %v1183
      %v1215 = vsub.f32 %v362, %v1183
      %v1216 = vsub.f32 %v363, %v1183
      %v1217 = vsub.f32 %v364, %v1183
      %v1218 = vsub.f32 %v365, %v1183
      %v1219 = vadd.f32 %v1186, 1e-05
      %v1220 = vrsqrt.pop %v1219
      %v1221 = vmul.f32 %v1187, %v1220
      %v1222 = vmul.f32 %v1188, %v1220
      %v1223 = vmul.f32 %v1189, %v1220
      %v1224 = vmul.f32 %v1190, %v1220
      %v1225 = vmul.f32 %v1191, %v1220
      %v1226 = vmul.f32 %v1192, %v1220
      %v1227 = vmul.f32 %v1193, %v1220
      %v1228 = vmul.f32 %v1194, %v1220
      %v1229 = vmul.f32 %v1195, %v1220
      %v1230 = vmul.f32 %v1196, %v1220
      %v1231 = vmul.f32 %v1197, %v1220
      %v1232 = vmul.f32 %v1198, %v1220
      %v1233 = vmul.f32 %v1199, %v1220
      %v1234 = vmul.f32 %v1200, %v1220
      %v1235 = vmul.f32 %v1201, %v1220
      %v1236 = vmul.f32 %v1202, %v1220
      %v1237 = vmul.f32 %v1203, %v1220
      %v1238 = vmul.f32 %v1204, %v1220
      %v1239 = vmul.f32 %v1205, %v1220
      %v1240 = vmul.f32 %v1206, %v1220
      %v1241 = vmul.f32 %v1207, %v1220
      %v1242 = vmul.f32 %v1208, %v1220
      %v1243 = vmul.f32 %v1209, %v1220
      %v1244 = vmul.f32 %v1210, %v1220
      %v1245 = vmul.f32 %v1211, %v1220
      %v1246 = vmul.f32 %v1212, %v1220
      %v1247 = vmul.f32 %v1213, %v1220
      %v1248 = vmul.f32 %v1214, %v1220
      %v1249 = vmul.f32 %v1215, %v1220
      %v1250 = vmul.f32 %v1216, %v1220
      %v1251 = vmul.f32 %v1217, %v1220
      %v1252 = vmul.f32 %v1218, %v1220
      %v1253 = vld [vmem:[%s1] sm:$0x1]
      %v1255 = vlaneseq
      %v1256 = vshrl.u32 %v1255, 7
      %v1257 = vsub.s32 0, %v1256
      %v1258 = vrot.slane %v1253, %v1257
      %v1260 = vmul.f32 %v1221, %v1258
      %v1261 = vmul.f32 %v1222, %v1258
      %v1262 = vmul.f32 %v1223, %v1258
      %v1263 = vmul.f32 %v1224, %v1258
      %v1264 = vmul.f32 %v1225, %v1258
      %v1265 = vmul.f32 %v1226, %v1258
      %v1266 = vmul.f32 %v1227, %v1258
      %v1267 = vmul.f32 %v1228, %v1258
      %v1268 = vmul.f32 %v1229, %v1258
      %v1269 = vmul.f32 %v1230, %v1258
      %v1270 = vmul.f32 %v1231, %v1258
      %v1271 = vmul.f32 %v1232, %v1258
      %v1272 = vmul.f32 %v1233, %v1258
      %v1273 = vmul.f32 %v1234, %v1258
      %v1274 = vmul.f32 %v1235, %v1258
      %v1275 = vmul.f32 %v1236, %v1258
      %v1276 = vmul.f32 %v1237, %v1258
      %v1277 = vmul.f32 %v1238, %v1258
      %v1278 = vmul.f32 %v1239, %v1258
      %v1279 = vmul.f32 %v1240, %v1258
      %v1280 = vmul.f32 %v1241, %v1258
      %v1281 = vmul.f32 %v1242, %v1258
      %v1282 = vmul.f32 %v1243, %v1258
      %v1283 = vmul.f32 %v1244, %v1258
      %v1284 = vmul.f32 %v1245, %v1258
      %v1285 = vmul.f32 %v1246, %v1258
      %v1286 = vmul.f32 %v1247, %v1258
      %v1287 = vmul.f32 %v1248, %v1258
      %v1288 = vmul.f32 %v1249, %v1258
      %v1289 = vmul.f32 %v1250, %v1258
      %v1290 = vmul.f32 %v1251, %v1258
      %v1291 = vmul.f32 %v1252, %v1258
      %v1292 = vld [vmem:[%s2] sm:$0x1]
      %v1294 = vlaneseq
      %v1295 = vshrl.u32 %v1294, 7
      %v1296 = vsub.s32 0, %v1295
      %v1297 = vrot.slane %v1292, %v1296
      %v1299 = vadd.f32 %v1260, %v1297
      %v1300 = vadd.f32 %v1261, %v1297
      %v1301 = vadd.f32 %v1262, %v1297
      %v1302 = vadd.f32 %v1263, %v1297
      %v1303 = vadd.f32 %v1264, %v1297
      %v1304 = vadd.f32 %v1265, %v1297
      %v1305 = vadd.f32 %v1266, %v1297
      %v1306 = vadd.f32 %v1267, %v1297
      %v1307 = vadd.f32 %v1268, %v1297
      %v1308 = vadd.f32 %v1269, %v1297
      %v1309 = vadd.f32 %v1270, %v1297
      %v1310 = vadd.f32 %v1271, %v1297
      %v1311 = vadd.f32 %v1272, %v1297
      %v1312 = vadd.f32 %v1273, %v1297
      %v1313 = vadd.f32 %v1274, %v1297
      %v1314 = vadd.f32 %v1275, %v1297
      %v1315 = vadd.f32 %v1276, %v1297
      %v1316 = vadd.f32 %v1277, %v1297
      %v1317 = vadd.f32 %v1278, %v1297
      %v1318 = vadd.f32 %v1279, %v1297
      %v1319 = vadd.f32 %v1280, %v1297
      %v1320 = vadd.f32 %v1281, %v1297
      %v1321 = vadd.f32 %v1282, %v1297
      %v1322 = vadd.f32 %v1283, %v1297
      %v1323 = vadd.f32 %v1284, %v1297
      %v1324 = vadd.f32 %v1285, %v1297
      %v1325 = vadd.f32 %v1286, %v1297
      %v1326 = vadd.f32 %v1287, %v1297
      %v1327 = vadd.f32 %v1288, %v1297
      %v1328 = vadd.f32 %v1289, %v1297
      %v1329 = vadd.f32 %v1290, %v1297
      %v1330 = vadd.f32 %v1291, %v1297
      %v1331 = vld [vmem:[%s325] sm:$0x1]
      %v1332 = vadd.f32 %v1331, 1.0
      %v1334 = vlaneseq
      %v1335 = vshrl.u32 %v1334, 7
      %v1336 = vsub.s32 0, %v1335
      %v1337 = vrot.slane %v1332, %v1336
      %v1339 = vmul.f32 %v1299, %v1337
      %v1340 = vmul.f32 %v1300, %v1337
      %v1341 = vmul.f32 %v1301, %v1337
      %v1342 = vmul.f32 %v1302, %v1337
      %v1343 = vmul.f32 %v1303, %v1337
      %v1344 = vmul.f32 %v1304, %v1337
      %v1345 = vmul.f32 %v1305, %v1337
      %v1346 = vmul.f32 %v1306, %v1337
      %v1347 = vmul.f32 %v1307, %v1337
      %v1348 = vmul.f32 %v1308, %v1337
      %v1349 = vmul.f32 %v1309, %v1337
      %v1350 = vmul.f32 %v1310, %v1337
      %v1351 = vmul.f32 %v1311, %v1337
      %v1352 = vmul.f32 %v1312, %v1337
      %v1353 = vmul.f32 %v1313, %v1337
      %v1354 = vmul.f32 %v1314, %v1337
      %v1355 = vmul.f32 %v1315, %v1337
      %v1356 = vmul.f32 %v1316, %v1337
      %v1357 = vmul.f32 %v1317, %v1337
      %v1358 = vmul.f32 %v1318, %v1337
      %v1359 = vmul.f32 %v1319, %v1337
      %v1360 = vmul.f32 %v1320, %v1337
      %v1361 = vmul.f32 %v1321, %v1337
      %v1362 = vmul.f32 %v1322, %v1337
      %v1363 = vmul.f32 %v1323, %v1337
      %v1364 = vmul.f32 %v1324, %v1337
      %v1365 = vmul.f32 %v1325, %v1337
      %v1366 = vmul.f32 %v1326, %v1337
      %v1367 = vmul.f32 %v1327, %v1337
      %v1368 = vmul.f32 %v1328, %v1337
      %v1369 = vmul.f32 %v1329, %v1337
      %v1370 = vmul.f32 %v1330, %v1337
      %v1371 = vld [vmem:[%s328] sm:$0x1]
      %v1373 = vlaneseq
      %v1374 = vshrl.u32 %v1373, 7
      %v1375 = vsub.s32 0, %v1374
      %v1376 = vrot.slane %v1371, %v1375
      %v1378 = vadd.f32 %v1339, %v1376
      %v1379 = vadd.f32 %v1340, %v1376
      %v1380 = vadd.f32 %v1341, %v1376
      %v1381 = vadd.f32 %v1342, %v1376
      %v1382 = vadd.f32 %v1343, %v1376
      %v1383 = vadd.f32 %v1344, %v1376
      %v1384 = vadd.f32 %v1345, %v1376
      %v1385 = vadd.f32 %v1346, %v1376
      %v1386 = vadd.f32 %v1347, %v1376
      %v1387 = vadd.f32 %v1348, %v1376
      %v1388 = vadd.f32 %v1349, %v1376
      %v1389 = vadd.f32 %v1350, %v1376
      %v1390 = vadd.f32 %v1351, %v1376
      %v1391 = vadd.f32 %v1352, %v1376
      %v1392 = vadd.f32 %v1353, %v1376
      %v1393 = vadd.f32 %v1354, %v1376
      %v1394 = vadd.f32 %v1355, %v1376
      %v1395 = vadd.f32 %v1356, %v1376
      %v1396 = vadd.f32 %v1357, %v1376
      %v1397 = vadd.f32 %v1358, %v1376
      %v1398 = vadd.f32 %v1359, %v1376
      %v1399 = vadd.f32 %v1360, %v1376
      %v1400 = vadd.f32 %v1361, %v1376
      %v1401 = vadd.f32 %v1362, %v1376
      %v1402 = vadd.f32 %v1363, %v1376
      %v1403 = vadd.f32 %v1364, %v1376
      %v1404 = vadd.f32 %v1365, %v1376
      %v1405 = vadd.f32 %v1366, %v1376
      %v1406 = vadd.f32 %v1367, %v1376
      %v1407 = vadd.f32 %v1368, %v1376
      %v1408 = vadd.f32 %v1369, %v1376
      %v1409 = vadd.f32 %v1370, %v1376
      %v1410 = vsub.f32 0.0, %v1378
      %v1411 = vsub.f32 0.0, %v1379
      %v1412 = vsub.f32 0.0, %v1380
      %v1413 = vsub.f32 0.0, %v1381
      %v1414 = vsub.f32 0.0, %v1382
      %v1415 = vsub.f32 0.0, %v1383
      %v1416 = vsub.f32 0.0, %v1384
      %v1417 = vsub.f32 0.0, %v1385
      %v1418 = vsub.f32 0.0, %v1386
      %v1419 = vsub.f32 0.0, %v1387
      %v1420 = vsub.f32 0.0, %v1388
      %v1421 = vsub.f32 0.0, %v1389
      %v1422 = vsub.f32 0.0, %v1390
      %v1423 = vsub.f32 0.0, %v1391
      %v1424 = vsub.f32 0.0, %v1392
      %v1425 = vsub.f32 0.0, %v1393
      %v1426 = vsub.f32 0.0, %v1394
      %v1427 = vsub.f32 0.0, %v1395
      %v1428 = vsub.f32 0.0, %v1396
      %v1429 = vsub.f32 0.0, %v1397
      %v1430 = vsub.f32 0.0, %v1398
      %v1431 = vsub.f32 0.0, %v1399
      %v1432 = vsub.f32 0.0, %v1400
      %v1433 = vsub.f32 0.0, %v1401
      %v1434 = vsub.f32 0.0, %v1402
      %v1435 = vsub.f32 0.0, %v1403
      %v1436 = vsub.f32 0.0, %v1404
      %v1437 = vsub.f32 0.0, %v1405
      %v1438 = vsub.f32 0.0, %v1406
      %v1439 = vsub.f32 0.0, %v1407
      %v1440 = vsub.f32 0.0, %v1408
      %v1441 = vsub.f32 0.0, %v1409
      %v1442 = vmul.f32 %v1410, 1.442695
      %v1443 = vpow.pop %v1442
      %v1444 = vmul.f32 %v1411, 1.442695
      %v1445 = vpow.pop %v1444
      %v1446 = vmul.f32 %v1412, 1.442695
      %v1447 = vpow.pop %v1446
      %v1448 = vmul.f32 %v1413, 1.442695
      %v1449 = vpow.pop %v1448
      %v1450 = vmul.f32 %v1414, 1.442695
      %v1451 = vpow.pop %v1450
      %v1452 = vmul.f32 %v1415, 1.442695
      %v1453 = vpow.pop %v1452
      %v1454 = vmul.f32 %v1416, 1.442695
      %v1455 = vpow.pop %v1454
      %v1456 = vmul.f32 %v1417, 1.442695
      %v1457 = vpow.pop %v1456
      %v1458 = vmul.f32 %v1418, 1.442695
      %v1459 = vpow.pop %v1458
      %v1460 = vmul.f32 %v1419, 1.442695
      %v1461 = vpow.pop %v1460
      %v1462 = vmul.f32 %v1420, 1.442695
      %v1463 = vpow.pop %v1462
      %v1464 = vmul.f32 %v1421, 1.442695
      %v1465 = vpow.pop %v1464
      %v1466 = vmul.f32 %v1422, 1.442695
      %v1467 = vpow.pop %v1466
      %v1468 = vmul.f32 %v1423, 1.442695
      %v1469 = vpow.pop %v1468
      %v1470 = vmul.f32 %v1424, 1.442695
      %v1471 = vpow.pop %v1470
      %v1472 = vmul.f32 %v1425, 1.442695
      %v1473 = vpow.pop %v1472
      %v1474 = vmul.f32 %v1426, 1.442695
      %v1475 = vpow.pop %v1474
      %v1476 = vmul.f32 %v1427, 1.442695
      %v1477 = vpow.pop %v1476
      %v1478 = vmul.f32 %v1428, 1.442695
      %v1479 = vpow.pop %v1478
      %v1480 = vmul.f32 %v1429, 1.442695
      %v1481 = vpow.pop %v1480
      %v1482 = vmul.f32 %v1430, 1.442695
      %v1483 = vpow.pop %v1482
      %v1484 = vmul.f32 %v1431, 1.442695
      %v1485 = vpow.pop %v1484
      %v1486 = vmul.f32 %v1432, 1.442695
      %v1487 = vpow.pop %v1486
      %v1488 = vmul.f32 %v1433, 1.442695
      %v1489 = vpow.pop %v1488
      %v1490 = vmul.f32 %v1434, 1.442695
      %v1491 = vpow.pop %v1490
      %v1492 = vmul.f32 %v1435, 1.442695
      %v1493 = vpow.pop %v1492
      %v1494 = vmul.f32 %v1436, 1.442695
      %v1495 = vpow.pop %v1494
      %v1496 = vmul.f32 %v1437, 1.442695
      %v1497 = vpow.pop %v1496
      %v1498 = vmul.f32 %v1438, 1.442695
      %v1499 = vpow.pop %v1498
      %v1500 = vmul.f32 %v1439, 1.442695
      %v1501 = vpow.pop %v1500
      %v1502 = vmul.f32 %v1440, 1.442695
      %v1503 = vpow.pop %v1502
      %v1504 = vmul.f32 %v1441, 1.442695
      %v1505 = vpow.pop %v1504
      %v1506 = vadd.f32 %v1443, 1.0
      %v1507 = vadd.f32 %v1445, 1.0
      %v1508 = vadd.f32 %v1447, 1.0
      %v1509 = vadd.f32 %v1449, 1.0
      %v1510 = vadd.f32 %v1451, 1.0
      %v1511 = vadd.f32 %v1453, 1.0
      %v1512 = vadd.f32 %v1455, 1.0
      %v1513 = vadd.f32 %v1457, 1.0
      %v1514 = vadd.f32 %v1459, 1.0
      %v1515 = vadd.f32 %v1461, 1.0
      %v1516 = vadd.f32 %v1463, 1.0
      %v1517 = vadd.f32 %v1465, 1.0
      %v1518 = vadd.f32 %v1467, 1.0
      %v1519 = vadd.f32 %v1469, 1.0
      %v1520 = vadd.f32 %v1471, 1.0
      %v1521 = vadd.f32 %v1473, 1.0
      %v1522 = vadd.f32 %v1475, 1.0
      %v1523 = vadd.f32 %v1477, 1.0
      %v1524 = vadd.f32 %v1479, 1.0
      %v1525 = vadd.f32 %v1481, 1.0
      %v1526 = vadd.f32 %v1483, 1.0
      %v1527 = vadd.f32 %v1485, 1.0
      %v1528 = vadd.f32 %v1487, 1.0
      %v1529 = vadd.f32 %v1489, 1.0
      %v1530 = vadd.f32 %v1491, 1.0
      %v1531 = vadd.f32 %v1493, 1.0
      %v1532 = vadd.f32 %v1495, 1.0
      %v1533 = vadd.f32 %v1497, 1.0
      %v1534 = vadd.f32 %v1499, 1.0
      %v1535 = vadd.f32 %v1501, 1.0
      %v1536 = vadd.f32 %v1503, 1.0
      %v1537 = vadd.f32 %v1505, 1.0
      %v1538 = vrcp.pop %v1506
      %v1539 = vmul.f32 1.0, %v1538
      %v1540 = vrcp.pop %v1507
      %v1541 = vmul.f32 1.0, %v1540
      %v1542 = vrcp.pop %v1508
      %v1543 = vmul.f32 1.0, %v1542
      %v1544 = vrcp.pop %v1509
      %v1545 = vmul.f32 1.0, %v1544
      %v1546 = vrcp.pop %v1510
      %v1547 = vmul.f32 1.0, %v1546
      %v1548 = vrcp.pop %v1511
      %v1549 = vmul.f32 1.0, %v1548
      %v1550 = vrcp.pop %v1512
      %v1551 = vmul.f32 1.0, %v1550
      %v1552 = vrcp.pop %v1513
      %v1553 = vmul.f32 1.0, %v1552
      %v1554 = vrcp.pop %v1514
      %v1555 = vmul.f32 1.0, %v1554
      %v1556 = vrcp.pop %v1515
      %v1557 = vmul.f32 1.0, %v1556
      %v1558 = vrcp.pop %v1516
      %v1559 = vmul.f32 1.0, %v1558
      %v1560 = vrcp.pop %v1517
      %v1561 = vmul.f32 1.0, %v1560
      %v1562 = vrcp.pop %v1518
      %v1563 = vmul.f32 1.0, %v1562
      %v1564 = vrcp.pop %v1519
      %v1565 = vmul.f32 1.0, %v1564
      %v1566 = vrcp.pop %v1520
      %v1567 = vmul.f32 1.0, %v1566
      %v1568 = vrcp.pop %v1521
      %v1569 = vmul.f32 1.0, %v1568
      %v1570 = vrcp.pop %v1522
      %v1571 = vmul.f32 1.0, %v1570
      %v1572 = vrcp.pop %v1523
      %v1573 = vmul.f32 1.0, %v1572
      %v1574 = vrcp.pop %v1524
      %v1575 = vmul.f32 1.0, %v1574
      %v1576 = vrcp.pop %v1525
      %v1577 = vmul.f32 1.0, %v1576
      %v1578 = vrcp.pop %v1526
      %v1579 = vmul.f32 1.0, %v1578
      %v1580 = vrcp.pop %v1527
      %v1581 = vmul.f32 1.0, %v1580
      %v1582 = vrcp.pop %v1528
      %v1583 = vmul.f32 1.0, %v1582
      %v1584 = vrcp.pop %v1529
      %v1585 = vmul.f32 1.0, %v1584
      %v1586 = vrcp.pop %v1530
      %v1587 = vmul.f32 1.0, %v1586
      %v1588 = vrcp.pop %v1531
      %v1589 = vmul.f32 1.0, %v1588
      %v1590 = vrcp.pop %v1532
      %v1591 = vmul.f32 1.0, %v1590
      %v1592 = vrcp.pop %v1533
      %v1593 = vmul.f32 1.0, %v1592
      %v1594 = vrcp.pop %v1534
      %v1595 = vmul.f32 1.0, %v1594
      %v1596 = vrcp.pop %v1535
      %v1597 = vmul.f32 1.0, %v1596
      %v1598 = vrcp.pop %v1536
      %v1599 = vmul.f32 1.0, %v1598
      %v1600 = vrcp.pop %v1537
      %v1601 = vmul.f32 1.0, %v1600
      %v1602 = vmul.f32 %v1378, %v1539
      %v1603 = vmul.f32 %v1379, %v1541
      %v1604 = vmul.f32 %v1380, %v1543
      %v1605 = vmul.f32 %v1381, %v1545
      %v1606 = vmul.f32 %v1382, %v1547
      %v1607 = vmul.f32 %v1383, %v1549
      %v1608 = vmul.f32 %v1384, %v1551
      %v1609 = vmul.f32 %v1385, %v1553
      %v1610 = vmul.f32 %v1386, %v1555
      %v1611 = vmul.f32 %v1387, %v1557
      %v1612 = vmul.f32 %v1388, %v1559
      %v1613 = vmul.f32 %v1389, %v1561
      %v1614 = vmul.f32 %v1390, %v1563
      %v1615 = vmul.f32 %v1391, %v1565
      %v1616 = vmul.f32 %v1392, %v1567
      %v1617 = vmul.f32 %v1393, %v1569
      %v1618 = vmul.f32 %v1394, %v1571
      %v1619 = vmul.f32 %v1395, %v1573
      %v1620 = vmul.f32 %v1396, %v1575
      %v1621 = vmul.f32 %v1397, %v1577
      %v1622 = vmul.f32 %v1398, %v1579
      %v1623 = vmul.f32 %v1399, %v1581
      %v1624 = vmul.f32 %v1400, %v1583
      %v1625 = vmul.f32 %v1401, %v1585
      %v1626 = vmul.f32 %v1402, %v1587
      %v1627 = vmul.f32 %v1403, %v1589
      %v1628 = vmul.f32 %v1404, %v1591
      %v1629 = vmul.f32 %v1405, %v1593
      %v1630 = vmul.f32 %v1406, %v1595
      %v1631 = vmul.f32 %v1407, %v1597
      %v1632 = vmul.f32 %v1408, %v1599
      %v1633 = vmul.f32 %v1409, %v1601
      %1634 = vst.msk [vmem:[#allocation2] sm:$0xff] %vm370, 0.0
      %1635 = vst.msk [vmem:[#allocation2 + $0x8] sm:$0xff] %vm370, 0.0
      %1636 = vst.msk [vmem:[#allocation2 + $0x10] sm:$0xff] %vm370, 0.0
      %1637 = vst.msk [vmem:[#allocation2 + $0x118] sm:$0xff] %vm370, 0.0
      %1638 = vst.msk [vmem:[#allocation2 + $0x120] sm:$0xff] %vm370, 0.0
      %1639 = vst.msk [vmem:[#allocation2 + $0x128] sm:$0xff] %vm370, 0.0
      %1640 = vst.msk [vmem:[#allocation2 + $0x18] sm:$0xff] %vm370, %v1602
      %1641 = vst.msk [vmem:[#allocation2 + $0x20] sm:$0xff] %vm370, %v1603
      %1642 = vst.msk [vmem:[#allocation2 + $0x28] sm:$0xff] %vm370, %v1604
      %1643 = vst.msk [vmem:[#allocation2 + $0x30] sm:$0xff] %vm370, %v1605
      %1644 = vst.msk [vmem:[#allocation2 + $0x38] sm:$0xff] %vm370, %v1606
      %1645 = vst.msk [vmem:[#allocation2 + $0x40] sm:$0xff] %vm370, %v1607
      %1646 = vst.msk [vmem:[#allocation2 + $0x48] sm:$0xff] %vm370, %v1608
      %1647 = vst.msk [vmem:[#allocation2 + $0x50] sm:$0xff] %vm370, %v1609
      %1648 = vst.msk [vmem:[#allocation2 + $0x58] sm:$0xff] %vm370, %v1610
      %1649 = vst.msk [vmem:[#allocation2 + $0x60] sm:$0xff] %vm370, %v1611
      %1650 = vst.msk [vmem:[#allocation2 + $0x68] sm:$0xff] %vm370, %v1612
      %1651 = vst.msk [vmem:[#allocation2 + $0x70] sm:$0xff] %vm370, %v1613
      %1652 = vst.msk [vmem:[#allocation2 + $0x78] sm:$0xff] %vm370, %v1614
      %1653 = vst.msk [vmem:[#allocation2 + $0x80] sm:$0xff] %vm370, %v1615
      %1654 = vst.msk [vmem:[#allocation2 + $0x88] sm:$0xff] %vm370, %v1616
      %1655 = vst.msk [vmem:[#allocation2 + $0x90] sm:$0xff] %vm370, %v1617
      %1656 = vst.msk [vmem:[#allocation2 + $0x98] sm:$0xff] %vm370, %v1618
      %1657 = vst.msk [vmem:[#allocation2 + $0xa0] sm:$0xff] %vm370, %v1619
      %1658 = vst.msk [vmem:[#allocation2 + $0xa8] sm:$0xff] %vm370, %v1620
      %1659 = vst.msk [vmem:[#allocation2 + $0xb0] sm:$0xff] %vm370, %v1621
      %1660 = vst.msk [vmem:[#allocation2 + $0xb8] sm:$0xff] %vm370, %v1622
      %1661 = vst.msk [vmem:[#allocation2 + $0xc0] sm:$0xff] %vm370, %v1623
      %1662 = vst.msk [vmem:[#allocation2 + $0xc8] sm:$0xff] %vm370, %v1624
      %1663 = vst.msk [vmem:[#allocation2 + $0xd0] sm:$0xff] %vm370, %v1625
      %1664 = vst.msk [vmem:[#allocation2 + $0xd8] sm:$0xff] %vm370, %v1626
      %1665 = vst.msk [vmem:[#allocation2 + $0xe0] sm:$0xff] %vm370, %v1627
      %1666 = vst.msk [vmem:[#allocation2 + $0xe8] sm:$0xff] %vm370, %v1628
      %1667 = vst.msk [vmem:[#allocation2 + $0xf0] sm:$0xff] %vm370, %v1629
      %1668 = vst.msk [vmem:[#allocation2 + $0xf8] sm:$0xff] %vm370, %v1630
      %1669 = vst.msk [vmem:[#allocation2 + $0x100] sm:$0xff] %vm370, %v1631
      %1670 = vst.msk [vmem:[#allocation2 + $0x108] sm:$0xff] %vm370, %v1632
      %1671 = vst.msk [vmem:[#allocation2 + $0x110] sm:$0xff] %vm370, %v1633
      %v1672 = vlaneseq
      %v1673 = vshrl.u32 %v1672, 7
      %v1674 = vadd.s32 %v1673, 8
      %v1675 = vadd.s32 %v1673, 16
      %v1676 = vadd.s32 %v1673, 24
      %v1677 = vadd.s32 %v1673, 32
      %v1678 = vadd.s32 %v1673, 40
      %v1679 = vadd.s32 %v1673, 48
      %v1680 = vadd.s32 %v1673, 56
      %v1681 = vadd.s32 %v1673, 64
      %v1682 = vadd.s32 %v1673, 72
      %v1683 = vadd.s32 %v1673, 80
      %v1684 = vadd.s32 %v1673, 88
      %v1685 = vadd.s32 %v1673, 96
      %v1686 = vadd.s32 %v1673, 104
      %v1687 = vadd.s32 %v1673, 112
      %v1688 = vadd.s32 %v1673, 120
      %v1689 = vadd.s32 %v1673, 128
      %v1690 = vadd.s32 %v1673, 136
      %v1691 = vadd.s32 %v1673, 144
      %v1692 = vadd.s32 %v1673, 152
      %v1693 = vadd.s32 %v1673, 160
      %v1694 = vadd.s32 %v1673, 168
      %v1695 = vadd.s32 %v1673, 176
      %v1696 = vadd.s32 %v1673, 184
      %v1697 = vadd.s32 %v1673, 192
      %v1698 = vadd.s32 %v1673, 200
      %v1699 = vadd.s32 %v1673, 208
      %v1700 = vadd.s32 %v1673, 216
      %v1701 = vadd.s32 %v1673, 224
      %v1702 = vadd.s32 %v1673, 232
      %v1703 = vadd.s32 %v1673, 240
      %v1704 = vadd.s32 %v1673, 248
      %vm1705 = vcmp.lt.s32.totalorder %v1673, 0
      %v1706 = vsub.s32 0, %v1673
      %v1707 = vsel %vm1705, %v1706, %v1673
      %v1708 = vshrl.u32 %v1707, 4
      %v1709 = vand.u32 %v1707, 15
      %v1710 = vsub.s32 0, %v1709
      %v1711 = vsel %vm1705, %v1710, %v1709
      %vm1712 = vcmp.lt.s32.totalorder %v1674, 0
      %v1713 = vsub.s32 0, %v1674
      %v1714 = vsel %vm1712, %v1713, %v1674
      %v1715 = vshrl.u32 %v1714, 4
      %v1716 = vand.u32 %v1714, 15
      %v1717 = vsub.s32 0, %v1716
      %v1718 = vsel %vm1712, %v1717, %v1716
      %vm1719 = vcmp.lt.s32.totalorder %v1675, 0
      %v1720 = vsub.s32 0, %v1675
      %v1721 = vsel %vm1719, %v1720, %v1675
      %v1722 = vshrl.u32 %v1721, 4
      %v1723 = vand.u32 %v1721, 15
      %v1724 = vsub.s32 0, %v1723
      %v1725 = vsel %vm1719, %v1724, %v1723
      %vm1726 = vcmp.lt.s32.totalorder %v1676, 0
      %v1727 = vsub.s32 0, %v1676
      %v1728 = vsel %vm1726, %v1727, %v1676
      %v1729 = vshrl.u32 %v1728, 4
      %v1730 = vand.u32 %v1728, 15
      %v1731 = vsub.s32 0, %v1730
      %v1732 = vsel %vm1726, %v1731, %v1730
      %vm1733 = vcmp.lt.s32.totalorder %v1677, 0
      %v1734 = vsub.s32 0, %v1677
      %v1735 = vsel %vm1733, %v1734, %v1677
      %v1736 = vshrl.u32 %v1735, 4
      %v1737 = vand.u32 %v1735, 15
      %v1738 = vsub.s32 0, %v1737
      %v1739 = vsel %vm1733, %v1738, %v1737
      %vm1740 = vcmp.lt.s32.totalorder %v1678, 0
      %v1741 = vsub.s32 0, %v1678
      %v1742 = vsel %vm1740, %v1741, %v1678
      %v1743 = vshrl.u32 %v1742, 4
      %v1744 = vand.u32 %v1742, 15
      %v1745 = vsub.s32 0, %v1744
      %v1746 = vsel %vm1740, %v1745, %v1744
      %vm1747 = vcmp.lt.s32.totalorder %v1679, 0
      %v1748 = vsub.s32 0, %v1679
      %v1749 = vsel %vm1747, %v1748, %v1679
      %v1750 = vshrl.u32 %v1749, 4
      %v1751 = vand.u32 %v1749, 15
      %v1752 = vsub.s32 0, %v1751
      %v1753 = vsel %vm1747, %v1752, %v1751
      %vm1754 = vcmp.lt.s32.totalorder %v1680, 0
      %v1755 = vsub.s32 0, %v1680
      %v1756 = vsel %vm1754, %v1755, %v1680
      %v1757 = vshrl.u32 %v1756, 4
      %v1758 = vand.u32 %v1756, 15
      %v1759 = vsub.s32 0, %v1758
      %v1760 = vsel %vm1754, %v1759, %v1758
      %vm1761 = vcmp.lt.s32.totalorder %v1681, 0
      %v1762 = vsub.s32 0, %v1681
      %v1763 = vsel %vm1761, %v1762, %v1681
      %v1764 = vshrl.u32 %v1763, 4
      %v1765 = vand.u32 %v1763, 15
      %v1766 = vsub.s32 0, %v1765
      %v1767 = vsel %vm1761, %v1766, %v1765
      %vm1768 = vcmp.lt.s32.totalorder %v1682, 0
      %v1769 = vsub.s32 0, %v1682
      %v1770 = vsel %vm1768, %v1769, %v1682
      %v1771 = vshrl.u32 %v1770, 4
      %v1772 = vand.u32 %v1770, 15
      %v1773 = vsub.s32 0, %v1772
      %v1774 = vsel %vm1768, %v1773, %v1772
      %vm1775 = vcmp.lt.s32.totalorder %v1683, 0
      %v1776 = vsub.s32 0, %v1683
      %v1777 = vsel %vm1775, %v1776, %v1683
      %v1778 = vshrl.u32 %v1777, 4
      %v1779 = vand.u32 %v1777, 15
      %v1780 = vsub.s32 0, %v1779
      %v1781 = vsel %vm1775, %v1780, %v1779
      %vm1782 = vcmp.lt.s32.totalorder %v1684, 0
      %v1783 = vsub.s32 0, %v1684
      %v1784 = vsel %vm1782, %v1783, %v1684
      %v1785 = vshrl.u32 %v1784, 4
      %v1786 = vand.u32 %v1784, 15
      %v1787 = vsub.s32 0, %v1786
      %v1788 = vsel %vm1782, %v1787, %v1786
      %vm1789 = vcmp.lt.s32.totalorder %v1685, 0
      %v1790 = vsub.s32 0, %v1685
      %v1791 = vsel %vm1789, %v1790, %v1685
      %v1792 = vshrl.u32 %v1791, 4
      %v1793 = vand.u32 %v1791, 15
      %v1794 = vsub.s32 0, %v1793
      %v1795 = vsel %vm1789, %v1794, %v1793
      %vm1796 = vcmp.lt.s32.totalorder %v1686, 0
      %v1797 = vsub.s32 0, %v1686
      %v1798 = vsel %vm1796, %v1797, %v1686
      %v1799 = vshrl.u32 %v1798, 4
      %v1800 = vand.u32 %v1798, 15
      %v1801 = vsub.s32 0, %v1800
      %v1802 = vsel %vm1796, %v1801, %v1800
      %vm1803 = vcmp.lt.s32.totalorder %v1687, 0
      %v1804 = vsub.s32 0, %v1687
      %v1805 = vsel %vm1803, %v1804, %v1687
      %v1806 = vshrl.u32 %v1805, 4
      %v1807 = vand.u32 %v1805, 15
      %v1808 = vsub.s32 0, %v1807
      %v1809 = vsel %vm1803, %v1808, %v1807
      %vm1810 = vcmp.lt.s32.totalorder %v1688, 0
      %v1811 = vsub.s32 0, %v1688
      %v1812 = vsel %vm1810, %v1811, %v1688
      %v1813 = vshrl.u32 %v1812, 4
      %v1814 = vand.u32 %v1812, 15
      %v1815 = vsub.s32 0, %v1814
      %v1816 = vsel %vm1810, %v1815, %v1814
      %vm1817 = vcmp.lt.s32.totalorder %v1689, 0
      %v1818 = vsub.s32 0, %v1689
      %v1819 = vsel %vm1817, %v1818, %v1689
      %v1820 = vshrl.u32 %v1819, 4
      %v1821 = vand.u32 %v1819, 15
      %v1822 = vsub.s32 0, %v1821
      %v1823 = vsel %vm1817, %v1822, %v1821
      %vm1824 = vcmp.lt.s32.totalorder %v1690, 0
      %v1825 = vsub.s32 0, %v1690
      %v1826 = vsel %vm1824, %v1825, %v1690
      %v1827 = vshrl.u32 %v1826, 4
      %v1828 = vand.u32 %v1826, 15
      %v1829 = vsub.s32 0, %v1828
      %v1830 = vsel %vm1824, %v1829, %v1828
      %vm1831 = vcmp.lt.s32.totalorder %v1691, 0
      %v1832 = vsub.s32 0, %v1691
      %v1833 = vsel %vm1831, %v1832, %v1691
      %v1834 = vshrl.u32 %v1833, 4
      %v1835 = vand.u32 %v1833, 15
      %v1836 = vsub.s32 0, %v1835
      %v1837 = vsel %vm1831, %v1836, %v1835
      %vm1838 = vcmp.lt.s32.totalorder %v1692, 0
      %v1839 = vsub.s32 0, %v1692
      %v1840 = vsel %vm1838, %v1839, %v1692
      %v1841 = vshrl.u32 %v1840, 4
      %v1842 = vand.u32 %v1840, 15
      %v1843 = vsub.s32 0, %v1842
      %v1844 = vsel %vm1838, %v1843, %v1842
      %vm1845 = vcmp.lt.s32.totalorder %v1693, 0
      %v1846 = vsub.s32 0, %v1693
      %v1847 = vsel %vm1845, %v1846, %v1693
      %v1848 = vshrl.u32 %v1847, 4
      %v1849 = vand.u32 %v1847, 15
      %v1850 = vsub.s32 0, %v1849
      %v1851 = vsel %vm1845, %v1850, %v1849
      %vm1852 = vcmp.lt.s32.totalorder %v1694, 0
      %v1853 = vsub.s32 0, %v1694
      %v1854 = vsel %vm1852, %v1853, %v1694
      %v1855 = vshrl.u32 %v1854, 4
      %v1856 = vand.u32 %v1854, 15
      %v1857 = vsub.s32 0, %v1856
      %v1858 = vsel %vm1852, %v1857, %v1856
      %vm1859 = vcmp.lt.s32.totalorder %v1695, 0
      %v1860 = vsub.s32 0, %v1695
      %v1861 = vsel %vm1859, %v1860, %v1695
      %v1862 = vshrl.u32 %v1861, 4
      %v1863 = vand.u32 %v1861, 15
      %v1864 = vsub.s32 0, %v1863
      %v1865 = vsel %vm1859, %v1864, %v1863
      %vm1866 = vcmp.lt.s32.totalorder %v1696, 0
      %v1867 = vsub.s32 0, %v1696
      %v1868 = vsel %vm1866, %v1867, %v1696
      %v1869 = vshrl.u32 %v1868, 4
      %v1870 = vand.u32 %v1868, 15
      %v1871 = vsub.s32 0, %v1870
      %v1872 = vsel %vm1866, %v1871, %v1870
      %vm1873 = vcmp.lt.s32.totalorder %v1697, 0
      %v1874 = vsub.s32 0, %v1697
      %v1875 = vsel %vm1873, %v1874, %v1697
      %v1876 = vshrl.u32 %v1875, 4
      %v1877 = vand.u32 %v1875, 15
      %v1878 = vsub.s32 0, %v1877
      %v1879 = vsel %vm1873, %v1878, %v1877
      %vm1880 = vcmp.lt.s32.totalorder %v1698, 0
      %v1881 = vsub.s32 0, %v1698
      %v1882 = vsel %vm1880, %v1881, %v1698
      %v1883 = vshrl.u32 %v1882, 4
      %v1884 = vand.u32 %v1882, 15
      %v1885 = vsub.s32 0, %v1884
      %v1886 = vsel %vm1880, %v1885, %v1884
      %vm1887 = vcmp.lt.s32.totalorder %v1699, 0
      %v1888 = vsub.s32 0, %v1699
      %v1889 = vsel %vm1887, %v1888, %v1699
      %v1890 = vshrl.u32 %v1889, 4
      %v1891 = vand.u32 %v1889, 15
      %v1892 = vsub.s32 0, %v1891
      %v1893 = vsel %vm1887, %v1892, %v1891
      %vm1894 = vcmp.lt.s32.totalorder %v1700, 0
      %v1895 = vsub.s32 0, %v1700
      %v1896 = vsel %vm1894, %v1895, %v1700
      %v1897 = vshrl.u32 %v1896, 4
      %v1898 = vand.u32 %v1896, 15
      %v1899 = vsub.s32 0, %v1898
      %v1900 = vsel %vm1894, %v1899, %v1898
      %vm1901 = vcmp.lt.s32.totalorder %v1701, 0
      %v1902 = vsub.s32 0, %v1701
      %v1903 = vsel %vm1901, %v1902, %v1701
      %v1904 = vshrl.u32 %v1903, 4
      %v1905 = vand.u32 %v1903, 15
      %v1906 = vsub.s32 0, %v1905
      %v1907 = vsel %vm1901, %v1906, %v1905
      %vm1908 = vcmp.lt.s32.totalorder %v1702, 0
      %v1909 = vsub.s32 0, %v1702
      %v1910 = vsel %vm1908, %v1909, %v1702
      %v1911 = vshrl.u32 %v1910, 4
      %v1912 = vand.u32 %v1910, 15
      %v1913 = vsub.s32 0, %v1912
      %v1914 = vsel %vm1908, %v1913, %v1912
      %vm1915 = vcmp.lt.s32.totalorder %v1703, 0
      %v1916 = vsub.s32 0, %v1703
      %v1917 = vsel %vm1915, %v1916, %v1703
      %v1918 = vshrl.u32 %v1917, 4
      %v1919 = vand.u32 %v1917, 15
      %v1920 = vsub.s32 0, %v1919
      %v1921 = vsel %vm1915, %v1920, %v1919
      %vm1922 = vcmp.lt.s32.totalorder %v1704, 0
      %v1923 = vsub.s32 0, %v1704
      %v1924 = vsel %vm1922, %v1923, %v1704
      %v1925 = vshrl.u32 %v1924, 4
      %v1926 = vand.u32 %v1924, 15
      %v1927 = vsub.s32 0, %v1926
      %v1928 = vsel %vm1922, %v1927, %v1926
      %vm1929 = vcmp.ne.s32.totalorder %v1711, 0
      %vm1930 = vcmp.ne.s32.totalorder %v1718, 0
      %vm1931 = vcmp.ne.s32.totalorder %v1725, 0
      %vm1932 = vcmp.ne.s32.totalorder %v1732, 0
      %vm1933 = vcmp.ne.s32.totalorder %v1739, 0
      %vm1934 = vcmp.ne.s32.totalorder %v1746, 0
      %vm1935 = vcmp.ne.s32.totalorder %v1753, 0
      %vm1936 = vcmp.ne.s32.totalorder %v1760, 0
      %vm1937 = vcmp.ne.s32.totalorder %v1767, 0
      %vm1938 = vcmp.ne.s32.totalorder %v1774, 0
      %vm1939 = vcmp.ne.s32.totalorder %v1781, 0
      %vm1940 = vcmp.ne.s32.totalorder %v1788, 0
      %vm1941 = vcmp.ne.s32.totalorder %v1795, 0
      %vm1942 = vcmp.ne.s32.totalorder %v1802, 0
      %vm1943 = vcmp.ne.s32.totalorder %v1809, 0
      %vm1944 = vcmp.ne.s32.totalorder %v1816, 0
      %vm1945 = vcmp.ne.s32.totalorder %v1823, 0
      %vm1946 = vcmp.ne.s32.totalorder %v1830, 0
      %vm1947 = vcmp.ne.s32.totalorder %v1837, 0
      %vm1948 = vcmp.ne.s32.totalorder %v1844, 0
      %vm1949 = vcmp.ne.s32.totalorder %v1851, 0
      %vm1950 = vcmp.ne.s32.totalorder %v1858, 0
      %vm1951 = vcmp.ne.s32.totalorder %v1865, 0
      %vm1952 = vcmp.ne.s32.totalorder %v1872, 0
      %vm1953 = vcmp.ne.s32.totalorder %v1879, 0
      %vm1954 = vcmp.ne.s32.totalorder %v1886, 0
      %vm1955 = vcmp.ne.s32.totalorder %v1893, 0
      %vm1956 = vcmp.ne.s32.totalorder %v1900, 0
      %vm1957 = vcmp.ne.s32.totalorder %v1907, 0
      %vm1958 = vcmp.ne.s32.totalorder %v1914, 0
      %vm1959 = vcmp.ne.s32.totalorder %v1921, 0
      %vm1960 = vcmp.ne.s32.totalorder %v1928, 0
      %vm1961 = vcmp.lt.s32.totalorder %v1711, 0
      %vm1962 = vcmp.lt.s32.totalorder %v1718, 0
      %vm1963 = vcmp.lt.s32.totalorder %v1725, 0
      %vm1964 = vcmp.lt.s32.totalorder %v1732, 0
      %vm1965 = vcmp.lt.s32.totalorder %v1739, 0
      %vm1966 = vcmp.lt.s32.totalorder %v1746, 0
      %vm1967 = vcmp.lt.s32.totalorder %v1753, 0
      %vm1968 = vcmp.lt.s32.totalorder %v1760, 0
      %vm1969 = vcmp.lt.s32.totalorder %v1767, 0
      %vm1970 = vcmp.lt.s32.totalorder %v1774, 0
      %vm1971 = vcmp.lt.s32.totalorder %v1781, 0
      %vm1972 = vcmp.lt.s32.totalorder %v1788, 0
      %vm1973 = vcmp.lt.s32.totalorder %v1795, 0
      %vm1974 = vcmp.lt.s32.totalorder %v1802, 0
      %vm1975 = vcmp.lt.s32.totalorder %v1809, 0
      %vm1976 = vcmp.lt.s32.totalorder %v1816, 0
      %vm1977 = vcmp.lt.s32.totalorder %v1823, 0
      %vm1978 = vcmp.lt.s32.totalorder %v1830, 0
      %vm1979 = vcmp.lt.s32.totalorder %v1837, 0
      %vm1980 = vcmp.lt.s32.totalorder %v1844, 0
      %vm1981 = vcmp.lt.s32.totalorder %v1851, 0
      %vm1982 = vcmp.lt.s32.totalorder %v1858, 0
      %vm1983 = vcmp.lt.s32.totalorder %v1865, 0
      %vm1984 = vcmp.lt.s32.totalorder %v1872, 0
      %vm1985 = vcmp.lt.s32.totalorder %v1879, 0
      %vm1986 = vcmp.lt.s32.totalorder %v1886, 0
      %vm1987 = vcmp.lt.s32.totalorder %v1893, 0
      %vm1988 = vcmp.lt.s32.totalorder %v1900, 0
      %vm1989 = vcmp.lt.s32.totalorder %v1907, 0
      %vm1990 = vcmp.lt.s32.totalorder %v1914, 0
      %vm1991 = vcmp.lt.s32.totalorder %v1921, 0
      %vm1992 = vcmp.lt.s32.totalorder %v1928, 0
      %vm1993 = vmand %vm1961, %vm1929
      %vm1994 = vmand %vm1962, %vm1930
      %vm1995 = vmand %vm1963, %vm1931
      %vm1996 = vmand %vm1964, %vm1932
      %vm1997 = vmand %vm1965, %vm1933
      %vm1998 = vmand %vm1966, %vm1934
      %vm1999 = vmand %vm1967, %vm1935
      %vm2000 = vmand %vm1968, %vm1936
      %vm2001 = vmand %vm1969, %vm1937
      %vm2002 = vmand %vm1970, %vm1938
      %vm2003 = vmand %vm1971, %vm1939
      %vm2004 = vmand %vm1972, %vm1940
      %vm2005 = vmand %vm1973, %vm1941
      %vm2006 = vmand %vm1974, %vm1942
      %vm2007 = vmand %vm1975, %vm1943
      %vm2008 = vmand %vm1976, %vm1944
      %vm2009 = vmand %vm1977, %vm1945
      %vm2010 = vmand %vm1978, %vm1946
      %vm2011 = vmand %vm1979, %vm1947
      %vm2012 = vmand %vm1980, %vm1948
      %vm2013 = vmand %vm1981, %vm1949
      %vm2014 = vmand %vm1982, %vm1950
      %vm2015 = vmand %vm1983, %vm1951
      %vm2016 = vmand %vm1984, %vm1952
      %vm2017 = vmand %vm1985, %vm1953
      %vm2018 = vmand %vm1986, %vm1954
      %vm2019 = vmand %vm1987, %vm1955
      %vm2020 = vmand %vm1988, %vm1956
      %vm2021 = vmand %vm1989, %vm1957
      %vm2022 = vmand %vm1990, %vm1958
      %vm2023 = vmand %vm1991, %vm1959
      %vm2024 = vmand %vm1992, %vm1960
      %v2025 = vadd.s32 %v1711, 16
      %v2026 = vadd.s32 %v1718, 16
      %v2027 = vadd.s32 %v1725, 16
      %v2028 = vadd.s32 %v1732, 16
      %v2029 = vadd.s32 %v1739, 16
      %v2030 = vadd.s32 %v1746, 16
      %v2031 = vadd.s32 %v1753, 16
      %v2032 = vadd.s32 %v1760, 16
      %v2033 = vadd.s32 %v1767, 16
      %v2034 = vadd.s32 %v1774, 16
      %v2035 = vadd.s32 %v1781, 16
      %v2036 = vadd.s32 %v1788, 16
      %v2037 = vadd.s32 %v1795, 16
      %v2038 = vadd.s32 %v1802, 16
      %v2039 = vadd.s32 %v1809, 16
      %v2040 = vadd.s32 %v1816, 16
      %v2041 = vadd.s32 %v1823, 16
      %v2042 = vadd.s32 %v1830, 16
      %v2043 = vadd.s32 %v1837, 16
      %v2044 = vadd.s32 %v1844, 16
      %v2045 = vadd.s32 %v1851, 16
      %v2046 = vadd.s32 %v1858, 16
      %v2047 = vadd.s32 %v1865, 16
      %v2048 = vadd.s32 %v1872, 16
      %v2049 = vadd.s32 %v1879, 16
      %v2050 = vadd.s32 %v1886, 16
      %v2051 = vadd.s32 %v1893, 16
      %v2052 = vadd.s32 %v1900, 16
      %v2053 = vadd.s32 %v1907, 16
      %v2054 = vadd.s32 %v1914, 16
      %v2055 = vadd.s32 %v1921, 16
      %v2056 = vadd.s32 %v1928, 16
      %v2057 = vsel %vm1993, %v2025, %v1711
      %v2058 = vsel %vm1994, %v2026, %v1718
      %v2059 = vsel %vm1995, %v2027, %v1725
      %v2060 = vsel %vm1996, %v2028, %v1732
      %v2061 = vsel %vm1997, %v2029, %v1739
      %v2062 = vsel %vm1998, %v2030, %v1746
      %v2063 = vsel %vm1999, %v2031, %v1753
      %v2064 = vsel %vm2000, %v2032, %v1760
      %v2065 = vsel %vm2001, %v2033, %v1767
      %v2066 = vsel %vm2002, %v2034, %v1774
      %v2067 = vsel %vm2003, %v2035, %v1781
      %v2068 = vsel %vm2004, %v2036, %v1788
      %v2069 = vsel %vm2005, %v2037, %v1795
      %v2070 = vsel %vm2006, %v2038, %v1802
      %v2071 = vsel %vm2007, %v2039, %v1809
      %v2072 = vsel %vm2008, %v2040, %v1816
      %v2073 = vsel %vm2009, %v2041, %v1823
      %v2074 = vsel %vm2010, %v2042, %v1830
      %v2075 = vsel %vm2011, %v2043, %v1837
      %v2076 = vsel %vm2012, %v2044, %v1844
      %v2077 = vsel %vm2013, %v2045, %v1851
      %v2078 = vsel %vm2014, %v2046, %v1858
      %v2079 = vsel %vm2015, %v2047, %v1865
      %v2080 = vsel %vm2016, %v2048, %v1872
      %v2081 = vsel %vm2017, %v2049, %v1879
      %v2082 = vsel %vm2018, %v2050, %v1886
      %v2083 = vsel %vm2019, %v2051, %v1893
      %v2084 = vsel %vm2020, %v2052, %v1900
      %v2085 = vsel %vm2021, %v2053, %v1907
      %v2086 = vsel %vm2022, %v2054, %v1914
      %v2087 = vsel %vm2023, %v2055, %v1921
      %v2088 = vsel %vm2024, %v2056, %v1928
      %vm2089 = vcmp.ge.s32.totalorder %v2057, 1
      %vm2090 = vcmp.ge.s32.totalorder %v2058, 1
      %vm2091 = vcmp.ge.s32.totalorder %v2059, 1
      %vm2092 = vcmp.ge.s32.totalorder %v2060, 1
      %vm2093 = vcmp.ge.s32.totalorder %v2061, 1
      %vm2094 = vcmp.ge.s32.totalorder %v2062, 1
      %vm2095 = vcmp.ge.s32.totalorder %v2063, 1
      %vm2096 = vcmp.ge.s32.totalorder %v2064, 1
      %vm2097 = vcmp.ge.s32.totalorder %v2065, 1
      %vm2098 = vcmp.ge.s32.totalorder %v2066, 1
      %vm2099 = vcmp.ge.s32.totalorder %v2067, 1
      %vm2100 = vcmp.ge.s32.totalorder %v2068, 1
      %vm2101 = vcmp.ge.s32.totalorder %v2069, 1
      %vm2102 = vcmp.ge.s32.totalorder %v2070, 1
      %vm2103 = vcmp.ge.s32.totalorder %v2071, 1
      %vm2104 = vcmp.ge.s32.totalorder %v2072, 1
      %vm2105 = vcmp.ge.s32.totalorder %v2073, 1
      %vm2106 = vcmp.ge.s32.totalorder %v2074, 1
      %vm2107 = vcmp.ge.s32.totalorder %v2075, 1
      %vm2108 = vcmp.ge.s32.totalorder %v2076, 1
      %vm2109 = vcmp.ge.s32.totalorder %v2077, 1
      %vm2110 = vcmp.ge.s32.totalorder %v2078, 1
      %vm2111 = vcmp.ge.s32.totalorder %v2079, 1
      %vm2112 = vcmp.ge.s32.totalorder %v2080, 1
      %vm2113 = vcmp.ge.s32.totalorder %v2081, 1
      %vm2114 = vcmp.ge.s32.totalorder %v2082, 1
      %vm2115 = vcmp.ge.s32.totalorder %v2083, 1
      %vm2116 = vcmp.ge.s32.totalorder %v2084, 1
      %vm2117 = vcmp.ge.s32.totalorder %v2085, 1
      %vm2118 = vcmp.ge.s32.totalorder %v2086, 1
      %vm2119 = vcmp.ge.s32.totalorder %v2087, 1
      %vm2120 = vcmp.ge.s32.totalorder %v2088, 1
      %vm2121 = vcmp.lt.s32.totalorder %v2057, 15
      %vm2122 = vcmp.lt.s32.totalorder %v2058, 15
      %vm2123 = vcmp.lt.s32.totalorder %v2059, 15
      %vm2124 = vcmp.lt.s32.totalorder %v2060, 15
      %vm2125 = vcmp.lt.s32.totalorder %v2061, 15
      %vm2126 = vcmp.lt.s32.totalorder %v2062, 15
      %vm2127 = vcmp.lt.s32.totalorder %v2063, 15
      %vm2128 = vcmp.lt.s32.totalorder %v2064, 15
      %vm2129 = vcmp.lt.s32.totalorder %v2065, 15
      %vm2130 = vcmp.lt.s32.totalorder %v2066, 15
      %vm2131 = vcmp.lt.s32.totalorder %v2067, 15
      %vm2132 = vcmp.lt.s32.totalorder %v2068, 15
      %vm2133 = vcmp.lt.s32.totalorder %v2069, 15
      %vm2134 = vcmp.lt.s32.totalorder %v2070, 15
      %vm2135 = vcmp.lt.s32.totalorder %v2071, 15
      %vm2136 = vcmp.lt.s32.totalorder %v2072, 15
      %vm2137 = vcmp.lt.s32.totalorder %v2073, 15
      %vm2138 = vcmp.lt.s32.totalorder %v2074, 15
      %vm2139 = vcmp.lt.s32.totalorder %v2075, 15
      %vm2140 = vcmp.lt.s32.totalorder %v2076, 15
      %vm2141 = vcmp.lt.s32.totalorder %v2077, 15
      %vm2142 = vcmp.lt.s32.totalorder %v2078, 15
      %vm2143 = vcmp.lt.s32.totalorder %v2079, 15
      %vm2144 = vcmp.lt.s32.totalorder %v2080, 15
      %vm2145 = vcmp.lt.s32.totalorder %v2081, 15
      %vm2146 = vcmp.lt.s32.totalorder %v2082, 15
      %vm2147 = vcmp.lt.s32.totalorder %v2083, 15
      %vm2148 = vcmp.lt.s32.totalorder %v2084, 15
      %vm2149 = vcmp.lt.s32.totalorder %v2085, 15
      %vm2150 = vcmp.lt.s32.totalorder %v2086, 15
      %vm2151 = vcmp.lt.s32.totalorder %v2087, 15
      %vm2152 = vcmp.lt.s32.totalorder %v2088, 15
      %v2153 = vld [vmem:[#allocation2 + $0x7] sm:$0xff]
      %v2154 = vld [vmem:[#allocation2 + $0xf] sm:$0xff]
      %v2155 = vld [vmem:[#allocation2 + $0x17] sm:$0xff]
      %v2156 = vld [vmem:[#allocation2 + $0x1f] sm:$0xff]
      %v2157 = vld [vmem:[#allocation2 + $0x27] sm:$0xff]
      %v2158 = vld [vmem:[#allocation2 + $0x2f] sm:$0xff]
      %v2159 = vld [vmem:[#allocation2 + $0x37] sm:$0xff]
      %v2160 = vld [vmem:[#allocation2 + $0x3f] sm:$0xff]
      %v2161 = vld [vmem:[#allocation2 + $0x47] sm:$0xff]
      %v2162 = vld [vmem:[#allocation2 + $0x4f] sm:$0xff]
      %v2163 = vld [vmem:[#allocation2 + $0x57] sm:$0xff]
      %v2164 = vld [vmem:[#allocation2 + $0x5f] sm:$0xff]
      %v2165 = vld [vmem:[#allocation2 + $0x67] sm:$0xff]
      %v2166 = vld [vmem:[#allocation2 + $0x6f] sm:$0xff]
      %v2167 = vld [vmem:[#allocation2 + $0x77] sm:$0xff]
      %v2168 = vld [vmem:[#allocation2 + $0x7f] sm:$0xff]
      %v2169 = vld [vmem:[#allocation2 + $0x87] sm:$0xff]
      %v2170 = vld [vmem:[#allocation2 + $0x8f] sm:$0xff]
      %v2171 = vld [vmem:[#allocation2 + $0x97] sm:$0xff]
      %v2172 = vld [vmem:[#allocation2 + $0x9f] sm:$0xff]
      %v2173 = vld [vmem:[#allocation2 + $0xa7] sm:$0xff]
      %v2174 = vld [vmem:[#allocation2 + $0xaf] sm:$0xff]
      %v2175 = vld [vmem:[#allocation2 + $0xb7] sm:$0xff]
      %v2176 = vld [vmem:[#allocation2 + $0xbf] sm:$0xff]
      %v2177 = vld [vmem:[#allocation2 + $0xc7] sm:$0xff]
      %v2178 = vld [vmem:[#allocation2 + $0xcf] sm:$0xff]
      %v2179 = vld [vmem:[#allocation2 + $0xd7] sm:$0xff]
      %v2180 = vld [vmem:[#allocation2 + $0xdf] sm:$0xff]
      %v2181 = vld [vmem:[#allocation2 + $0xe7] sm:$0xff]
      %v2182 = vld [vmem:[#allocation2 + $0xef] sm:$0xff]
      %v2183 = vld [vmem:[#allocation2 + $0xf7] sm:$0xff]
      %v2184 = vld [vmem:[#allocation2 + $0xff] sm:$0xff]
      %v2185 = vsel %vm2089, 1, 0
      %v2186 = vsel %vm2090, 1, 0
      %v2187 = vsel %vm2091, 1, 0
      %v2188 = vsel %vm2092, 1, 0
      %v2189 = vsel %vm2093, 1, 0
      %v2190 = vsel %vm2094, 1, 0
      %v2191 = vsel %vm2095, 1, 0
      %v2192 = vsel %vm2096, 1, 0
      %v2193 = vsel %vm2097, 1, 0
      %v2194 = vsel %vm2098, 1, 0
      %v2195 = vsel %vm2099, 1, 0
      %v2196 = vsel %vm2100, 1, 0
      %v2197 = vsel %vm2101, 1, 0
      %v2198 = vsel %vm2102, 1, 0
      %v2199 = vsel %vm2103, 1, 0
      %v2200 = vsel %vm2104, 1, 0
      %v2201 = vsel %vm2105, 1, 0
      %v2202 = vsel %vm2106, 1, 0
      %v2203 = vsel %vm2107, 1, 0
      %v2204 = vsel %vm2108, 1, 0
      %v2205 = vsel %vm2109, 1, 0
      %v2206 = vsel %vm2110, 1, 0
      %v2207 = vsel %vm2111, 1, 0
      %v2208 = vsel %vm2112, 1, 0
      %v2209 = vsel %vm2113, 1, 0
      %v2210 = vsel %vm2114, 1, 0
      %v2211 = vsel %vm2115, 1, 0
      %v2212 = vsel %vm2116, 1, 0
      %v2213 = vsel %vm2117, 1, 0
      %v2214 = vsel %vm2118, 1, 0
      %v2215 = vsel %vm2119, 1, 0
      %v2216 = vsel %vm2120, 1, 0
      %vm2217 = vcmp.eq.s32.totalorder %v2185, 1
      %vm2218 = vcmp.eq.s32.totalorder %v2186, 1
      %vm2219 = vcmp.eq.s32.totalorder %v2187, 1
      %vm2220 = vcmp.eq.s32.totalorder %v2188, 1
      %vm2221 = vcmp.eq.s32.totalorder %v2189, 1
      %vm2222 = vcmp.eq.s32.totalorder %v2190, 1
      %vm2223 = vcmp.eq.s32.totalorder %v2191, 1
      %vm2224 = vcmp.eq.s32.totalorder %v2192, 1
      %vm2225 = vcmp.eq.s32.totalorder %v2193, 1
      %vm2226 = vcmp.eq.s32.totalorder %v2194, 1
      %vm2227 = vcmp.eq.s32.totalorder %v2195, 1
      %vm2228 = vcmp.eq.s32.totalorder %v2196, 1
      %vm2229 = vcmp.eq.s32.totalorder %v2197, 1
      %vm2230 = vcmp.eq.s32.totalorder %v2198, 1
      %vm2231 = vcmp.eq.s32.totalorder %v2199, 1
      %vm2232 = vcmp.eq.s32.totalorder %v2200, 1
      %vm2233 = vcmp.eq.s32.totalorder %v2201, 1
      %vm2234 = vcmp.eq.s32.totalorder %v2202, 1
      %vm2235 = vcmp.eq.s32.totalorder %v2203, 1
      %vm2236 = vcmp.eq.s32.totalorder %v2204, 1
      %vm2237 = vcmp.eq.s32.totalorder %v2205, 1
      %vm2238 = vcmp.eq.s32.totalorder %v2206, 1
      %vm2239 = vcmp.eq.s32.totalorder %v2207, 1
      %vm2240 = vcmp.eq.s32.totalorder %v2208, 1
      %vm2241 = vcmp.eq.s32.totalorder %v2209, 1
      %vm2242 = vcmp.eq.s32.totalorder %v2210, 1
      %vm2243 = vcmp.eq.s32.totalorder %v2211, 1
      %vm2244 = vcmp.eq.s32.totalorder %v2212, 1
      %vm2245 = vcmp.eq.s32.totalorder %v2213, 1
      %vm2246 = vcmp.eq.s32.totalorder %v2214, 1
      %vm2247 = vcmp.eq.s32.totalorder %v2215, 1
      %vm2248 = vcmp.eq.s32.totalorder %v2216, 1
      %v2249 = vsel %vm2217, %v2153, 0.0
      %v2250 = vsel %vm2218, %v2154, 0.0
      %v2251 = vsel %vm2219, %v2155, 0.0
      %v2252 = vsel %vm2220, %v2156, 0.0
      %v2253 = vsel %vm2221, %v2157, 0.0
      %v2254 = vsel %vm2222, %v2158, 0.0
      %v2255 = vsel %vm2223, %v2159, 0.0
      %v2256 = vsel %vm2224, %v2160, 0.0
      %v2257 = vsel %vm2225, %v2161, 0.0
      %v2258 = vsel %vm2226, %v2162, 0.0
      %v2259 = vsel %vm2227, %v2163, 0.0
      %v2260 = vsel %vm2228, %v2164, 0.0
      %v2261 = vsel %vm2229, %v2165, 0.0
      %v2262 = vsel %vm2230, %v2166, 0.0
      %v2263 = vsel %vm2231, %v2167, 0.0
      %v2264 = vsel %vm2232, %v2168, 0.0
      %v2265 = vsel %vm2233, %v2169, 0.0
      %v2266 = vsel %vm2234, %v2170, 0.0
      %v2267 = vsel %vm2235, %v2171, 0.0
      %v2268 = vsel %vm2236, %v2172, 0.0
      %v2269 = vsel %vm2237, %v2173, 0.0
      %v2270 = vsel %vm2238, %v2174, 0.0
      %v2271 = vsel %vm2239, %v2175, 0.0
      %v2272 = vsel %vm2240, %v2176, 0.0
      %v2273 = vsel %vm2241, %v2177, 0.0
      %v2274 = vsel %vm2242, %v2178, 0.0
      %v2275 = vsel %vm2243, %v2179, 0.0
      %v2276 = vsel %vm2244, %v2180, 0.0
      %v2277 = vsel %vm2245, %v2181, 0.0
      %v2278 = vsel %vm2246, %v2182, 0.0
      %v2279 = vsel %vm2247, %v2183, 0.0
      %v2280 = vsel %vm2248, %v2184, 0.0
      %v2281 = vld [vmem:[%s6] sm:$0xff]
      %v2282 = vld [vmem:[%s6 + $0x8] sm:$0xff]
      %v2283 = vld [vmem:[%s6 + $0x10] sm:$0xff]
      %v2284 = vld [vmem:[%s6 + $0x18] sm:$0xff]
      %v2285 = vld [vmem:[#allocation2 + $0x8] sm:$0xff]
      %v2286 = vld [vmem:[#allocation2 + $0x10] sm:$0xff]
      %v2287 = vld [vmem:[#allocation2 + $0x18] sm:$0xff]
      %v2288 = vld [vmem:[#allocation2 + $0x20] sm:$0xff]
      %v2289 = vld [vmem:[#allocation2 + $0x28] sm:$0xff]
      %v2290 = vld [vmem:[#allocation2 + $0x30] sm:$0xff]
      %v2291 = vld [vmem:[#allocation2 + $0x38] sm:$0xff]
      %v2292 = vld [vmem:[#allocation2 + $0x40] sm:$0xff]
      %v2293 = vld [vmem:[#allocation2 + $0x48] sm:$0xff]
      %v2294 = vld [vmem:[#allocation2 + $0x50] sm:$0xff]
      %v2295 = vld [vmem:[#allocation2 + $0x58] sm:$0xff]
      %v2296 = vld [vmem:[#allocation2 + $0x60] sm:$0xff]
      %v2297 = vld [vmem:[#allocation2 + $0x68] sm:$0xff]
      %v2298 = vld [vmem:[#allocation2 + $0x70] sm:$0xff]
      %v2299 = vld [vmem:[#allocation2 + $0x78] sm:$0xff]
      %v2300 = vld [vmem:[#allocation2 + $0x80] sm:$0xff]
      %v2301 = vld [vmem:[#allocation2 + $0x88] sm:$0xff]
      %v2302 = vld [vmem:[#allocation2 + $0x90] sm:$0xff]
      %v2303 = vld [vmem:[#allocation2 + $0x98] sm:$0xff]
      %v2304 = vld [vmem:[#allocation2 + $0xa0] sm:$0xff]
      %v2305 = vld [vmem:[#allocation2 + $0xa8] sm:$0xff]
      %v2306 = vld [vmem:[#allocation2 + $0xb0] sm:$0xff]
      %v2307 = vld [vmem:[#allocation2 + $0xb8] sm:$0xff]
      %v2308 = vld [vmem:[#allocation2 + $0xc0] sm:$0xff]
      %v2309 = vld [vmem:[#allocation2 + $0xc8] sm:$0xff]
      %v2310 = vld [vmem:[#allocation2 + $0xd0] sm:$0xff]
      %v2311 = vld [vmem:[#allocation2 + $0xd8] sm:$0xff]
      %v2312 = vld [vmem:[#allocation2 + $0xe0] sm:$0xff]
      %v2313 = vld [vmem:[#allocation2 + $0xe8] sm:$0xff]
      %v2314 = vld [vmem:[#allocation2 + $0xf0] sm:$0xff]
      %v2315 = vld [vmem:[#allocation2 + $0xf8] sm:$0xff]
      %v2316 = vld [vmem:[#allocation2 + $0x100] sm:$0xff]
      %v2317 = vld [vmem:[%s6 + $0x20] sm:$0xff]
      %v2318 = vld [vmem:[%s6 + $0x28] sm:$0xff]
      %v2319 = vld [vmem:[%s6 + $0x30] sm:$0xff]
      %v2320 = vld [vmem:[%s6 + $0x38] sm:$0xff]
      %v2322 = vsel %vm370, %v2285, 0
      %v2325 = vsel %vm370, %v2286, 0
      %v2328 = vsel %vm370, %v2287, 0
      %v2331 = vsel %vm370, %v2288, 0
      %v2334 = vsel %vm370, %v2289, 0
      %v2337 = vsel %vm370, %v2290, 0
      %v2340 = vsel %vm370, %v2291, 0
      %v2343 = vsel %vm370, %v2292, 0
      %v2346 = vsel %vm370, %v2293, 0
      %v2349 = vsel %vm370, %v2294, 0
      %v2352 = vsel %vm370, %v2295, 0
      %v2355 = vsel %vm370, %v2296, 0
      %v2358 = vsel %vm370, %v2297, 0
      %v2361 = vsel %vm370, %v2298, 0
      %v2364 = vsel %vm370, %v2299, 0
      %v2367 = vsel %vm370, %v2300, 0
      %v2370 = vsel %vm370, %v2301, 0
      %v2373 = vsel %vm370, %v2302, 0
      %v2376 = vsel %vm370, %v2303, 0
      %v2379 = vsel %vm370, %v2304, 0
      %v2382 = vsel %vm370, %v2305, 0
      %v2385 = vsel %vm370, %v2306, 0
      %v2388 = vsel %vm370, %v2307, 0
      %v2391 = vsel %vm370, %v2308, 0
      %v2394 = vsel %vm370, %v2309, 0
      %v2397 = vsel %vm370, %v2310, 0
      %v2400 = vsel %vm370, %v2311, 0
      %v2403 = vsel %vm370, %v2312, 0
      %v2406 = vsel %vm370, %v2313, 0
      %v2409 = vsel %vm370, %v2314, 0
      %v2412 = vsel %vm370, %v2315, 0
      %v2415 = vsel %vm370, %v2316, 0
      %2417 = vmatprep.subr.mxu0 0.0
      %2418 = vmatpush1.msra.mxu0 0.0
      %2419 = vmatprep.subr.mxu0 0.0
      %2420 = vmatpush1.msra.mxu0 0.0
      %2421 = vmatprep.subr.mxu0 0.0
      %2422 = vmatpush1.msra.mxu0 0.0
      %2423 = vmatprep.subr.mxu0 0.0
      %2424 = vmatpush1.msra.mxu0 0.0
      %2425 = vmatprep.subr.mxu0 0.0
      %2426 = vmatpush1.msra.mxu0 0.0
      %2427 = vmatprep.subr.mxu0 0.0
      %2428 = vmatpush1.msra.mxu0 0.0
      %2429 = vmatprep.subr.mxu0 0.0
      %2430 = vmatpush1.msra.mxu0 0.0
      %2431 = vmatprep.subr.mxu0 0.0
      %2432 = vmatpush1.msra.mxu0 0.0
      %2433 = vmatprep.subr.mxu0 0.0
      %2434 = vmatpush1.msra.mxu0 0.0
      %2435 = vmatprep.subr.mxu0 0.0
      %2436 = vmatpush1.msra.mxu0 0.0
      %2437 = vmatprep.subr.mxu0 0.0
      %2438 = vmatpush1.msra.mxu0 0.0
      %2439 = vmatprep.subr.mxu0 0.0
      %2440 = vmatpush1.msra.mxu0 0.0
      %2441 = vmatprep.subr.mxu0 0.0
      %2442 = vmatpush1.msra.mxu0 %v2320
      %2443 = vmatprep.subr.mxu0 0.0
      %2444 = vmatpush1.msra.mxu0 %v2319
      %2445 = vmatprep.subr.mxu0 0.0
      %2446 = vmatpush1.msra.mxu0 %v2318
      %2447 = vmatprep.subr.mxu0 0.0
      %2448 = vmatpush1.msra.mxu0 %v2317
      %2449 = vmatprep.subr.mxu0 0.0
      %2450 = vmatpush2.msra.mxu0 0.0
      %2451 = vmatprep.subr.mxu0 0.0
      %2452 = vmatpush2.msra.mxu0 0.0
      %2453 = vmatprep.subr.mxu0 0.0
      %2454 = vmatpush2.msra.mxu0 0.0
      %2455 = vmatprep.subr.mxu0 0.0
      %2456 = vmatpush2.msra.mxu0 0.0
      %2457 = vmatprep.subr.mxu0 0.0
      %2458 = vmatpush2.msra.mxu0 0.0
      %2459 = vmatprep.subr.mxu0 0.0
      %2460 = vmatpush2.msra.mxu0 0.0
      %2461 = vmatprep.subr.mxu0 0.0
      %2462 = vmatpush2.msra.mxu0 0.0
      %2463 = vmatprep.subr.mxu0 0.0
      %2464 = vmatpush2.msra.mxu0 0.0
      %2465 = vmatprep.subr.mxu0 0.0
      %2466 = vmatpush2.msra.mxu0 0.0
      %2467 = vmatprep.subr.mxu0 0.0
      %2468 = vmatpush2.msra.mxu0 0.0
      %2469 = vmatprep.subr.mxu0 0.0
      %2470 = vmatpush2.msra.mxu0 0.0
      %2471 = vmatprep.subr.mxu0 0.0
      %2472 = vmatpush2.msra.mxu0 0.0
      %2473 = vmatprep.subr.mxu0 0.0
      %2474 = vmatpush2.msra.mxu0 0.0
      %2475 = vmatprep.subr.mxu0 0.0
      %2476 = vmatpush2.msra.mxu0 0.0
      %2477 = vmatprep.subr.mxu0 0.0
      %2478 = vmatpush2.msra.mxu0 0.0
      %2479 = vmatprep.subr.mxu0 0.0
      %2480 = vmatpush2.msra.mxu0 0.0
      %2481 = vmatprep.mubr.f32.mxu0 0.0
      %2482 = vmatmul.mubr.f32.gmra.mxu0 %v2322
      %v2483 = vpop.f32.mrf.mxu0
      %v2484 = vadd.f32 0.0, %v2483
      %v2485 = vpop.f32.mrf.mxu0
      %2486 = vmatprep.mubr.f32.mxu0 0.0
      %2487 = vmatmul.mubr.f32.gmra.mxu0 %v2325
      %v2488 = vpop.f32.mrf.mxu0
      %v2489 = vadd.f32 0.0, %v2488
      %v2490 = vpop.f32.mrf.mxu0
      %2491 = vmatprep.mubr.f32.mxu0 0.0
      %2492 = vmatmul.mubr.f32.gmra.mxu0 %v2328
      %v2493 = vpop.f32.mrf.mxu0
      %v2494 = vadd.f32 0.0, %v2493
      %v2495 = vpop.f32.mrf.mxu0
      %2496 = vmatprep.mubr.f32.mxu0 0.0
      %2497 = vmatmul.mubr.f32.gmra.mxu0 %v2331
      %v2498 = vpop.f32.mrf.mxu0
      %v2499 = vadd.f32 0.0, %v2498
      %v2500 = vpop.f32.mrf.mxu0
      %2501 = vmatprep.mubr.f32.mxu0 0.0
      %2502 = vmatmul.mubr.f32.gmra.mxu0 %v2334
      %v2503 = vpop.f32.mrf.mxu0
      %v2504 = vadd.f32 0.0, %v2503
      %v2505 = vpop.f32.mrf.mxu0
      %2506 = vmatprep.mubr.f32.mxu0 0.0
      %2507 = vmatmul.mubr.f32.gmra.mxu0 %v2337
      %v2508 = vpop.f32.mrf.mxu0
      %v2509 = vadd.f32 0.0, %v2508
      %v2510 = vpop.f32.mrf.mxu0
      %2511 = vmatprep.mubr.f32.mxu0 0.0
      %2512 = vmatmul.mubr.f32.gmra.mxu0 %v2340
      %v2513 = vpop.f32.mrf.mxu0
      %v2514 = vadd.f32 0.0, %v2513
      %v2515 = vpop.f32.mrf.mxu0
      %2516 = vmatprep.mubr.f32.mxu0 0.0
      %2517 = vmatmul.mubr.f32.gmra.mxu0 %v2343
      %v2518 = vpop.f32.mrf.mxu0
      %v2519 = vadd.f32 0.0, %v2518
      %v2520 = vpop.f32.mrf.mxu0
      %2521 = vmatprep.mubr.f32.mxu0 0.0
      %2522 = vmatmul.mubr.f32.gmra.mxu0 %v2346
      %v2523 = vpop.f32.mrf.mxu0
      %v2524 = vadd.f32 0.0, %v2523
      %v2525 = vpop.f32.mrf.mxu0
      %2526 = vmatprep.mubr.f32.mxu0 0.0
      %2527 = vmatmul.mubr.f32.gmra.mxu0 %v2349
      %v2528 = vpop.f32.mrf.mxu0
      %v2529 = vadd.f32 0.0, %v2528
      %v2530 = vpop.f32.mrf.mxu0
      %2531 = vmatprep.mubr.f32.mxu0 0.0
      %2532 = vmatmul.mubr.f32.gmra.mxu0 %v2352
      %v2533 = vpop.f32.mrf.mxu0
      %v2534 = vadd.f32 0.0, %v2533
      %v2535 = vpop.f32.mrf.mxu0
      %2536 = vmatprep.mubr.f32.mxu0 0.0
      %2537 = vmatmul.mubr.f32.gmra.mxu0 %v2355
      %v2538 = vpop.f32.mrf.mxu0
      %v2539 = vadd.f32 0.0, %v2538
      %v2540 = vpop.f32.mrf.mxu0
      %2541 = vmatprep.mubr.f32.mxu0 0.0
      %2542 = vmatmul.mubr.f32.gmra.mxu0 %v2358
      %v2543 = vpop.f32.mrf.mxu0
      %v2544 = vadd.f32 0.0, %v2543
      %v2545 = vpop.f32.mrf.mxu0
      %2546 = vmatprep.mubr.f32.mxu0 0.0
      %2547 = vmatmul.mubr.f32.gmra.mxu0 %v2361
      %v2548 = vpop.f32.mrf.mxu0
      %v2549 = vadd.f32 0.0, %v2548
      %v2550 = vpop.f32.mrf.mxu0
      %2551 = vmatprep.mubr.f32.mxu0 0.0
      %2552 = vmatmul.mubr.f32.gmra.mxu0 %v2364
      %v2553 = vpop.f32.mrf.mxu0
      %v2554 = vadd.f32 0.0, %v2553
      %v2555 = vpop.f32.mrf.mxu0
      %2556 = vmatprep.mubr.f32.mxu0 0.0
      %2557 = vmatmul.mubr.f32.gmra.mxu0 %v2367
      %v2558 = vpop.f32.mrf.mxu0
      %v2559 = vadd.f32 0.0, %v2558
      %v2560 = vpop.f32.mrf.mxu0
      %2561 = vmatprep.mubr.f32.mxu0 0.0
      %2562 = vmatmul.mubr.f32.gmra.mxu0 %v2370
      %v2563 = vpop.f32.mrf.mxu0
      %v2564 = vadd.f32 0.0, %v2563
      %v2565 = vpop.f32.mrf.mxu0
      %2566 = vmatprep.mubr.f32.mxu0 0.0
      %2567 = vmatmul.mubr.f32.gmra.mxu0 %v2373
      %v2568 = vpop.f32.mrf.mxu0
      %v2569 = vadd.f32 0.0, %v2568
      %v2570 = vpop.f32.mrf.mxu0
      %2571 = vmatprep.mubr.f32.mxu0 0.0
      %2572 = vmatmul.mubr.f32.gmra.mxu0 %v2376
      %v2573 = vpop.f32.mrf.mxu0
      %v2574 = vadd.f32 0.0, %v2573
      %v2575 = vpop.f32.mrf.mxu0
      %2576 = vmatprep.mubr.f32.mxu0 0.0
      %2577 = vmatmul.mubr.f32.gmra.mxu0 %v2379
      %v2578 = vpop.f32.mrf.mxu0
      %v2579 = vadd.f32 0.0, %v2578
      %v2580 = vpop.f32.mrf.mxu0
      %2581 = vmatprep.mubr.f32.mxu0 0.0
      %2582 = vmatmul.mubr.f32.gmra.mxu0 %v2382
      %v2583 = vpop.f32.mrf.mxu0
      %v2584 = vadd.f32 0.0, %v2583
      %v2585 = vpop.f32.mrf.mxu0
      %2586 = vmatprep.mubr.f32.mxu0 0.0
      %2587 = vmatmul.mubr.f32.gmra.mxu0 %v2385
      %v2588 = vpop.f32.mrf.mxu0
      %v2589 = vadd.f32 0.0, %v2588
      %v2590 = vpop.f32.mrf.mxu0
      %2591 = vmatprep.mubr.f32.mxu0 0.0
      %2592 = vmatmul.mubr.f32.gmra.mxu0 %v2388
      %v2593 = vpop.f32.mrf.mxu0
      %v2594 = vadd.f32 0.0, %v2593
      %v2595 = vpop.f32.mrf.mxu0
      %2596 = vmatprep.mubr.f32.mxu0 0.0
      %2597 = vmatmul.mubr.f32.gmra.mxu0 %v2391
      %v2598 = vpop.f32.mrf.mxu0
      %v2599 = vadd.f32 0.0, %v2598
      %v2600 = vpop.f32.mrf.mxu0
      %2601 = vmatprep.mubr.f32.mxu0 0.0
      %2602 = vmatmul.mubr.f32.gmra.mxu0 %v2394
      %v2603 = vpop.f32.mrf.mxu0
      %v2604 = vadd.f32 0.0, %v2603
      %v2605 = vpop.f32.mrf.mxu0
      %2606 = vmatprep.mubr.f32.mxu0 0.0
      %2607 = vmatmul.mubr.f32.gmra.mxu0 %v2397
      %v2608 = vpop.f32.mrf.mxu0
      %v2609 = vadd.f32 0.0, %v2608
      %v2610 = vpop.f32.mrf.mxu0
      %2611 = vmatprep.mubr.f32.mxu0 0.0
      %2612 = vmatmul.mubr.f32.gmra.mxu0 %v2400
      %v2613 = vpop.f32.mrf.mxu0
      %v2614 = vadd.f32 0.0, %v2613
      %v2615 = vpop.f32.mrf.mxu0
      %2616 = vmatprep.mubr.f32.mxu0 0.0
      %2617 = vmatmul.mubr.f32.gmra.mxu0 %v2403
      %v2618 = vpop.f32.mrf.mxu0
      %v2619 = vadd.f32 0.0, %v2618
      %v2620 = vpop.f32.mrf.mxu0
      %2621 = vmatprep.mubr.f32.mxu0 0.0
      %2622 = vmatmul.mubr.f32.gmra.mxu0 %v2406
      %v2623 = vpop.f32.mrf.mxu0
      %v2624 = vadd.f32 0.0, %v2623
      %v2625 = vpop.f32.mrf.mxu0
      %2626 = vmatprep.mubr.f32.mxu0 0.0
      %2627 = vmatmul.mubr.f32.gmra.mxu0 %v2409
      %v2628 = vpop.f32.mrf.mxu0
      %v2629 = vadd.f32 0.0, %v2628
      %v2630 = vpop.f32.mrf.mxu0
      %2631 = vmatprep.mubr.f32.mxu0 0.0
      %2632 = vmatmul.mubr.f32.gmra.mxu0 %v2412
      %v2633 = vpop.f32.mrf.mxu0
      %v2634 = vadd.f32 0.0, %v2633
      %v2635 = vpop.f32.mrf.mxu0
      %2636 = vmatprep.mubr.f32.mxu0 0.0
      %2637 = vmatmul.mubr.f32.gmra.mxu0 %v2415
      %v2638 = vpop.f32.mrf.mxu0
      %v2639 = vadd.f32 0.0, %v2638
      %v2640 = vpop.f32.mrf.mxu0
      %2641 = vdwg.mxu0
      %v2643 = vsel %vm370, %v2249, 0
      %v2646 = vsel %vm370, %v2250, 0
      %v2649 = vsel %vm370, %v2251, 0
      %v2652 = vsel %vm370, %v2252, 0
      %v2655 = vsel %vm370, %v2253, 0
      %v2658 = vsel %vm370, %v2254, 0
      %v2661 = vsel %vm370, %v2255, 0
      %v2664 = vsel %vm370, %v2256, 0
      %v2667 = vsel %vm370, %v2257, 0
      %v2670 = vsel %vm370, %v2258, 0
      %v2673 = vsel %vm370, %v2259, 0
      %v2676 = vsel %vm370, %v2260, 0
      %v2679 = vsel %vm370, %v2261, 0
      %v2682 = vsel %vm370, %v2262, 0
      %v2685 = vsel %vm370, %v2263, 0
      %v2688 = vsel %vm370, %v2264, 0
      %v2691 = vsel %vm370, %v2265, 0
      %v2694 = vsel %vm370, %v2266, 0
      %v2697 = vsel %vm370, %v2267, 0
      %v2700 = vsel %vm370, %v2268, 0
      %v2703 = vsel %vm370, %v2269, 0
      %v2706 = vsel %vm370, %v2270, 0
      %v2709 = vsel %vm370, %v2271, 0
      %v2712 = vsel %vm370, %v2272, 0
      %v2715 = vsel %vm370, %v2273, 0
      %v2718 = vsel %vm370, %v2274, 0
      %v2721 = vsel %vm370, %v2275, 0
      %v2724 = vsel %vm370, %v2276, 0
      %v2727 = vsel %vm370, %v2277, 0
      %v2730 = vsel %vm370, %v2278, 0
      %v2733 = vsel %vm370, %v2279, 0
      %v2736 = vsel %vm370, %v2280, 0
      %2738 = vmatprep.subr.mxu0 0.0
      %2739 = vmatpush1.msra.mxu0 0.0
      %2740 = vmatprep.subr.mxu0 0.0
      %2741 = vmatpush1.msra.mxu0 0.0
      %2742 = vmatprep.subr.mxu0 0.0
      %2743 = vmatpush1.msra.mxu0 0.0
      %2744 = vmatprep.subr.mxu0 0.0
      %2745 = vmatpush1.msra.mxu0 0.0
      %2746 = vmatprep.subr.mxu0 0.0
      %2747 = vmatpush1.msra.mxu0 0.0
      %2748 = vmatprep.subr.mxu0 0.0
      %2749 = vmatpush1.msra.mxu0 0.0
      %2750 = vmatprep.subr.mxu0 0.0
      %2751 = vmatpush1.msra.mxu0 0.0
      %2752 = vmatprep.subr.mxu0 0.0
      %2753 = vmatpush1.msra.mxu0 0.0
      %2754 = vmatprep.subr.mxu0 0.0
      %2755 = vmatpush1.msra.mxu0 0.0
      %2756 = vmatprep.subr.mxu0 0.0
      %2757 = vmatpush1.msra.mxu0 0.0
      %2758 = vmatprep.subr.mxu0 0.0
      %2759 = vmatpush1.msra.mxu0 0.0
      %2760 = vmatprep.subr.mxu0 0.0
      %2761 = vmatpush1.msra.mxu0 0.0
      %2762 = vmatprep.subr.mxu0 0.0
      %2763 = vmatpush1.msra.mxu0 %v2284
      %2764 = vmatprep.subr.mxu0 0.0
      %2765 = vmatpush1.msra.mxu0 %v2283
      %2766 = vmatprep.subr.mxu0 0.0
      %2767 = vmatpush1.msra.mxu0 %v2282
      %2768 = vmatprep.subr.mxu0 0.0
      %2769 = vmatpush1.msra.mxu0 %v2281
      %2770 = vmatprep.subr.mxu0 0.0
      %2771 = vmatpush2.msra.mxu0 0.0
      %2772 = vmatprep.subr.mxu0 0.0
      %2773 = vmatpush2.msra.mxu0 0.0
      %2774 = vmatprep.subr.mxu0 0.0
      %2775 = vmatpush2.msra.mxu0 0.0
      %2776 = vmatprep.subr.mxu0 0.0
      %2777 = vmatpush2.msra.mxu0 0.0
      %2778 = vmatprep.subr.mxu0 0.0
      %2779 = vmatpush2.msra.mxu0 0.0
      %2780 = vmatprep.subr.mxu0 0.0
      %2781 = vmatpush2.msra.mxu0 0.0
      %2782 = vmatprep.subr.mxu0 0.0
      %2783 = vmatpush2.msra.mxu0 0.0
      %2784 = vmatprep.subr.mxu0 0.0
      %2785 = vmatpush2.msra.mxu0 0.0
      %2786 = vmatprep.subr.mxu0 0.0
      %2787 = vmatpush2.msra.mxu0 0.0
      %2788 = vmatprep.subr.mxu0 0.0
      %2789 = vmatpush2.msra.mxu0 0.0
      %2790 = vmatprep.subr.mxu0 0.0
      %2791 = vmatpush2.msra.mxu0 0.0
      %2792 = vmatprep.subr.mxu0 0.0
      %2793 = vmatpush2.msra.mxu0 0.0
      %2794 = vmatprep.subr.mxu0 0.0
      %2795 = vmatpush2.msra.mxu0 0.0
      %2796 = vmatprep.subr.mxu0 0.0
      %2797 = vmatpush2.msra.mxu0 0.0
      %2798 = vmatprep.subr.mxu0 0.0
      %2799 = vmatpush2.msra.mxu0 0.0
      %2800 = vmatprep.subr.mxu0 0.0
      %2801 = vmatpush2.msra.mxu0 0.0
      %2802 = vmatprep.mubr.f32.mxu0 0.0
      %2803 = vmatmul.mubr.f32.gmra.mxu0 %v2643
      %v2804 = vpop.f32.mrf.mxu0
      %v2805 = vadd.f32 %v2484, %v2804
      %v2806 = vpop.f32.mrf.mxu0
      %2807 = vmatprep.mubr.f32.mxu0 0.0
      %2808 = vmatmul.mubr.f32.gmra.mxu0 %v2646
      %v2809 = vpop.f32.mrf.mxu0
      %v2810 = vadd.f32 %v2489, %v2809
      %v2811 = vpop.f32.mrf.mxu0
      %2812 = vmatprep.mubr.f32.mxu0 0.0
      %2813 = vmatmul.mubr.f32.gmra.mxu0 %v2649
      %v2814 = vpop.f32.mrf.mxu0
      %v2815 = vadd.f32 %v2494, %v2814
      %v2816 = vpop.f32.mrf.mxu0
      %2817 = vmatprep.mubr.f32.mxu0 0.0
      %2818 = vmatmul.mubr.f32.gmra.mxu0 %v2652
      %v2819 = vpop.f32.mrf.mxu0
      %v2820 = vadd.f32 %v2499, %v2819
      %v2821 = vpop.f32.mrf.mxu0
      %2822 = vmatprep.mubr.f32.mxu0 0.0
      %2823 = vmatmul.mubr.f32.gmra.mxu0 %v2655
      %v2824 = vpop.f32.mrf.mxu0
      %v2825 = vadd.f32 %v2504, %v2824
      %v2826 = vpop.f32.mrf.mxu0
      %2827 = vmatprep.mubr.f32.mxu0 0.0
      %2828 = vmatmul.mubr.f32.gmra.mxu0 %v2658
      %v2829 = vpop.f32.mrf.mxu0
      %v2830 = vadd.f32 %v2509, %v2829
      %v2831 = vpop.f32.mrf.mxu0
      %2832 = vmatprep.mubr.f32.mxu0 0.0
      %2833 = vmatmul.mubr.f32.gmra.mxu0 %v2661
      %v2834 = vpop.f32.mrf.mxu0
      %v2835 = vadd.f32 %v2514, %v2834
      %v2836 = vpop.f32.mrf.mxu0
      %2837 = vmatprep.mubr.f32.mxu0 0.0
      %2838 = vmatmul.mubr.f32.gmra.mxu0 %v2664
      %v2839 = vpop.f32.mrf.mxu0
      %v2840 = vadd.f32 %v2519, %v2839
      %v2841 = vpop.f32.mrf.mxu0
      %2842 = vmatprep.mubr.f32.mxu0 0.0
      %2843 = vmatmul.mubr.f32.gmra.mxu0 %v2667
      %v2844 = vpop.f32.mrf.mxu0
      %v2845 = vadd.f32 %v2524, %v2844
      %v2846 = vpop.f32.mrf.mxu0
      %2847 = vmatprep.mubr.f32.mxu0 0.0
      %2848 = vmatmul.mubr.f32.gmra.mxu0 %v2670
      %v2849 = vpop.f32.mrf.mxu0
      %v2850 = vadd.f32 %v2529, %v2849
      %v2851 = vpop.f32.mrf.mxu0
      %2852 = vmatprep.mubr.f32.mxu0 0.0
      %2853 = vmatmul.mubr.f32.gmra.mxu0 %v2673
      %v2854 = vpop.f32.mrf.mxu0
      %v2855 = vadd.f32 %v2534, %v2854
      %v2856 = vpop.f32.mrf.mxu0
      %2857 = vmatprep.mubr.f32.mxu0 0.0
      %2858 = vmatmul.mubr.f32.gmra.mxu0 %v2676
      %v2859 = vpop.f32.mrf.mxu0
      %v2860 = vadd.f32 %v2539, %v2859
      %v2861 = vpop.f32.mrf.mxu0
      %2862 = vmatprep.mubr.f32.mxu0 0.0
      %2863 = vmatmul.mubr.f32.gmra.mxu0 %v2679
      %v2864 = vpop.f32.mrf.mxu0
      %v2865 = vadd.f32 %v2544, %v2864
      %v2866 = vpop.f32.mrf.mxu0
      %2867 = vmatprep.mubr.f32.mxu0 0.0
      %2868 = vmatmul.mubr.f32.gmra.mxu0 %v2682
      %v2869 = vpop.f32.mrf.mxu0
      %v2870 = vadd.f32 %v2549, %v2869
      %v2871 = vpop.f32.mrf.mxu0
      %2872 = vmatprep.mubr.f32.mxu0 0.0
      %2873 = vmatmul.mubr.f32.gmra.mxu0 %v2685
      %v2874 = vpop.f32.mrf.mxu0
      %v2875 = vadd.f32 %v2554, %v2874
      %v2876 = vpop.f32.mrf.mxu0
      %2877 = vmatprep.mubr.f32.mxu0 0.0
      %2878 = vmatmul.mubr.f32.gmra.mxu0 %v2688
      %v2879 = vpop.f32.mrf.mxu0
      %v2880 = vadd.f32 %v2559, %v2879
      %v2881 = vpop.f32.mrf.mxu0
      %2882 = vmatprep.mubr.f32.mxu0 0.0
      %2883 = vmatmul.mubr.f32.gmra.mxu0 %v2691
      %v2884 = vpop.f32.mrf.mxu0
      %v2885 = vadd.f32 %v2564, %v2884
      %v2886 = vpop.f32.mrf.mxu0
      %2887 = vmatprep.mubr.f32.mxu0 0.0
      %2888 = vmatmul.mubr.f32.gmra.mxu0 %v2694
      %v2889 = vpop.f32.mrf.mxu0
      %v2890 = vadd.f32 %v2569, %v2889
      %v2891 = vpop.f32.mrf.mxu0
      %2892 = vmatprep.mubr.f32.mxu0 0.0
      %2893 = vmatmul.mubr.f32.gmra.mxu0 %v2697
      %v2894 = vpop.f32.mrf.mxu0
      %v2895 = vadd.f32 %v2574, %v2894
      %v2896 = vpop.f32.mrf.mxu0
      %2897 = vmatprep.mubr.f32.mxu0 0.0
      %2898 = vmatmul.mubr.f32.gmra.mxu0 %v2700
      %v2899 = vpop.f32.mrf.mxu0
      %v2900 = vadd.f32 %v2579, %v2899
      %v2901 = vpop.f32.mrf.mxu0
      %2902 = vmatprep.mubr.f32.mxu0 0.0
      %2903 = vmatmul.mubr.f32.gmra.mxu0 %v2703
      %v2904 = vpop.f32.mrf.mxu0
      %v2905 = vadd.f32 %v2584, %v2904
      %v2906 = vpop.f32.mrf.mxu0
      %2907 = vmatprep.mubr.f32.mxu0 0.0
      %2908 = vmatmul.mubr.f32.gmra.mxu0 %v2706
      %v2909 = vpop.f32.mrf.mxu0
      %v2910 = vadd.f32 %v2589, %v2909
      %v2911 = vpop.f32.mrf.mxu0
      %2912 = vmatprep.mubr.f32.mxu0 0.0
      %2913 = vmatmul.mubr.f32.gmra.mxu0 %v2709
      %v2914 = vpop.f32.mrf.mxu0
      %v2915 = vadd.f32 %v2594, %v2914
      %v2916 = vpop.f32.mrf.mxu0
      %2917 = vmatprep.mubr.f32.mxu0 0.0
      %2918 = vmatmul.mubr.f32.gmra.mxu0 %v2712
      %v2919 = vpop.f32.mrf.mxu0
      %v2920 = vadd.f32 %v2599, %v2919
      %v2921 = vpop.f32.mrf.mxu0
      %2922 = vmatprep.mubr.f32.mxu0 0.0
      %2923 = vmatmul.mubr.f32.gmra.mxu0 %v2715
      %v2924 = vpop.f32.mrf.mxu0
      %v2925 = vadd.f32 %v2604, %v2924
      %v2926 = vpop.f32.mrf.mxu0
      %2927 = vmatprep.mubr.f32.mxu0 0.0
      %2928 = vmatmul.mubr.f32.gmra.mxu0 %v2718
      %v2929 = vpop.f32.mrf.mxu0
      %v2930 = vadd.f32 %v2609, %v2929
      %v2931 = vpop.f32.mrf.mxu0
      %2932 = vmatprep.mubr.f32.mxu0 0.0
      %2933 = vmatmul.mubr.f32.gmra.mxu0 %v2721
      %v2934 = vpop.f32.mrf.mxu0
      %v2935 = vadd.f32 %v2614, %v2934
      %v2936 = vpop.f32.mrf.mxu0
      %2937 = vmatprep.mubr.f32.mxu0 0.0
      %2938 = vmatmul.mubr.f32.gmra.mxu0 %v2724
      %v2939 = vpop.f32.mrf.mxu0
      %v2940 = vadd.f32 %v2619, %v2939
      %v2941 = vpop.f32.mrf.mxu0
      %2942 = vmatprep.mubr.f32.mxu0 0.0
      %2943 = vmatmul.mubr.f32.gmra.mxu0 %v2727
      %v2944 = vpop.f32.mrf.mxu0
      %v2945 = vadd.f32 %v2624, %v2944
      %v2946 = vpop.f32.mrf.mxu0
      %2947 = vmatprep.mubr.f32.mxu0 0.0
      %2948 = vmatmul.mubr.f32.gmra.mxu0 %v2730
      %v2949 = vpop.f32.mrf.mxu0
      %v2950 = vadd.f32 %v2629, %v2949
      %v2951 = vpop.f32.mrf.mxu0
      %2952 = vmatprep.mubr.f32.mxu0 0.0
      %2953 = vmatmul.mubr.f32.gmra.mxu0 %v2733
      %v2954 = vpop.f32.mrf.mxu0
      %v2955 = vadd.f32 %v2634, %v2954
      %v2956 = vpop.f32.mrf.mxu0
      %2957 = vmatprep.mubr.f32.mxu0 0.0
      %2958 = vmatmul.mubr.f32.gmra.mxu0 %v2736
      %v2959 = vpop.f32.mrf.mxu0
      %v2960 = vadd.f32 %v2639, %v2959
      %v2961 = vpop.f32.mrf.mxu0
      %2962 = vdwg.mxu0
      %v2963 = vld [vmem:[#allocation2 + $0x9] sm:$0xff]
      %v2964 = vld [vmem:[#allocation2 + $0x11] sm:$0xff]
      %v2965 = vld [vmem:[#allocation2 + $0x19] sm:$0xff]
      %v2966 = vld [vmem:[#allocation2 + $0x21] sm:$0xff]
      %v2967 = vld [vmem:[#allocation2 + $0x29] sm:$0xff]
      %v2968 = vld [vmem:[#allocation2 + $0x31] sm:$0xff]
      %v2969 = vld [vmem:[#allocation2 + $0x39] sm:$0xff]
      %v2970 = vld [vmem:[#allocation2 + $0x41] sm:$0xff]
      %v2971 = vld [vmem:[#allocation2 + $0x49] sm:$0xff]
      %v2972 = vld [vmem:[#allocation2 + $0x51] sm:$0xff]
      %v2973 = vld [vmem:[#allocation2 + $0x59] sm:$0xff]
      %v2974 = vld [vmem:[#allocation2 + $0x61] sm:$0xff]
      %v2975 = vld [vmem:[#allocation2 + $0x69] sm:$0xff]
      %v2976 = vld [vmem:[#allocation2 + $0x71] sm:$0xff]
      %v2977 = vld [vmem:[#allocation2 + $0x79] sm:$0xff]
      %v2978 = vld [vmem:[#allocation2 + $0x81] sm:$0xff]
      %v2979 = vld [vmem:[#allocation2 + $0x89] sm:$0xff]
      %v2980 = vld [vmem:[#allocation2 + $0x91] sm:$0xff]
      %v2981 = vld [vmem:[#allocation2 + $0x99] sm:$0xff]
      %v2982 = vld [vmem:[#allocation2 + $0xa1] sm:$0xff]
      %v2983 = vld [vmem:[#allocation2 + $0xa9] sm:$0xff]
      %v2984 = vld [vmem:[#allocation2 + $0xb1] sm:$0xff]
      %v2985 = vld [vmem:[#allocation2 + $0xb9] sm:$0xff]
      %v2986 = vld [vmem:[#allocation2 + $0xc1] sm:$0xff]
      %v2987 = vld [vmem:[#allocation2 + $0xc9] sm:$0xff]
      %v2988 = vld [vmem:[#allocation2 + $0xd1] sm:$0xff]
      %v2989 = vld [vmem:[#allocation2 + $0xd9] sm:$0xff]
      %v2990 = vld [vmem:[#allocation2 + $0xe1] sm:$0xff]
      %v2991 = vld [vmem:[#allocation2 + $0xe9] sm:$0xff]
      %v2992 = vld [vmem:[#allocation2 + $0xf1] sm:$0xff]
      %v2993 = vld [vmem:[#allocation2 + $0xf9] sm:$0xff]
      %v2994 = vld [vmem:[#allocation2 + $0x101] sm:$0xff]
      %v2995 = vsel %vm2121, 1, 0
      %v2996 = vsel %vm2122, 1, 0
      %v2997 = vsel %vm2123, 1, 0
      %v2998 = vsel %vm2124, 1, 0
      %v2999 = vsel %vm2125, 1, 0
      %v3000 = vsel %vm2126, 1, 0
      %v3001 = vsel %vm2127, 1, 0
      %v3002 = vsel %vm2128, 1, 0
      %v3003 = vsel %vm2129, 1, 0
      %v3004 = vsel %vm2130, 1, 0
      %v3005 = vsel %vm2131, 1, 0
      %v3006 = vsel %vm2132, 1, 0
      %v3007 = vsel %vm2133, 1, 0
      %v3008 = vsel %vm2134, 1, 0
      %v3009 = vsel %vm2135, 1, 0
      %v3010 = vsel %vm2136, 1, 0
      %v3011 = vsel %vm2137, 1, 0
      %v3012 = vsel %vm2138, 1, 0
      %v3013 = vsel %vm2139, 1, 0
      %v3014 = vsel %vm2140, 1, 0
      %v3015 = vsel %vm2141, 1, 0
      %v3016 = vsel %vm2142, 1, 0
      %v3017 = vsel %vm2143, 1, 0
      %v3018 = vsel %vm2144, 1, 0
      %v3019 = vsel %vm2145, 1, 0
      %v3020 = vsel %vm2146, 1, 0
      %v3021 = vsel %vm2147, 1, 0
      %v3022 = vsel %vm2148, 1, 0
      %v3023 = vsel %vm2149, 1, 0
      %v3024 = vsel %vm2150, 1, 0
      %v3025 = vsel %vm2151, 1, 0
      %v3026 = vsel %vm2152, 1, 0
      %vm3027 = vcmp.eq.s32.totalorder %v2995, 1
      %vm3028 = vcmp.eq.s32.totalorder %v2996, 1
      %vm3029 = vcmp.eq.s32.totalorder %v2997, 1
      %vm3030 = vcmp.eq.s32.totalorder %v2998, 1
      %vm3031 = vcmp.eq.s32.totalorder %v2999, 1
      %vm3032 = vcmp.eq.s32.totalorder %v3000, 1
      %vm3033 = vcmp.eq.s32.totalorder %v3001, 1
      %vm3034 = vcmp.eq.s32.totalorder %v3002, 1
      %vm3035 = vcmp.eq.s32.totalorder %v3003, 1
      %vm3036 = vcmp.eq.s32.totalorder %v3004, 1
      %vm3037 = vcmp.eq.s32.totalorder %v3005, 1
      %vm3038 = vcmp.eq.s32.totalorder %v3006, 1
      %vm3039 = vcmp.eq.s32.totalorder %v3007, 1
      %vm3040 = vcmp.eq.s32.totalorder %v3008, 1
      %vm3041 = vcmp.eq.s32.totalorder %v3009, 1
      %vm3042 = vcmp.eq.s32.totalorder %v3010, 1
      %vm3043 = vcmp.eq.s32.totalorder %v3011, 1
      %vm3044 = vcmp.eq.s32.totalorder %v3012, 1
      %vm3045 = vcmp.eq.s32.totalorder %v3013, 1
      %vm3046 = vcmp.eq.s32.totalorder %v3014, 1
      %vm3047 = vcmp.eq.s32.totalorder %v3015, 1
      %vm3048 = vcmp.eq.s32.totalorder %v3016, 1
      %vm3049 = vcmp.eq.s32.totalorder %v3017, 1
      %vm3050 = vcmp.eq.s32.totalorder %v3018, 1
      %vm3051 = vcmp.eq.s32.totalorder %v3019, 1
      %vm3052 = vcmp.eq.s32.totalorder %v3020, 1
      %vm3053 = vcmp.eq.s32.totalorder %v3021, 1
      %vm3054 = vcmp.eq.s32.totalorder %v3022, 1
      %vm3055 = vcmp.eq.s32.totalorder %v3023, 1
      %vm3056 = vcmp.eq.s32.totalorder %v3024, 1
      %vm3057 = vcmp.eq.s32.totalorder %v3025, 1
      %vm3058 = vcmp.eq.s32.totalorder %v3026, 1
      %v3059 = vsel %vm3027, %v2963, 0.0
      %v3060 = vsel %vm3028, %v2964, 0.0
      %v3061 = vsel %vm3029, %v2965, 0.0
      %v3062 = vsel %vm3030, %v2966, 0.0
      %v3063 = vsel %vm3031, %v2967, 0.0
      %v3064 = vsel %vm3032, %v2968, 0.0
      %v3065 = vsel %vm3033, %v2969, 0.0
      %v3066 = vsel %vm3034, %v2970, 0.0
      %v3067 = vsel %vm3035, %v2971, 0.0
      %v3068 = vsel %vm3036, %v2972, 0.0
      %v3069 = vsel %vm3037, %v2973, 0.0
      %v3070 = vsel %vm3038, %v2974, 0.0
      %v3071 = vsel %vm3039, %v2975, 0.0
      %v3072 = vsel %vm3040, %v2976, 0.0
      %v3073 = vsel %vm3041, %v2977, 0.0
      %v3074 = vsel %vm3042, %v2978, 0.0
      %v3075 = vsel %vm3043, %v2979, 0.0
      %v3076 = vsel %vm3044, %v2980, 0.0
      %v3077 = vsel %vm3045, %v2981, 0.0
      %v3078 = vsel %vm3046, %v2982, 0.0
      %v3079 = vsel %vm3047, %v2983, 0.0
      %v3080 = vsel %vm3048, %v2984, 0.0
      %v3081 = vsel %vm3049, %v2985, 0.0
      %v3082 = vsel %vm3050, %v2986, 0.0
      %v3083 = vsel %vm3051, %v2987, 0.0
      %v3084 = vsel %vm3052, %v2988, 0.0
      %v3085 = vsel %vm3053, %v2989, 0.0
      %v3086 = vsel %vm3054, %v2990, 0.0
      %v3087 = vsel %vm3055, %v2991, 0.0
      %v3088 = vsel %vm3056, %v2992, 0.0
      %v3089 = vsel %vm3057, %v2993, 0.0
      %v3090 = vsel %vm3058, %v2994, 0.0
      %v3091 = vld [vmem:[%s6 + $0x40] sm:$0xff]
      %v3092 = vld [vmem:[%s6 + $0x48] sm:$0xff]
      %v3093 = vld [vmem:[%s6 + $0x50] sm:$0xff]
      %v3094 = vld [vmem:[%s6 + $0x58] sm:$0xff]
      %v3096 = vsel %vm370, %v3059, 0
      %v3099 = vsel %vm370, %v3060, 0
      %v3102 = vsel %vm370, %v3061, 0
      %v3105 = vsel %vm370, %v3062, 0
      %v3108 = vsel %vm370, %v3063, 0
      %v3111 = vsel %vm370, %v3064, 0
      %v3114 = vsel %vm370, %v3065, 0
      %v3117 = vsel %vm370, %v3066, 0
      %v3120 = vsel %vm370, %v3067, 0
      %v3123 = vsel %vm370, %v3068, 0
      %v3126 = vsel %vm370, %v3069, 0
      %v3129 = vsel %vm370, %v3070, 0
      %v3132 = vsel %vm370, %v3071, 0
      %v3135 = vsel %vm370, %v3072, 0
      %v3138 = vsel %vm370, %v3073, 0
      %v3141 = vsel %vm370, %v3074, 0
      %v3144 = vsel %vm370, %v3075, 0
      %v3147 = vsel %vm370, %v3076, 0
      %v3150 = vsel %vm370, %v3077, 0
      %v3153 = vsel %vm370, %v3078, 0
      %v3156 = vsel %vm370, %v3079, 0
      %v3159 = vsel %vm370, %v3080, 0
      %v3162 = vsel %vm370, %v3081, 0
      %v3165 = vsel %vm370, %v3082, 0
      %v3168 = vsel %vm370, %v3083, 0
      %v3171 = vsel %vm370, %v3084, 0
      %v3174 = vsel %vm370, %v3085, 0
      %v3177 = vsel %vm370, %v3086, 0
      %v3180 = vsel %vm370, %v3087, 0
      %v3183 = vsel %vm370, %v3088, 0
      %v3186 = vsel %vm370, %v3089, 0
      %v3189 = vsel %vm370, %v3090, 0
      %3191 = vmatprep.subr.mxu0 0.0
      %3192 = vmatpush1.msra.mxu0 0.0
      %3193 = vmatprep.subr.mxu0 0.0
      %3194 = vmatpush1.msra.mxu0 0.0
      %3195 = vmatprep.subr.mxu0 0.0
      %3196 = vmatpush1.msra.mxu0 0.0
      %3197 = vmatprep.subr.mxu0 0.0
      %3198 = vmatpush1.msra.mxu0 0.0
      %3199 = vmatprep.subr.mxu0 0.0
      %3200 = vmatpush1.msra.mxu0 0.0
      %3201 = vmatprep.subr.mxu0 0.0
      %3202 = vmatpush1.msra.mxu0 0.0
      %3203 = vmatprep.subr.mxu0 0.0
      %3204 = vmatpush1.msra.mxu0 0.0
      %3205 = vmatprep.subr.mxu0 0.0
      %3206 = vmatpush1.msra.mxu0 0.0
      %3207 = vmatprep.subr.mxu0 0.0
      %3208 = vmatpush1.msra.mxu0 0.0
      %3209 = vmatprep.subr.mxu0 0.0
      %3210 = vmatpush1.msra.mxu0 0.0
      %3211 = vmatprep.subr.mxu0 0.0
      %3212 = vmatpush1.msra.mxu0 0.0
      %3213 = vmatprep.subr.mxu0 0.0
      %3214 = vmatpush1.msra.mxu0 0.0
      %3215 = vmatprep.subr.mxu0 0.0
      %3216 = vmatpush1.msra.mxu0 %v3094
      %3217 = vmatprep.subr.mxu0 0.0
      %3218 = vmatpush1.msra.mxu0 %v3093
      %3219 = vmatprep.subr.mxu0 0.0
      %3220 = vmatpush1.msra.mxu0 %v3092
      %3221 = vmatprep.subr.mxu0 0.0
      %3222 = vmatpush1.msra.mxu0 %v3091
      %3223 = vmatprep.subr.mxu0 0.0
      %3224 = vmatpush2.msra.mxu0 0.0
      %3225 = vmatprep.subr.mxu0 0.0
      %3226 = vmatpush2.msra.mxu0 0.0
      %3227 = vmatprep.subr.mxu0 0.0
      %3228 = vmatpush2.msra.mxu0 0.0
      %3229 = vmatprep.subr.mxu0 0.0
      %3230 = vmatpush2.msra.mxu0 0.0
      %3231 = vmatprep.subr.mxu0 0.0
      %3232 = vmatpush2.msra.mxu0 0.0
      %3233 = vmatprep.subr.mxu0 0.0
      %3234 = vmatpush2.msra.mxu0 0.0
      %3235 = vmatprep.subr.mxu0 0.0
      %3236 = vmatpush2.msra.mxu0 0.0
      %3237 = vmatprep.subr.mxu0 0.0
      %3238 = vmatpush2.msra.mxu0 0.0
      %3239 = vmatprep.subr.mxu0 0.0
      %3240 = vmatpush2.msra.mxu0 0.0
      %3241 = vmatprep.subr.mxu0 0.0
      %3242 = vmatpush2.msra.mxu0 0.0
      %3243 = vmatprep.subr.mxu0 0.0
      %3244 = vmatpush2.msra.mxu0 0.0
      %3245 = vmatprep.subr.mxu0 0.0
      %3246 = vmatpush2.msra.mxu0 0.0
      %3247 = vmatprep.subr.mxu0 0.0
      %3248 = vmatpush2.msra.mxu0 0.0
      %3249 = vmatprep.subr.mxu0 0.0
      %3250 = vmatpush2.msra.mxu0 0.0
      %3251 = vmatprep.subr.mxu0 0.0
      %3252 = vmatpush2.msra.mxu0 0.0
      %3253 = vmatprep.subr.mxu0 0.0
      %3254 = vmatpush2.msra.mxu0 0.0
      %3255 = vmatprep.mubr.f32.mxu0 0.0
      %3256 = vmatmul.mubr.f32.gmra.mxu0 %v3096
      %v3257 = vpop.f32.mrf.mxu0
      %v3258 = vadd.f32 0.0, %v3257
      %v3259 = vpop.f32.mrf.mxu0
      %3260 = vmatprep.mubr.f32.mxu0 0.0
      %3261 = vmatmul.mubr.f32.gmra.mxu0 %v3099
      %v3262 = vpop.f32.mrf.mxu0
      %v3263 = vadd.f32 0.0, %v3262
      %v3264 = vpop.f32.mrf.mxu0
      %3265 = vmatprep.mubr.f32.mxu0 0.0
      %3266 = vmatmul.mubr.f32.gmra.mxu0 %v3102
      %v3267 = vpop.f32.mrf.mxu0
      %v3268 = vadd.f32 0.0, %v3267
      %v3269 = vpop.f32.mrf.mxu0
      %3270 = vmatprep.mubr.f32.mxu0 0.0
      %3271 = vmatmul.mubr.f32.gmra.mxu0 %v3105
      %v3272 = vpop.f32.mrf.mxu0
      %v3273 = vadd.f32 0.0, %v3272
      %v3274 = vpop.f32.mrf.mxu0
      %3275 = vmatprep.mubr.f32.mxu0 0.0
      %3276 = vmatmul.mubr.f32.gmra.mxu0 %v3108
      %v3277 = vpop.f32.mrf.mxu0
      %v3278 = vadd.f32 0.0, %v3277
      %v3279 = vpop.f32.mrf.mxu0
      %3280 = vmatprep.mubr.f32.mxu0 0.0
      %3281 = vmatmul.mubr.f32.gmra.mxu0 %v3111
      %v3282 = vpop.f32.mrf.mxu0
      %v3283 = vadd.f32 0.0, %v3282
      %v3284 = vpop.f32.mrf.mxu0
      %3285 = vmatprep.mubr.f32.mxu0 0.0
      %3286 = vmatmul.mubr.f32.gmra.mxu0 %v3114
      %v3287 = vpop.f32.mrf.mxu0
      %v3288 = vadd.f32 0.0, %v3287
      %v3289 = vpop.f32.mrf.mxu0
      %3290 = vmatprep.mubr.f32.mxu0 0.0
      %3291 = vmatmul.mubr.f32.gmra.mxu0 %v3117
      %v3292 = vpop.f32.mrf.mxu0
      %v3293 = vadd.f32 0.0, %v3292
      %v3294 = vpop.f32.mrf.mxu0
      %3295 = vmatprep.mubr.f32.mxu0 0.0
      %3296 = vmatmul.mubr.f32.gmra.mxu0 %v3120
      %v3297 = vpop.f32.mrf.mxu0
      %v3298 = vadd.f32 0.0, %v3297
      %v3299 = vpop.f32.mrf.mxu0
      %3300 = vmatprep.mubr.f32.mxu0 0.0
      %3301 = vmatmul.mubr.f32.gmra.mxu0 %v3123
      %v3302 = vpop.f32.mrf.mxu0
      %v3303 = vadd.f32 0.0, %v3302
      %v3304 = vpop.f32.mrf.mxu0
      %3305 = vmatprep.mubr.f32.mxu0 0.0
      %3306 = vmatmul.mubr.f32.gmra.mxu0 %v3126
      %v3307 = vpop.f32.mrf.mxu0
      %v3308 = vadd.f32 0.0, %v3307
      %v3309 = vpop.f32.mrf.mxu0
      %3310 = vmatprep.mubr.f32.mxu0 0.0
      %3311 = vmatmul.mubr.f32.gmra.mxu0 %v3129
      %v3312 = vpop.f32.mrf.mxu0
      %v3313 = vadd.f32 0.0, %v3312
      %v3314 = vpop.f32.mrf.mxu0
      %3315 = vmatprep.mubr.f32.mxu0 0.0
      %3316 = vmatmul.mubr.f32.gmra.mxu0 %v3132
      %v3317 = vpop.f32.mrf.mxu0
      %v3318 = vadd.f32 0.0, %v3317
      %v3319 = vpop.f32.mrf.mxu0
      %3320 = vmatprep.mubr.f32.mxu0 0.0
      %3321 = vmatmul.mubr.f32.gmra.mxu0 %v3135
      %v3322 = vpop.f32.mrf.mxu0
      %v3323 = vadd.f32 0.0, %v3322
      %v3324 = vpop.f32.mrf.mxu0
      %3325 = vmatprep.mubr.f32.mxu0 0.0
      %3326 = vmatmul.mubr.f32.gmra.mxu0 %v3138
      %v3327 = vpop.f32.mrf.mxu0
      %v3328 = vadd.f32 0.0, %v3327
      %v3329 = vpop.f32.mrf.mxu0
      %3330 = vmatprep.mubr.f32.mxu0 0.0
      %3331 = vmatmul.mubr.f32.gmra.mxu0 %v3141
      %v3332 = vpop.f32.mrf.mxu0
      %v3333 = vadd.f32 0.0, %v3332
      %v3334 = vpop.f32.mrf.mxu0
      %3335 = vmatprep.mubr.f32.mxu0 0.0
      %3336 = vmatmul.mubr.f32.gmra.mxu0 %v3144
      %v3337 = vpop.f32.mrf.mxu0
      %v3338 = vadd.f32 0.0, %v3337
      %v3339 = vpop.f32.mrf.mxu0
      %3340 = vmatprep.mubr.f32.mxu0 0.0
      %3341 = vmatmul.mubr.f32.gmra.mxu0 %v3147
      %v3342 = vpop.f32.mrf.mxu0
      %v3343 = vadd.f32 0.0, %v3342
      %v3344 = vpop.f32.mrf.mxu0
      %3345 = vmatprep.mubr.f32.mxu0 0.0
      %3346 = vmatmul.mubr.f32.gmra.mxu0 %v3150
      %v3347 = vpop.f32.mrf.mxu0
      %v3348 = vadd.f32 0.0, %v3347
      %v3349 = vpop.f32.mrf.mxu0
      %3350 = vmatprep.mubr.f32.mxu0 0.0
      %3351 = vmatmul.mubr.f32.gmra.mxu0 %v3153
      %v3352 = vpop.f32.mrf.mxu0
      %v3353 = vadd.f32 0.0, %v3352
      %v3354 = vpop.f32.mrf.mxu0
      %3355 = vmatprep.mubr.f32.mxu0 0.0
      %3356 = vmatmul.mubr.f32.gmra.mxu0 %v3156
      %v3357 = vpop.f32.mrf.mxu0
      %v3358 = vadd.f32 0.0, %v3357
      %v3359 = vpop.f32.mrf.mxu0
      %3360 = vmatprep.mubr.f32.mxu0 0.0
      %3361 = vmatmul.mubr.f32.gmra.mxu0 %v3159
      %v3362 = vpop.f32.mrf.mxu0
      %v3363 = vadd.f32 0.0, %v3362
      %v3364 = vpop.f32.mrf.mxu0
      %3365 = vmatprep.mubr.f32.mxu0 0.0
      %3366 = vmatmul.mubr.f32.gmra.mxu0 %v3162
      %v3367 = vpop.f32.mrf.mxu0
      %v3368 = vadd.f32 0.0, %v3367
      %v3369 = vpop.f32.mrf.mxu0
      %3370 = vmatprep.mubr.f32.mxu0 0.0
      %3371 = vmatmul.mubr.f32.gmra.mxu0 %v3165
      %v3372 = vpop.f32.mrf.mxu0
      %v3373 = vadd.f32 0.0, %v3372
      %v3374 = vpop.f32.mrf.mxu0
      %3375 = vmatprep.mubr.f32.mxu0 0.0
      %3376 = vmatmul.mubr.f32.gmra.mxu0 %v3168
      %v3377 = vpop.f32.mrf.mxu0
      %v3378 = vadd.f32 0.0, %v3377
      %v3379 = vpop.f32.mrf.mxu0
      %3380 = vmatprep.mubr.f32.mxu0 0.0
      %3381 = vmatmul.mubr.f32.gmra.mxu0 %v3171
      %v3382 = vpop.f32.mrf.mxu0
      %v3383 = vadd.f32 0.0, %v3382
      %v3384 = vpop.f32.mrf.mxu0
      %3385 = vmatprep.mubr.f32.mxu0 0.0
      %3386 = vmatmul.mubr.f32.gmra.mxu0 %v3174
      %v3387 = vpop.f32.mrf.mxu0
      %v3388 = vadd.f32 0.0, %v3387
      %v3389 = vpop.f32.mrf.mxu0
      %3390 = vmatprep.mubr.f32.mxu0 0.0
      %3391 = vmatmul.mubr.f32.gmra.mxu0 %v3177
      %v3392 = vpop.f32.mrf.mxu0
      %v3393 = vadd.f32 0.0, %v3392
      %v3394 = vpop.f32.mrf.mxu0
      %3395 = vmatprep.mubr.f32.mxu0 0.0
      %3396 = vmatmul.mubr.f32.gmra.mxu0 %v3180
      %v3397 = vpop.f32.mrf.mxu0
      %v3398 = vadd.f32 0.0, %v3397
      %v3399 = vpop.f32.mrf.mxu0
      %3400 = vmatprep.mubr.f32.mxu0 0.0
      %3401 = vmatmul.mubr.f32.gmra.mxu0 %v3183
      %v3402 = vpop.f32.mrf.mxu0
      %v3403 = vadd.f32 0.0, %v3402
      %v3404 = vpop.f32.mrf.mxu0
      %3405 = vmatprep.mubr.f32.mxu0 0.0
      %3406 = vmatmul.mubr.f32.gmra.mxu0 %v3186
      %v3407 = vpop.f32.mrf.mxu0
      %v3408 = vadd.f32 0.0, %v3407
      %v3409 = vpop.f32.mrf.mxu0
      %3410 = vmatprep.mubr.f32.mxu0 0.0
      %3411 = vmatmul.mubr.f32.gmra.mxu0 %v3189
      %v3412 = vpop.f32.mrf.mxu0
      %v3413 = vadd.f32 0.0, %v3412
      %v3414 = vpop.f32.mrf.mxu0
      %3415 = vdwg.mxu0
      %v3416 = vadd.f32 %v2805, %v3258
      %v3417 = vadd.f32 %v2810, %v3263
      %v3418 = vadd.f32 %v2815, %v3268
      %v3419 = vadd.f32 %v2820, %v3273
      %v3420 = vadd.f32 %v2825, %v3278
      %v3421 = vadd.f32 %v2830, %v3283
      %v3422 = vadd.f32 %v2835, %v3288
      %v3423 = vadd.f32 %v2840, %v3293
      %v3424 = vadd.f32 %v2845, %v3298
      %v3425 = vadd.f32 %v2850, %v3303
      %v3426 = vadd.f32 %v2855, %v3308
      %v3427 = vadd.f32 %v2860, %v3313
      %v3428 = vadd.f32 %v2865, %v3318
      %v3429 = vadd.f32 %v2870, %v3323
      %v3430 = vadd.f32 %v2875, %v3328
      %v3431 = vadd.f32 %v2880, %v3333
      %v3432 = vadd.f32 %v2885, %v3338
      %v3433 = vadd.f32 %v2890, %v3343
      %v3434 = vadd.f32 %v2895, %v3348
      %v3435 = vadd.f32 %v2900, %v3353
      %v3436 = vadd.f32 %v2905, %v3358
      %v3437 = vadd.f32 %v2910, %v3363
      %v3438 = vadd.f32 %v2915, %v3368
      %v3439 = vadd.f32 %v2920, %v3373
      %v3440 = vadd.f32 %v2925, %v3378
      %v3441 = vadd.f32 %v2930, %v3383
      %v3442 = vadd.f32 %v2935, %v3388
      %v3443 = vadd.f32 %v2940, %v3393
      %v3444 = vadd.f32 %v2945, %v3398
      %v3445 = vadd.f32 %v2950, %v3403
      %v3446 = vadd.f32 %v2955, %v3408
      %v3447 = vadd.f32 %v2960, %v3413
      %v3448 = vld [vmem:[#allocation2 + $0x17] sm:$0xff]
      %v3449 = vld [vmem:[#allocation2 + $0x1f] sm:$0xff]
      %v3450 = vld [vmem:[#allocation2 + $0x27] sm:$0xff]
      %v3451 = vld [vmem:[#allocation2 + $0x2f] sm:$0xff]
      %v3452 = vld [vmem:[#allocation2 + $0x37] sm:$0xff]
      %v3453 = vld [vmem:[#allocation2 + $0x3f] sm:$0xff]
      %v3454 = vld [vmem:[#allocation2 + $0x47] sm:$0xff]
      %v3455 = vld [vmem:[#allocation2 + $0x4f] sm:$0xff]
      %v3456 = vld [vmem:[#allocation2 + $0x57] sm:$0xff]
      %v3457 = vld [vmem:[#allocation2 + $0x5f] sm:$0xff]
      %v3458 = vld [vmem:[#allocation2 + $0x67] sm:$0xff]
      %v3459 = vld [vmem:[#allocation2 + $0x6f] sm:$0xff]
      %v3460 = vld [vmem:[#allocation2 + $0x77] sm:$0xff]
      %v3461 = vld [vmem:[#allocation2 + $0x7f] sm:$0xff]
      %v3462 = vld [vmem:[#allocation2 + $0x87] sm:$0xff]
      %v3463 = vld [vmem:[#allocation2 + $0x8f] sm:$0xff]
      %v3464 = vld [vmem:[#allocation2 + $0x97] sm:$0xff]
      %v3465 = vld [vmem:[#allocation2 + $0x9f] sm:$0xff]
      %v3466 = vld [vmem:[#allocation2 + $0xa7] sm:$0xff]
      %v3467 = vld [vmem:[#allocation2 + $0xaf] sm:$0xff]
      %v3468 = vld [vmem:[#allocation2 + $0xb7] sm:$0xff]
      %v3469 = vld [vmem:[#allocation2 + $0xbf] sm:$0xff]
      %v3470 = vld [vmem:[#allocation2 + $0xc7] sm:$0xff]
      %v3471 = vld [vmem:[#allocation2 + $0xcf] sm:$0xff]
      %v3472 = vld [vmem:[#allocation2 + $0xd7] sm:$0xff]
      %v3473 = vld [vmem:[#allocation2 + $0xdf] sm:$0xff]
      %v3474 = vld [vmem:[#allocation2 + $0xe7] sm:$0xff]
      %v3475 = vld [vmem:[#allocation2 + $0xef] sm:$0xff]
      %v3476 = vld [vmem:[#allocation2 + $0xf7] sm:$0xff]
      %v3477 = vld [vmem:[#allocation2 + $0xff] sm:$0xff]
      %v3478 = vld [vmem:[#allocation2 + $0x107] sm:$0xff]
      %v3479 = vld [vmem:[#allocation2 + $0x10f] sm:$0xff]
      %v3480 = vsel %vm2217, %v3448, 0.0
      %v3481 = vsel %vm2218, %v3449, 0.0
      %v3482 = vsel %vm2219, %v3450, 0.0
      %v3483 = vsel %vm2220, %v3451, 0.0
      %v3484 = vsel %vm2221, %v3452, 0.0
      %v3485 = vsel %vm2222, %v3453, 0.0
      %v3486 = vsel %vm2223, %v3454, 0.0
      %v3487 = vsel %vm2224, %v3455, 0.0
      %v3488 = vsel %vm2225, %v3456, 0.0
      %v3489 = vsel %vm2226, %v3457, 0.0
      %v3490 = vsel %vm2227, %v3458, 0.0
      %v3491 = vsel %vm2228, %v3459, 0.0
      %v3492 = vsel %vm2229, %v3460, 0.0
      %v3493 = vsel %vm2230, %v3461, 0.0
      %v3494 = vsel %vm2231, %v3462, 0.0
      %v3495 = vsel %vm2232, %v3463, 0.0
      %v3496 = vsel %vm2233, %v3464, 0.0
      %v3497 = vsel %vm2234, %v3465, 0.0
      %v3498 = vsel %vm2235, %v3466, 0.0
      %v3499 = vsel %vm2236, %v3467, 0.0
      %v3500 = vsel %vm2237, %v3468, 0.0
      %v3501 = vsel %vm2238, %v3469, 0.0
      %v3502 = vsel %vm2239, %v3470, 0.0
      %v3503 = vsel %vm2240, %v3471, 0.0
      %v3504 = vsel %vm2241, %v3472, 0.0
      %v3505 = vsel %vm2242, %v3473, 0.0
      %v3506 = vsel %vm2243, %v3474, 0.0
      %v3507 = vsel %vm2244, %v3475, 0.0
      %v3508 = vsel %vm2245, %v3476, 0.0
      %v3509 = vsel %vm2246, %v3477, 0.0
      %v3510 = vsel %vm2247, %v3478, 0.0
      %v3511 = vsel %vm2248, %v3479, 0.0
      %v3512 = vld [vmem:[%s6 + $0x60] sm:$0xff]
      %v3513 = vld [vmem:[%s6 + $0x68] sm:$0xff]
      %v3514 = vld [vmem:[%s6 + $0x70] sm:$0xff]
      %v3515 = vld [vmem:[%s6 + $0x78] sm:$0xff]
      %v3517 = vsel %vm370, %v3480, 0
      %v3520 = vsel %vm370, %v3481, 0
      %v3523 = vsel %vm370, %v3482, 0
      %v3526 = vsel %vm370, %v3483, 0
      %v3529 = vsel %vm370, %v3484, 0
      %v3532 = vsel %vm370, %v3485, 0
      %v3535 = vsel %vm370, %v3486, 0
      %v3538 = vsel %vm370, %v3487, 0
      %v3541 = vsel %vm370, %v3488, 0
      %v3544 = vsel %vm370, %v3489, 0
      %v3547 = vsel %vm370, %v3490, 0
      %v3550 = vsel %vm370, %v3491, 0
      %v3553 = vsel %vm370, %v3492, 0
      %v3556 = vsel %vm370, %v3493, 0
      %v3559 = vsel %vm370, %v3494, 0
      %v3562 = vsel %vm370, %v3495, 0
      %v3565 = vsel %vm370, %v3496, 0
      %v3568 = vsel %vm370, %v3497, 0
      %v3571 = vsel %vm370, %v3498, 0
      %v3574 = vsel %vm370, %v3499, 0
      %v3577 = vsel %vm370, %v3500, 0
      %v3580 = vsel %vm370, %v3501, 0
      %v3583 = vsel %vm370, %v3502, 0
      %v3586 = vsel %vm370, %v3503, 0
      %v3589 = vsel %vm370, %v3504, 0
      %v3592 = vsel %vm370, %v3505, 0
      %v3595 = vsel %vm370, %v3506, 0
      %v3598 = vsel %vm370, %v3507, 0
      %v3601 = vsel %vm370, %v3508, 0
      %v3604 = vsel %vm370, %v3509, 0
      %v3607 = vsel %vm370, %v3510, 0
      %v3610 = vsel %vm370, %v3511, 0
      %3612 = vmatprep.subr.mxu0 0.0
      %3613 = vmatpush1.msra.mxu0 0.0
      %3614 = vmatprep.subr.mxu0 0.0
      %3615 = vmatpush1.msra.mxu0 0.0
      %3616 = vmatprep.subr.mxu0 0.0
      %3617 = vmatpush1.msra.mxu0 0.0
      %3618 = vmatprep.subr.mxu0 0.0
      %3619 = vmatpush1.msra.mxu0 0.0
      %3620 = vmatprep.subr.mxu0 0.0
      %3621 = vmatpush1.msra.mxu0 0.0
      %3622 = vmatprep.subr.mxu0 0.0
      %3623 = vmatpush1.msra.mxu0 0.0
      %3624 = vmatprep.subr.mxu0 0.0
      %3625 = vmatpush1.msra.mxu0 0.0
      %3626 = vmatprep.subr.mxu0 0.0
      %3627 = vmatpush1.msra.mxu0 0.0
      %3628 = vmatprep.subr.mxu0 0.0
      %3629 = vmatpush1.msra.mxu0 0.0
      %3630 = vmatprep.subr.mxu0 0.0
      %3631 = vmatpush1.msra.mxu0 0.0
      %3632 = vmatprep.subr.mxu0 0.0
      %3633 = vmatpush1.msra.mxu0 0.0
      %3634 = vmatprep.subr.mxu0 0.0
      %3635 = vmatpush1.msra.mxu0 0.0
      %3636 = vmatprep.subr.mxu0 0.0
      %3637 = vmatpush1.msra.mxu0 %v3515
      %3638 = vmatprep.subr.mxu0 0.0
      %3639 = vmatpush1.msra.mxu0 %v3514
      %3640 = vmatprep.subr.mxu0 0.0
      %3641 = vmatpush1.msra.mxu0 %v3513
      %3642 = vmatprep.subr.mxu0 0.0
      %3643 = vmatpush1.msra.mxu0 %v3512
      %3644 = vmatprep.subr.mxu0 0.0
      %3645 = vmatpush2.msra.mxu0 0.0
      %3646 = vmatprep.subr.mxu0 0.0
      %3647 = vmatpush2.msra.mxu0 0.0
      %3648 = vmatprep.subr.mxu0 0.0
      %3649 = vmatpush2.msra.mxu0 0.0
      %3650 = vmatprep.subr.mxu0 0.0
      %3651 = vmatpush2.msra.mxu0 0.0
      %3652 = vmatprep.subr.mxu0 0.0
      %3653 = vmatpush2.msra.mxu0 0.0
      %3654 = vmatprep.subr.mxu0 0.0
      %3655 = vmatpush2.msra.mxu0 0.0
      %3656 = vmatprep.subr.mxu0 0.0
      %3657 = vmatpush2.msra.mxu0 0.0
      %3658 = vmatprep.subr.mxu0 0.0
      %3659 = vmatpush2.msra.mxu0 0.0
      %3660 = vmatprep.subr.mxu0 0.0
      %3661 = vmatpush2.msra.mxu0 0.0
      %3662 = vmatprep.subr.mxu0 0.0
      %3663 = vmatpush2.msra.mxu0 0.0
      %3664 = vmatprep.subr.mxu0 0.0
      %3665 = vmatpush2.msra.mxu0 0.0
      %3666 = vmatprep.subr.mxu0 0.0
      %3667 = vmatpush2.msra.mxu0 0.0
      %3668 = vmatprep.subr.mxu0 0.0
      %3669 = vmatpush2.msra.mxu0 0.0
      %3670 = vmatprep.subr.mxu0 0.0
      %3671 = vmatpush2.msra.mxu0 0.0
      %3672 = vmatprep.subr.mxu0 0.0
      %3673 = vmatpush2.msra.mxu0 0.0
      %3674 = vmatprep.subr.mxu0 0.0
      %3675 = vmatpush2.msra.mxu0 0.0
      %3676 = vmatprep.mubr.f32.mxu0 0.0
      %3677 = vmatmul.mubr.f32.gmra.mxu0 %v3517
      %v3678 = vpop.f32.mrf.mxu0
      %v3679 = vadd.f32 0.0, %v3678
      %v3680 = vpop.f32.mrf.mxu0
      %3681 = vmatprep.mubr.f32.mxu0 0.0
      %3682 = vmatmul.mubr.f32.gmra.mxu0 %v3520
      %v3683 = vpop.f32.mrf.mxu0
      %v3684 = vadd.f32 0.0, %v3683
      %v3685 = vpop.f32.mrf.mxu0
      %3686 = vmatprep.mubr.f32.mxu0 0.0
      %3687 = vmatmul.mubr.f32.gmra.mxu0 %v3523
      %v3688 = vpop.f32.mrf.mxu0
      %v3689 = vadd.f32 0.0, %v3688
      %v3690 = vpop.f32.mrf.mxu0
      %3691 = vmatprep.mubr.f32.mxu0 0.0
      %3692 = vmatmul.mubr.f32.gmra.mxu0 %v3526
      %v3693 = vpop.f32.mrf.mxu0
      %v3694 = vadd.f32 0.0, %v3693
      %v3695 = vpop.f32.mrf.mxu0
      %3696 = vmatprep.mubr.f32.mxu0 0.0
      %3697 = vmatmul.mubr.f32.gmra.mxu0 %v3529
      %v3698 = vpop.f32.mrf.mxu0
      %v3699 = vadd.f32 0.0, %v3698
      %v3700 = vpop.f32.mrf.mxu0
      %3701 = vmatprep.mubr.f32.mxu0 0.0
      %3702 = vmatmul.mubr.f32.gmra.mxu0 %v3532
      %v3703 = vpop.f32.mrf.mxu0
      %v3704 = vadd.f32 0.0, %v3703
      %v3705 = vpop.f32.mrf.mxu0
      %3706 = vmatprep.mubr.f32.mxu0 0.0
      %3707 = vmatmul.mubr.f32.gmra.mxu0 %v3535
      %v3708 = vpop.f32.mrf.mxu0
      %v3709 = vadd.f32 0.0, %v3708
      %v3710 = vpop.f32.mrf.mxu0
      %3711 = vmatprep.mubr.f32.mxu0 0.0
      %3712 = vmatmul.mubr.f32.gmra.mxu0 %v3538
      %v3713 = vpop.f32.mrf.mxu0
      %v3714 = vadd.f32 0.0, %v3713
      %v3715 = vpop.f32.mrf.mxu0
      %3716 = vmatprep.mubr.f32.mxu0 0.0
      %3717 = vmatmul.mubr.f32.gmra.mxu0 %v3541
      %v3718 = vpop.f32.mrf.mxu0
      %v3719 = vadd.f32 0.0, %v3718
      %v3720 = vpop.f32.mrf.mxu0
      %3721 = vmatprep.mubr.f32.mxu0 0.0
      %3722 = vmatmul.mubr.f32.gmra.mxu0 %v3544
      %v3723 = vpop.f32.mrf.mxu0
      %v3724 = vadd.f32 0.0, %v3723
      %v3725 = vpop.f32.mrf.mxu0
      %3726 = vmatprep.mubr.f32.mxu0 0.0
      %3727 = vmatmul.mubr.f32.gmra.mxu0 %v3547
      %v3728 = vpop.f32.mrf.mxu0
      %v3729 = vadd.f32 0.0, %v3728
      %v3730 = vpop.f32.mrf.mxu0
      %3731 = vmatprep.mubr.f32.mxu0 0.0
      %3732 = vmatmul.mubr.f32.gmra.mxu0 %v3550
      %v3733 = vpop.f32.mrf.mxu0
      %v3734 = vadd.f32 0.0, %v3733
      %v3735 = vpop.f32.mrf.mxu0
      %3736 = vmatprep.mubr.f32.mxu0 0.0
      %3737 = vmatmul.mubr.f32.gmra.mxu0 %v3553
      %v3738 = vpop.f32.mrf.mxu0
      %v3739 = vadd.f32 0.0, %v3738
      %v3740 = vpop.f32.mrf.mxu0
      %3741 = vmatprep.mubr.f32.mxu0 0.0
      %3742 = vmatmul.mubr.f32.gmra.mxu0 %v3556
      %v3743 = vpop.f32.mrf.mxu0
      %v3744 = vadd.f32 0.0, %v3743
      %v3745 = vpop.f32.mrf.mxu0
      %3746 = vmatprep.mubr.f32.mxu0 0.0
      %3747 = vmatmul.mubr.f32.gmra.mxu0 %v3559
      %v3748 = vpop.f32.mrf.mxu0
      %v3749 = vadd.f32 0.0, %v3748
      %v3750 = vpop.f32.mrf.mxu0
      %3751 = vmatprep.mubr.f32.mxu0 0.0
      %3752 = vmatmul.mubr.f32.gmra.mxu0 %v3562
      %v3753 = vpop.f32.mrf.mxu0
      %v3754 = vadd.f32 0.0, %v3753
      %v3755 = vpop.f32.mrf.mxu0
      %3756 = vmatprep.mubr.f32.mxu0 0.0
      %3757 = vmatmul.mubr.f32.gmra.mxu0 %v3565
      %v3758 = vpop.f32.mrf.mxu0
      %v3759 = vadd.f32 0.0, %v3758
      %v3760 = vpop.f32.mrf.mxu0
      %3761 = vmatprep.mubr.f32.mxu0 0.0
      %3762 = vmatmul.mubr.f32.gmra.mxu0 %v3568
      %v3763 = vpop.f32.mrf.mxu0
      %v3764 = vadd.f32 0.0, %v3763
      %v3765 = vpop.f32.mrf.mxu0
      %3766 = vmatprep.mubr.f32.mxu0 0.0
      %3767 = vmatmul.mubr.f32.gmra.mxu0 %v3571
      %v3768 = vpop.f32.mrf.mxu0
      %v3769 = vadd.f32 0.0, %v3768
      %v3770 = vpop.f32.mrf.mxu0
      %3771 = vmatprep.mubr.f32.mxu0 0.0
      %3772 = vmatmul.mubr.f32.gmra.mxu0 %v3574
      %v3773 = vpop.f32.mrf.mxu0
      %v3774 = vadd.f32 0.0, %v3773
      %v3775 = vpop.f32.mrf.mxu0
      %3776 = vmatprep.mubr.f32.mxu0 0.0
      %3777 = vmatmul.mubr.f32.gmra.mxu0 %v3577
      %v3778 = vpop.f32.mrf.mxu0
      %v3779 = vadd.f32 0.0, %v3778
      %v3780 = vpop.f32.mrf.mxu0
      %3781 = vmatprep.mubr.f32.mxu0 0.0
      %3782 = vmatmul.mubr.f32.gmra.mxu0 %v3580
      %v3783 = vpop.f32.mrf.mxu0
      %v3784 = vadd.f32 0.0, %v3783
      %v3785 = vpop.f32.mrf.mxu0
      %3786 = vmatprep.mubr.f32.mxu0 0.0
      %3787 = vmatmul.mubr.f32.gmra.mxu0 %v3583
      %v3788 = vpop.f32.mrf.mxu0
      %v3789 = vadd.f32 0.0, %v3788
      %v3790 = vpop.f32.mrf.mxu0
      %3791 = vmatprep.mubr.f32.mxu0 0.0
      %3792 = vmatmul.mubr.f32.gmra.mxu0 %v3586
      %v3793 = vpop.f32.mrf.mxu0
      %v3794 = vadd.f32 0.0, %v3793
      %v3795 = vpop.f32.mrf.mxu0
      %3796 = vmatprep.mubr.f32.mxu0 0.0
      %3797 = vmatmul.mubr.f32.gmra.mxu0 %v3589
      %v3798 = vpop.f32.mrf.mxu0
      %v3799 = vadd.f32 0.0, %v3798
      %v3800 = vpop.f32.mrf.mxu0
      %3801 = vmatprep.mubr.f32.mxu0 0.0
      %3802 = vmatmul.mubr.f32.gmra.mxu0 %v3592
      %v3803 = vpop.f32.mrf.mxu0
      %v3804 = vadd.f32 0.0, %v3803
      %v3805 = vpop.f32.mrf.mxu0
      %3806 = vmatprep.mubr.f32.mxu0 0.0
      %3807 = vmatmul.mubr.f32.gmra.mxu0 %v3595
      %v3808 = vpop.f32.mrf.mxu0
      %v3809 = vadd.f32 0.0, %v3808
      %v3810 = vpop.f32.mrf.mxu0
      %3811 = vmatprep.mubr.f32.mxu0 0.0
      %3812 = vmatmul.mubr.f32.gmra.mxu0 %v3598
      %v3813 = vpop.f32.mrf.mxu0
      %v3814 = vadd.f32 0.0, %v3813
      %v3815 = vpop.f32.mrf.mxu0
      %3816 = vmatprep.mubr.f32.mxu0 0.0
      %3817 = vmatmul.mubr.f32.gmra.mxu0 %v3601
      %v3818 = vpop.f32.mrf.mxu0
      %v3819 = vadd.f32 0.0, %v3818
      %v3820 = vpop.f32.mrf.mxu0
      %3821 = vmatprep.mubr.f32.mxu0 0.0
      %3822 = vmatmul.mubr.f32.gmra.mxu0 %v3604
      %v3823 = vpop.f32.mrf.mxu0
      %v3824 = vadd.f32 0.0, %v3823
      %v3825 = vpop.f32.mrf.mxu0
      %3826 = vmatprep.mubr.f32.mxu0 0.0
      %3827 = vmatmul.mubr.f32.gmra.mxu0 %v3607
      %v3828 = vpop.f32.mrf.mxu0
      %v3829 = vadd.f32 0.0, %v3828
      %v3830 = vpop.f32.mrf.mxu0
      %3831 = vmatprep.mubr.f32.mxu0 0.0
      %3832 = vmatmul.mubr.f32.gmra.mxu0 %v3610
      %v3833 = vpop.f32.mrf.mxu0
      %v3834 = vadd.f32 0.0, %v3833
      %v3835 = vpop.f32.mrf.mxu0
      %3836 = vdwg.mxu0
      %v3837 = vadd.f32 %v3416, %v3679
      %v3838 = vadd.f32 %v3417, %v3684
      %v3839 = vadd.f32 %v3418, %v3689
      %v3840 = vadd.f32 %v3419, %v3694
      %v3841 = vadd.f32 %v3420, %v3699
      %v3842 = vadd.f32 %v3421, %v3704
      %v3843 = vadd.f32 %v3422, %v3709
      %v3844 = vadd.f32 %v3423, %v3714
      %v3845 = vadd.f32 %v3424, %v3719
      %v3846 = vadd.f32 %v3425, %v3724
      %v3847 = vadd.f32 %v3426, %v3729
      %v3848 = vadd.f32 %v3427, %v3734
      %v3849 = vadd.f32 %v3428, %v3739
      %v3850 = vadd.f32 %v3429, %v3744
      %v3851 = vadd.f32 %v3430, %v3749
      %v3852 = vadd.f32 %v3431, %v3754
      %v3853 = vadd.f32 %v3432, %v3759
      %v3854 = vadd.f32 %v3433, %v3764
      %v3855 = vadd.f32 %v3434, %v3769
      %v3856 = vadd.f32 %v3435, %v3774
      %v3857 = vadd.f32 %v3436, %v3779
      %v3858 = vadd.f32 %v3437, %v3784
      %v3859 = vadd.f32 %v3438, %v3789
      %v3860 = vadd.f32 %v3439, %v3794
      %v3861 = vadd.f32 %v3440, %v3799
      %v3862 = vadd.f32 %v3441, %v3804
      %v3863 = vadd.f32 %v3442, %v3809
      %v3864 = vadd.f32 %v3443, %v3814
      %v3865 = vadd.f32 %v3444, %v3819
      %v3866 = vadd.f32 %v3445, %v3824
      %v3867 = vadd.f32 %v3446, %v3829
      %v3868 = vadd.f32 %v3447, %v3834
      %v3869 = vld [vmem:[#allocation2 + $0x18] sm:$0xff]
      %v3870 = vld [vmem:[#allocation2 + $0x20] sm:$0xff]
      %v3871 = vld [vmem:[#allocation2 + $0x28] sm:$0xff]
      %v3872 = vld [vmem:[#allocation2 + $0x30] sm:$0xff]
      %v3873 = vld [vmem:[#allocation2 + $0x38] sm:$0xff]
      %v3874 = vld [vmem:[#allocation2 + $0x40] sm:$0xff]
      %v3875 = vld [vmem:[#allocation2 + $0x48] sm:$0xff]
      %v3876 = vld [vmem:[#allocation2 + $0x50] sm:$0xff]
      %v3877 = vld [vmem:[#allocation2 + $0x58] sm:$0xff]
      %v3878 = vld [vmem:[#allocation2 + $0x60] sm:$0xff]
      %v3879 = vld [vmem:[#allocation2 + $0x68] sm:$0xff]
      %v3880 = vld [vmem:[#allocation2 + $0x70] sm:$0xff]
      %v3881 = vld [vmem:[#allocation2 + $0x78] sm:$0xff]
      %v3882 = vld [vmem:[#allocation2 + $0x80] sm:$0xff]
      %v3883 = vld [vmem:[#allocation2 + $0x88] sm:$0xff]
      %v3884 = vld [vmem:[#allocation2 + $0x90] sm:$0xff]
      %v3885 = vld [vmem:[#allocation2 + $0x98] sm:$0xff]
      %v3886 = vld [vmem:[#allocation2 + $0xa0] sm:$0xff]
      %v3887 = vld [vmem:[#allocation2 + $0xa8] sm:$0xff]
      %v3888 = vld [vmem:[#allocation2 + $0xb0] sm:$0xff]
      %v3889 = vld [vmem:[#allocation2 + $0xb8] sm:$0xff]
      %v3890 = vld [vmem:[#allocation2 + $0xc0] sm:$0xff]
      %v3891 = vld [vmem:[#allocation2 + $0xc8] sm:$0xff]
      %v3892 = vld [vmem:[#allocation2 + $0xd0] sm:$0xff]
      %v3893 = vld [vmem:[#allocation2 + $0xd8] sm:$0xff]
      %v3894 = vld [vmem:[#allocation2 + $0xe0] sm:$0xff]
      %v3895 = vld [vmem:[#allocation2 + $0xe8] sm:$0xff]
      %v3896 = vld [vmem:[#allocation2 + $0xf0] sm:$0xff]
      %v3897 = vld [vmem:[#allocation2 + $0xf8] sm:$0xff]
      %v3898 = vld [vmem:[#allocation2 + $0x100] sm:$0xff]
      %v3899 = vld [vmem:[#allocation2 + $0x108] sm:$0xff]
      %v3900 = vld [vmem:[#allocation2 + $0x110] sm:$0xff]
      %v3901 = vld [vmem:[%s6 + $0x80] sm:$0xff]
      %v3902 = vld [vmem:[%s6 + $0x88] sm:$0xff]
      %v3903 = vld [vmem:[%s6 + $0x90] sm:$0xff]
      %v3904 = vld [vmem:[%s6 + $0x98] sm:$0xff]
      %v3906 = vsel %vm370, %v3869, 0
      %v3909 = vsel %vm370, %v3870, 0
      %v3912 = vsel %vm370, %v3871, 0
      %v3915 = vsel %vm370, %v3872, 0
      %v3918 = vsel %vm370, %v3873, 0
      %v3921 = vsel %vm370, %v3874, 0
      %v3924 = vsel %vm370, %v3875, 0
      %v3927 = vsel %vm370, %v3876, 0
      %v3930 = vsel %vm370, %v3877, 0
      %v3933 = vsel %vm370, %v3878, 0
      %v3936 = vsel %vm370, %v3879, 0
      %v3939 = vsel %vm370, %v3880, 0
      %v3942 = vsel %vm370, %v3881, 0
      %v3945 = vsel %vm370, %v3882, 0
      %v3948 = vsel %vm370, %v3883, 0
      %v3951 = vsel %vm370, %v3884, 0
      %v3954 = vsel %vm370, %v3885, 0
      %v3957 = vsel %vm370, %v3886, 0
      %v3960 = vsel %vm370, %v3887, 0
      %v3963 = vsel %vm370, %v3888, 0
      %v3966 = vsel %vm370, %v3889, 0
      %v3969 = vsel %vm370, %v3890, 0
      %v3972 = vsel %vm370, %v3891, 0
      %v3975 = vsel %vm370, %v3892, 0
      %v3978 = vsel %vm370, %v3893, 0
      %v3981 = vsel %vm370, %v3894, 0
      %v3984 = vsel %vm370, %v3895, 0
      %v3987 = vsel %vm370, %v3896, 0
      %v3990 = vsel %vm370, %v3897, 0
      %v3993 = vsel %vm370, %v3898, 0
      %v3996 = vsel %vm370, %v3899, 0
      %v3999 = vsel %vm370, %v3900, 0
      %4001 = vmatprep.subr.mxu0 0.0
      %4002 = vmatpush1.msra.mxu0 0.0
      %4003 = vmatprep.subr.mxu0 0.0
      %4004 = vmatpush1.msra.mxu0 0.0
      %4005 = vmatprep.subr.mxu0 0.0
      %4006 = vmatpush1.msra.mxu0 0.0
      %4007 = vmatprep.subr.mxu0 0.0
      %4008 = vmatpush1.msra.mxu0 0.0
      %4009 = vmatprep.subr.mxu0 0.0
      %4010 = vmatpush1.msra.mxu0 0.0
      %4011 = vmatprep.subr.mxu0 0.0
      %4012 = vmatpush1.msra.mxu0 0.0
      %4013 = vmatprep.subr.mxu0 0.0
      %4014 = vmatpush1.msra.mxu0 0.0
      %4015 = vmatprep.subr.mxu0 0.0
      %4016 = vmatpush1.msra.mxu0 0.0
      %4017 = vmatprep.subr.mxu0 0.0
      %4018 = vmatpush1.msra.mxu0 0.0
      %4019 = vmatprep.subr.mxu0 0.0
      %4020 = vmatpush1.msra.mxu0 0.0
      %4021 = vmatprep.subr.mxu0 0.0
      %4022 = vmatpush1.msra.mxu0 0.0
      %4023 = vmatprep.subr.mxu0 0.0
      %4024 = vmatpush1.msra.mxu0 0.0
      %4025 = vmatprep.subr.mxu0 0.0
      %4026 = vmatpush1.msra.mxu0 %v3904
      %4027 = vmatprep.subr.mxu0 0.0
      %4028 = vmatpush1.msra.mxu0 %v3903
      %4029 = vmatprep.subr.mxu0 0.0
      %4030 = vmatpush1.msra.mxu0 %v3902
      %4031 = vmatprep.subr.mxu0 0.0
      %4032 = vmatpush1.msra.mxu0 %v3901
      %4033 = vmatprep.subr.mxu0 0.0
      %4034 = vmatpush2.msra.mxu0 0.0
      %4035 = vmatprep.subr.mxu0 0.0
      %4036 = vmatpush2.msra.mxu0 0.0
      %4037 = vmatprep.subr.mxu0 0.0
      %4038 = vmatpush2.msra.mxu0 0.0
      %4039 = vmatprep.subr.mxu0 0.0
      %4040 = vmatpush2.msra.mxu0 0.0
      %4041 = vmatprep.subr.mxu0 0.0
      %4042 = vmatpush2.msra.mxu0 0.0
      %4043 = vmatprep.subr.mxu0 0.0
      %4044 = vmatpush2.msra.mxu0 0.0
      %4045 = vmatprep.subr.mxu0 0.0
      %4046 = vmatpush2.msra.mxu0 0.0
      %4047 = vmatprep.subr.mxu0 0.0
      %4048 = vmatpush2.msra.mxu0 0.0
      %4049 = vmatprep.subr.mxu0 0.0
      %4050 = vmatpush2.msra.mxu0 0.0
      %4051 = vmatprep.subr.mxu0 0.0
      %4052 = vmatpush2.msra.mxu0 0.0
      %4053 = vmatprep.subr.mxu0 0.0
      %4054 = vmatpush2.msra.mxu0 0.0
      %4055 = vmatprep.subr.mxu0 0.0
      %4056 = vmatpush2.msra.mxu0 0.0
      %4057 = vmatprep.subr.mxu0 0.0
      %4058 = vmatpush2.msra.mxu0 0.0
      %4059 = vmatprep.subr.mxu0 0.0
      %4060 = vmatpush2.msra.mxu0 0.0
      %4061 = vmatprep.subr.mxu0 0.0
      %4062 = vmatpush2.msra.mxu0 0.0
      %4063 = vmatprep.subr.mxu0 0.0
      %4064 = vmatpush2.msra.mxu0 0.0
      %4065 = vmatprep.mubr.f32.mxu0 0.0
      %4066 = vmatmul.mubr.f32.gmra.mxu0 %v3906
      %v4067 = vpop.f32.mrf.mxu0
      %v4068 = vadd.f32 0.0, %v4067
      %v4069 = vpop.f32.mrf.mxu0
      %4070 = vmatprep.mubr.f32.mxu0 0.0
      %4071 = vmatmul.mubr.f32.gmra.mxu0 %v3909
      %v4072 = vpop.f32.mrf.mxu0
      %v4073 = vadd.f32 0.0, %v4072
      %v4074 = vpop.f32.mrf.mxu0
      %4075 = vmatprep.mubr.f32.mxu0 0.0
      %4076 = vmatmul.mubr.f32.gmra.mxu0 %v3912
      %v4077 = vpop.f32.mrf.mxu0
      %v4078 = vadd.f32 0.0, %v4077
      %v4079 = vpop.f32.mrf.mxu0
      %4080 = vmatprep.mubr.f32.mxu0 0.0
      %4081 = vmatmul.mubr.f32.gmra.mxu0 %v3915
      %v4082 = vpop.f32.mrf.mxu0
      %v4083 = vadd.f32 0.0, %v4082
      %v4084 = vpop.f32.mrf.mxu0
      %4085 = vmatprep.mubr.f32.mxu0 0.0
      %4086 = vmatmul.mubr.f32.gmra.mxu0 %v3918
      %v4087 = vpop.f32.mrf.mxu0
      %v4088 = vadd.f32 0.0, %v4087
      %v4089 = vpop.f32.mrf.mxu0
      %4090 = vmatprep.mubr.f32.mxu0 0.0
      %4091 = vmatmul.mubr.f32.gmra.mxu0 %v3921
      %v4092 = vpop.f32.mrf.mxu0
      %v4093 = vadd.f32 0.0, %v4092
      %v4094 = vpop.f32.mrf.mxu0
      %4095 = vmatprep.mubr.f32.mxu0 0.0
      %4096 = vmatmul.mubr.f32.gmra.mxu0 %v3924
      %v4097 = vpop.f32.mrf.mxu0
      %v4098 = vadd.f32 0.0, %v4097
      %v4099 = vpop.f32.mrf.mxu0
      %4100 = vmatprep.mubr.f32.mxu0 0.0
      %4101 = vmatmul.mubr.f32.gmra.mxu0 %v3927
      %v4102 = vpop.f32.mrf.mxu0
      %v4103 = vadd.f32 0.0, %v4102
      %v4104 = vpop.f32.mrf.mxu0
      %4105 = vmatprep.mubr.f32.mxu0 0.0
      %4106 = vmatmul.mubr.f32.gmra.mxu0 %v3930
      %v4107 = vpop.f32.mrf.mxu0
      %v4108 = vadd.f32 0.0, %v4107
      %v4109 = vpop.f32.mrf.mxu0
      %4110 = vmatprep.mubr.f32.mxu0 0.0
      %4111 = vmatmul.mubr.f32.gmra.mxu0 %v3933
      %v4112 = vpop.f32.mrf.mxu0
      %v4113 = vadd.f32 0.0, %v4112
      %v4114 = vpop.f32.mrf.mxu0
      %4115 = vmatprep.mubr.f32.mxu0 0.0
      %4116 = vmatmul.mubr.f32.gmra.mxu0 %v3936
      %v4117 = vpop.f32.mrf.mxu0
      %v4118 = vadd.f32 0.0, %v4117
      %v4119 = vpop.f32.mrf.mxu0
      %4120 = vmatprep.mubr.f32.mxu0 0.0
      %4121 = vmatmul.mubr.f32.gmra.mxu0 %v3939
      %v4122 = vpop.f32.mrf.mxu0
      %v4123 = vadd.f32 0.0, %v4122
      %v4124 = vpop.f32.mrf.mxu0
      %4125 = vmatprep.mubr.f32.mxu0 0.0
      %4126 = vmatmul.mubr.f32.gmra.mxu0 %v3942
      %v4127 = vpop.f32.mrf.mxu0
      %v4128 = vadd.f32 0.0, %v4127
      %v4129 = vpop.f32.mrf.mxu0
      %4130 = vmatprep.mubr.f32.mxu0 0.0
      %4131 = vmatmul.mubr.f32.gmra.mxu0 %v3945
      %v4132 = vpop.f32.mrf.mxu0
      %v4133 = vadd.f32 0.0, %v4132
      %v4134 = vpop.f32.mrf.mxu0
      %4135 = vmatprep.mubr.f32.mxu0 0.0
      %4136 = vmatmul.mubr.f32.gmra.mxu0 %v3948
      %v4137 = vpop.f32.mrf.mxu0
      %v4138 = vadd.f32 0.0, %v4137
      %v4139 = vpop.f32.mrf.mxu0
      %4140 = vmatprep.mubr.f32.mxu0 0.0
      %4141 = vmatmul.mubr.f32.gmra.mxu0 %v3951
      %v4142 = vpop.f32.mrf.mxu0
      %v4143 = vadd.f32 0.0, %v4142
      %v4144 = vpop.f32.mrf.mxu0
      %4145 = vmatprep.mubr.f32.mxu0 0.0
      %4146 = vmatmul.mubr.f32.gmra.mxu0 %v3954
      %v4147 = vpop.f32.mrf.mxu0
      %v4148 = vadd.f32 0.0, %v4147
      %v4149 = vpop.f32.mrf.mxu0
      %4150 = vmatprep.mubr.f32.mxu0 0.0
      %4151 = vmatmul.mubr.f32.gmra.mxu0 %v3957
      %v4152 = vpop.f32.mrf.mxu0
      %v4153 = vadd.f32 0.0, %v4152
      %v4154 = vpop.f32.mrf.mxu0
      %4155 = vmatprep.mubr.f32.mxu0 0.0
      %4156 = vmatmul.mubr.f32.gmra.mxu0 %v3960
      %v4157 = vpop.f32.mrf.mxu0
      %v4158 = vadd.f32 0.0, %v4157
      %v4159 = vpop.f32.mrf.mxu0
      %4160 = vmatprep.mubr.f32.mxu0 0.0
      %4161 = vmatmul.mubr.f32.gmra.mxu0 %v3963
      %v4162 = vpop.f32.mrf.mxu0
      %v4163 = vadd.f32 0.0, %v4162
      %v4164 = vpop.f32.mrf.mxu0
      %4165 = vmatprep.mubr.f32.mxu0 0.0
      %4166 = vmatmul.mubr.f32.gmra.mxu0 %v3966
      %v4167 = vpop.f32.mrf.mxu0
      %v4168 = vadd.f32 0.0, %v4167
      %v4169 = vpop.f32.mrf.mxu0
      %4170 = vmatprep.mubr.f32.mxu0 0.0
      %4171 = vmatmul.mubr.f32.gmra.mxu0 %v3969
      %v4172 = vpop.f32.mrf.mxu0
      %v4173 = vadd.f32 0.0, %v4172
      %v4174 = vpop.f32.mrf.mxu0
      %4175 = vmatprep.mubr.f32.mxu0 0.0
      %4176 = vmatmul.mubr.f32.gmra.mxu0 %v3972
      %v4177 = vpop.f32.mrf.mxu0
      %v4178 = vadd.f32 0.0, %v4177
      %v4179 = vpop.f32.mrf.mxu0
      %4180 = vmatprep.mubr.f32.mxu0 0.0
      %4181 = vmatmul.mubr.f32.gmra.mxu0 %v3975
      %v4182 = vpop.f32.mrf.mxu0
      %v4183 = vadd.f32 0.0, %v4182
      %v4184 = vpop.f32.mrf.mxu0
      %4185 = vmatprep.mubr.f32.mxu0 0.0
      %4186 = vmatmul.mubr.f32.gmra.mxu0 %v3978
      %v4187 = vpop.f32.mrf.mxu0
      %v4188 = vadd.f32 0.0, %v4187
      %v4189 = vpop.f32.mrf.mxu0
      %4190 = vmatprep.mubr.f32.mxu0 0.0
      %4191 = vmatmul.mubr.f32.gmra.mxu0 %v3981
      %v4192 = vpop.f32.mrf.mxu0
      %v4193 = vadd.f32 0.0, %v4192
      %v4194 = vpop.f32.mrf.mxu0
      %4195 = vmatprep.mubr.f32.mxu0 0.0
      %4196 = vmatmul.mubr.f32.gmra.mxu0 %v3984
      %v4197 = vpop.f32.mrf.mxu0
      %v4198 = vadd.f32 0.0, %v4197
      %v4199 = vpop.f32.mrf.mxu0
      %4200 = vmatprep.mubr.f32.mxu0 0.0
      %4201 = vmatmul.mubr.f32.gmra.mxu0 %v3987
      %v4202 = vpop.f32.mrf.mxu0
      %v4203 = vadd.f32 0.0, %v4202
      %v4204 = vpop.f32.mrf.mxu0
      %4205 = vmatprep.mubr.f32.mxu0 0.0
      %4206 = vmatmul.mubr.f32.gmra.mxu0 %v3990
      %v4207 = vpop.f32.mrf.mxu0
      %v4208 = vadd.f32 0.0, %v4207
      %v4209 = vpop.f32.mrf.mxu0
      %4210 = vmatprep.mubr.f32.mxu0 0.0
      %4211 = vmatmul.mubr.f32.gmra.mxu0 %v3993
      %v4212 = vpop.f32.mrf.mxu0
      %v4213 = vadd.f32 0.0, %v4212
      %v4214 = vpop.f32.mrf.mxu0
      %4215 = vmatprep.mubr.f32.mxu0 0.0
      %4216 = vmatmul.mubr.f32.gmra.mxu0 %v3996
      %v4217 = vpop.f32.mrf.mxu0
      %v4218 = vadd.f32 0.0, %v4217
      %v4219 = vpop.f32.mrf.mxu0
      %4220 = vmatprep.mubr.f32.mxu0 0.0
      %4221 = vmatmul.mubr.f32.gmra.mxu0 %v3999
      %v4222 = vpop.f32.mrf.mxu0
      %v4223 = vadd.f32 0.0, %v4222
      %v4224 = vpop.f32.mrf.mxu0
      %4225 = vdwg.mxu0
      %v4226 = vadd.f32 %v3837, %v4068
      %v4227 = vadd.f32 %v3838, %v4073
      %v4228 = vadd.f32 %v3839, %v4078
      %v4229 = vadd.f32 %v3840, %v4083
      %v4230 = vadd.f32 %v3841, %v4088
      %v4231 = vadd.f32 %v3842, %v4093
      %v4232 = vadd.f32 %v3843, %v4098
      %v4233 = vadd.f32 %v3844, %v4103
      %v4234 = vadd.f32 %v3845, %v4108
      %v4235 = vadd.f32 %v3846, %v4113
      %v4236 = vadd.f32 %v3847, %v4118
      %v4237 = vadd.f32 %v3848, %v4123
      %v4238 = vadd.f32 %v3849, %v4128
      %v4239 = vadd.f32 %v3850, %v4133
      %v4240 = vadd.f32 %v3851, %v4138
      %v4241 = vadd.f32 %v3852, %v4143
      %v4242 = vadd.f32 %v3853, %v4148
      %v4243 = vadd.f32 %v3854, %v4153
      %v4244 = vadd.f32 %v3855, %v4158
      %v4245 = vadd.f32 %v3856, %v4163
      %v4246 = vadd.f32 %v3857, %v4168
      %v4247 = vadd.f32 %v3858, %v4173
      %v4248 = vadd.f32 %v3859, %v4178
      %v4249 = vadd.f32 %v3860, %v4183
      %v4250 = vadd.f32 %v3861, %v4188
      %v4251 = vadd.f32 %v3862, %v4193
      %v4252 = vadd.f32 %v3863, %v4198
      %v4253 = vadd.f32 %v3864, %v4203
      %v4254 = vadd.f32 %v3865, %v4208
      %v4255 = vadd.f32 %v3866, %v4213
      %v4256 = vadd.f32 %v3867, %v4218
      %v4257 = vadd.f32 %v3868, %v4223
      %v4258 = vld [vmem:[#allocation2 + $0x19] sm:$0xff]
      %v4259 = vld [vmem:[#allocation2 + $0x21] sm:$0xff]
      %v4260 = vld [vmem:[#allocation2 + $0x29] sm:$0xff]
      %v4261 = vld [vmem:[#allocation2 + $0x31] sm:$0xff]
      %v4262 = vld [vmem:[#allocation2 + $0x39] sm:$0xff]
      %v4263 = vld [vmem:[#allocation2 + $0x41] sm:$0xff]
      %v4264 = vld [vmem:[#allocation2 + $0x49] sm:$0xff]
      %v4265 = vld [vmem:[#allocation2 + $0x51] sm:$0xff]
      %v4266 = vld [vmem:[#allocation2 + $0x59] sm:$0xff]
      %v4267 = vld [vmem:[#allocation2 + $0x61] sm:$0xff]
      %v4268 = vld [vmem:[#allocation2 + $0x69] sm:$0xff]
      %v4269 = vld [vmem:[#allocation2 + $0x71] sm:$0xff]
      %v4270 = vld [vmem:[#allocation2 + $0x79] sm:$0xff]
      %v4271 = vld [vmem:[#allocation2 + $0x81] sm:$0xff]
      %v4272 = vld [vmem:[#allocation2 + $0x89] sm:$0xff]
      %v4273 = vld [vmem:[#allocation2 + $0x91] sm:$0xff]
      %v4274 = vld [vmem:[#allocation2 + $0x99] sm:$0xff]
      %v4275 = vld [vmem:[#allocation2 + $0xa1] sm:$0xff]
      %v4276 = vld [vmem:[#allocation2 + $0xa9] sm:$0xff]
      %v4277 = vld [vmem:[#allocation2 + $0xb1] sm:$0xff]
      %v4278 = vld [vmem:[#allocation2 + $0xb9] sm:$0xff]
      %v4279 = vld [vmem:[#allocation2 + $0xc1] sm:$0xff]
      %v4280 = vld [vmem:[#allocation2 + $0xc9] sm:$0xff]
      %v4281 = vld [vmem:[#allocation2 + $0xd1] sm:$0xff]
      %v4282 = vld [vmem:[#allocation2 + $0xd9] sm:$0xff]
      %v4283 = vld [vmem:[#allocation2 + $0xe1] sm:$0xff]
      %v4284 = vld [vmem:[#allocation2 + $0xe9] sm:$0xff]
      %v4285 = vld [vmem:[#allocation2 + $0xf1] sm:$0xff]
      %v4286 = vld [vmem:[#allocation2 + $0xf9] sm:$0xff]
      %v4287 = vld [vmem:[#allocation2 + $0x101] sm:$0xff]
      %v4288 = vld [vmem:[#allocation2 + $0x109] sm:$0xff]
      %v4289 = vld [vmem:[#allocation2 + $0x111] sm:$0xff]
      %v4290 = vsel %vm3027, %v4258, 0.0
      %v4291 = vsel %vm3028, %v4259, 0.0
      %v4292 = vsel %vm3029, %v4260, 0.0
      %v4293 = vsel %vm3030, %v4261, 0.0
      %v4294 = vsel %vm3031, %v4262, 0.0
      %v4295 = vsel %vm3032, %v4263, 0.0
      %v4296 = vsel %vm3033, %v4264, 0.0
      %v4297 = vsel %vm3034, %v4265, 0.0
      %v4298 = vsel %vm3035, %v4266, 0.0
      %v4299 = vsel %vm3036, %v4267, 0.0
      %v4300 = vsel %vm3037, %v4268, 0.0
      %v4301 = vsel %vm3038, %v4269, 0.0
      %v4302 = vsel %vm3039, %v4270, 0.0
      %v4303 = vsel %vm3040, %v4271, 0.0
      %v4304 = vsel %vm3041, %v4272, 0.0
      %v4305 = vsel %vm3042, %v4273, 0.0
      %v4306 = vsel %vm3043, %v4274, 0.0
      %v4307 = vsel %vm3044, %v4275, 0.0
      %v4308 = vsel %vm3045, %v4276, 0.0
      %v4309 = vsel %vm3046, %v4277, 0.0
      %v4310 = vsel %vm3047, %v4278, 0.0
      %v4311 = vsel %vm3048, %v4279, 0.0
      %v4312 = vsel %vm3049, %v4280, 0.0
      %v4313 = vsel %vm3050, %v4281, 0.0
      %v4314 = vsel %vm3051, %v4282, 0.0
      %v4315 = vsel %vm3052, %v4283, 0.0
      %v4316 = vsel %vm3053, %v4284, 0.0
      %v4317 = vsel %vm3054, %v4285, 0.0
      %v4318 = vsel %vm3055, %v4286, 0.0
      %v4319 = vsel %vm3056, %v4287, 0.0
      %v4320 = vsel %vm3057, %v4288, 0.0
      %v4321 = vsel %vm3058, %v4289, 0.0
      %v4322 = vld [vmem:[%s6 + $0xa0] sm:$0xff]
      %v4323 = vld [vmem:[%s6 + $0xa8] sm:$0xff]
      %v4324 = vld [vmem:[%s6 + $0xb0] sm:$0xff]
      %v4325 = vld [vmem:[%s6 + $0xb8] sm:$0xff]
      %v4327 = vsel %vm370, %v4290, 0
      %v4330 = vsel %vm370, %v4291, 0
      %v4333 = vsel %vm370, %v4292, 0
      %v4336 = vsel %vm370, %v4293, 0
      %v4339 = vsel %vm370, %v4294, 0
      %v4342 = vsel %vm370, %v4295, 0
      %v4345 = vsel %vm370, %v4296, 0
      %v4348 = vsel %vm370, %v4297, 0
      %v4351 = vsel %vm370, %v4298, 0
      %v4354 = vsel %vm370, %v4299, 0
      %v4357 = vsel %vm370, %v4300, 0
      %v4360 = vsel %vm370, %v4301, 0
      %v4363 = vsel %vm370, %v4302, 0
      %v4366 = vsel %vm370, %v4303, 0
      %v4369 = vsel %vm370, %v4304, 0
      %v4372 = vsel %vm370, %v4305, 0
      %v4375 = vsel %vm370, %v4306, 0
      %v4378 = vsel %vm370, %v4307, 0
      %v4381 = vsel %vm370, %v4308, 0
      %v4384 = vsel %vm370, %v4309, 0
      %v4387 = vsel %vm370, %v4310, 0
      %v4390 = vsel %vm370, %v4311, 0
      %v4393 = vsel %vm370, %v4312, 0
      %v4396 = vsel %vm370, %v4313, 0
      %v4399 = vsel %vm370, %v4314, 0
      %v4402 = vsel %vm370, %v4315, 0
      %v4405 = vsel %vm370, %v4316, 0
      %v4408 = vsel %vm370, %v4317, 0
      %v4411 = vsel %vm370, %v4318, 0
      %v4414 = vsel %vm370, %v4319, 0
      %v4417 = vsel %vm370, %v4320, 0
      %v4420 = vsel %vm370, %v4321, 0
      %4422 = vmatprep.subr.mxu0 0.0
      %4423 = vmatpush1.msra.mxu0 0.0
      %4424 = vmatprep.subr.mxu0 0.0
      %4425 = vmatpush1.msra.mxu0 0.0
      %4426 = vmatprep.subr.mxu0 0.0
      %4427 = vmatpush1.msra.mxu0 0.0
      %4428 = vmatprep.subr.mxu0 0.0
      %4429 = vmatpush1.msra.mxu0 0.0
      %4430 = vmatprep.subr.mxu0 0.0
      %4431 = vmatpush1.msra.mxu0 0.0
      %4432 = vmatprep.subr.mxu0 0.0
      %4433 = vmatpush1.msra.mxu0 0.0
      %4434 = vmatprep.subr.mxu0 0.0
      %4435 = vmatpush1.msra.mxu0 0.0
      %4436 = vmatprep.subr.mxu0 0.0
      %4437 = vmatpush1.msra.mxu0 0.0
      %4438 = vmatprep.subr.mxu0 0.0
      %4439 = vmatpush1.msra.mxu0 0.0
      %4440 = vmatprep.subr.mxu0 0.0
      %4441 = vmatpush1.msra.mxu0 0.0
      %4442 = vmatprep.subr.mxu0 0.0
      %4443 = vmatpush1.msra.mxu0 0.0
      %4444 = vmatprep.subr.mxu0 0.0
      %4445 = vmatpush1.msra.mxu0 0.0
      %4446 = vmatprep.subr.mxu0 0.0
      %4447 = vmatpush1.msra.mxu0 %v4325
      %4448 = vmatprep.subr.mxu0 0.0
      %4449 = vmatpush1.msra.mxu0 %v4324
      %4450 = vmatprep.subr.mxu0 0.0
      %4451 = vmatpush1.msra.mxu0 %v4323
      %4452 = vmatprep.subr.mxu0 0.0
      %4453 = vmatpush1.msra.mxu0 %v4322
      %4454 = vmatprep.subr.mxu0 0.0
      %4455 = vmatpush2.msra.mxu0 0.0
      %4456 = vmatprep.subr.mxu0 0.0
      %4457 = vmatpush2.msra.mxu0 0.0
      %4458 = vmatprep.subr.mxu0 0.0
      %4459 = vmatpush2.msra.mxu0 0.0
      %4460 = vmatprep.subr.mxu0 0.0
      %4461 = vmatpush2.msra.mxu0 0.0
      %4462 = vmatprep.subr.mxu0 0.0
      %4463 = vmatpush2.msra.mxu0 0.0
      %4464 = vmatprep.subr.mxu0 0.0
      %4465 = vmatpush2.msra.mxu0 0.0
      %4466 = vmatprep.subr.mxu0 0.0
      %4467 = vmatpush2.msra.mxu0 0.0
      %4468 = vmatprep.subr.mxu0 0.0
      %4469 = vmatpush2.msra.mxu0 0.0
      %4470 = vmatprep.subr.mxu0 0.0
      %4471 = vmatpush2.msra.mxu0 0.0
      %4472 = vmatprep.subr.mxu0 0.0
      %4473 = vmatpush2.msra.mxu0 0.0
      %4474 = vmatprep.subr.mxu0 0.0
      %4475 = vmatpush2.msra.mxu0 0.0
      %4476 = vmatprep.subr.mxu0 0.0
      %4477 = vmatpush2.msra.mxu0 0.0
      %4478 = vmatprep.subr.mxu0 0.0
      %4479 = vmatpush2.msra.mxu0 0.0
      %4480 = vmatprep.subr.mxu0 0.0
      %4481 = vmatpush2.msra.mxu0 0.0
      %4482 = vmatprep.subr.mxu0 0.0
      %4483 = vmatpush2.msra.mxu0 0.0
      %4484 = vmatprep.subr.mxu0 0.0
      %4485 = vmatpush2.msra.mxu0 0.0
      %4486 = vmatprep.mubr.f32.mxu0 0.0
      %4487 = vmatmul.mubr.f32.gmra.mxu0 %v4327
      %v4488 = vpop.f32.mrf.mxu0
      %v4489 = vadd.f32 0.0, %v4488
      %v4490 = vpop.f32.mrf.mxu0
      %4491 = vmatprep.mubr.f32.mxu0 0.0
      %4492 = vmatmul.mubr.f32.gmra.mxu0 %v4330
      %v4493 = vpop.f32.mrf.mxu0
      %v4494 = vadd.f32 0.0, %v4493
      %v4495 = vpop.f32.mrf.mxu0
      %4496 = vmatprep.mubr.f32.mxu0 0.0
      %4497 = vmatmul.mubr.f32.gmra.mxu0 %v4333
      %v4498 = vpop.f32.mrf.mxu0
      %v4499 = vadd.f32 0.0, %v4498
      %v4500 = vpop.f32.mrf.mxu0
      %4501 = vmatprep.mubr.f32.mxu0 0.0
      %4502 = vmatmul.mubr.f32.gmra.mxu0 %v4336
      %v4503 = vpop.f32.mrf.mxu0
      %v4504 = vadd.f32 0.0, %v4503
      %v4505 = vpop.f32.mrf.mxu0
      %4506 = vmatprep.mubr.f32.mxu0 0.0
      %4507 = vmatmul.mubr.f32.gmra.mxu0 %v4339
      %v4508 = vpop.f32.mrf.mxu0
      %v4509 = vadd.f32 0.0, %v4508
      %v4510 = vpop.f32.mrf.mxu0
      %4511 = vmatprep.mubr.f32.mxu0 0.0
      %4512 = vmatmul.mubr.f32.gmra.mxu0 %v4342
      %v4513 = vpop.f32.mrf.mxu0
      %v4514 = vadd.f32 0.0, %v4513
      %v4515 = vpop.f32.mrf.mxu0
      %4516 = vmatprep.mubr.f32.mxu0 0.0
      %4517 = vmatmul.mubr.f32.gmra.mxu0 %v4345
      %v4518 = vpop.f32.mrf.mxu0
      %v4519 = vadd.f32 0.0, %v4518
      %v4520 = vpop.f32.mrf.mxu0
      %4521 = vmatprep.mubr.f32.mxu0 0.0
      %4522 = vmatmul.mubr.f32.gmra.mxu0 %v4348
      %v4523 = vpop.f32.mrf.mxu0
      %v4524 = vadd.f32 0.0, %v4523
      %v4525 = vpop.f32.mrf.mxu0
      %4526 = vmatprep.mubr.f32.mxu0 0.0
      %4527 = vmatmul.mubr.f32.gmra.mxu0 %v4351
      %v4528 = vpop.f32.mrf.mxu0
      %v4529 = vadd.f32 0.0, %v4528
      %v4530 = vpop.f32.mrf.mxu0
      %4531 = vmatprep.mubr.f32.mxu0 0.0
      %4532 = vmatmul.mubr.f32.gmra.mxu0 %v4354
      %v4533 = vpop.f32.mrf.mxu0
      %v4534 = vadd.f32 0.0, %v4533
      %v4535 = vpop.f32.mrf.mxu0
      %4536 = vmatprep.mubr.f32.mxu0 0.0
      %4537 = vmatmul.mubr.f32.gmra.mxu0 %v4357
      %v4538 = vpop.f32.mrf.mxu0
      %v4539 = vadd.f32 0.0, %v4538
      %v4540 = vpop.f32.mrf.mxu0
      %4541 = vmatprep.mubr.f32.mxu0 0.0
      %4542 = vmatmul.mubr.f32.gmra.mxu0 %v4360
      %v4543 = vpop.f32.mrf.mxu0
      %v4544 = vadd.f32 0.0, %v4543
      %v4545 = vpop.f32.mrf.mxu0
      %4546 = vmatprep.mubr.f32.mxu0 0.0
      %4547 = vmatmul.mubr.f32.gmra.mxu0 %v4363
      %v4548 = vpop.f32.mrf.mxu0
      %v4549 = vadd.f32 0.0, %v4548
      %v4550 = vpop.f32.mrf.mxu0
      %4551 = vmatprep.mubr.f32.mxu0 0.0
      %4552 = vmatmul.mubr.f32.gmra.mxu0 %v4366
      %v4553 = vpop.f32.mrf.mxu0
      %v4554 = vadd.f32 0.0, %v4553
      %v4555 = vpop.f32.mrf.mxu0
      %4556 = vmatprep.mubr.f32.mxu0 0.0
      %4557 = vmatmul.mubr.f32.gmra.mxu0 %v4369
      %v4558 = vpop.f32.mrf.mxu0
      %v4559 = vadd.f32 0.0, %v4558
      %v4560 = vpop.f32.mrf.mxu0
      %4561 = vmatprep.mubr.f32.mxu0 0.0
      %4562 = vmatmul.mubr.f32.gmra.mxu0 %v4372
      %v4563 = vpop.f32.mrf.mxu0
      %v4564 = vadd.f32 0.0, %v4563
      %v4565 = vpop.f32.mrf.mxu0
      %4566 = vmatprep.mubr.f32.mxu0 0.0
      %4567 = vmatmul.mubr.f32.gmra.mxu0 %v4375
      %v4568 = vpop.f32.mrf.mxu0
      %v4569 = vadd.f32 0.0, %v4568
      %v4570 = vpop.f32.mrf.mxu0
      %4571 = vmatprep.mubr.f32.mxu0 0.0
      %4572 = vmatmul.mubr.f32.gmra.mxu0 %v4378
      %v4573 = vpop.f32.mrf.mxu0
      %v4574 = vadd.f32 0.0, %v4573
      %v4575 = vpop.f32.mrf.mxu0
      %4576 = vmatprep.mubr.f32.mxu0 0.0
      %4577 = vmatmul.mubr.f32.gmra.mxu0 %v4381
      %v4578 = vpop.f32.mrf.mxu0
      %v4579 = vadd.f32 0.0, %v4578
      %v4580 = vpop.f32.mrf.mxu0
      %4581 = vmatprep.mubr.f32.mxu0 0.0
      %4582 = vmatmul.mubr.f32.gmra.mxu0 %v4384
      %v4583 = vpop.f32.mrf.mxu0
      %v4584 = vadd.f32 0.0, %v4583
      %v4585 = vpop.f32.mrf.mxu0
      %4586 = vmatprep.mubr.f32.mxu0 0.0
      %4587 = vmatmul.mubr.f32.gmra.mxu0 %v4387
      %v4588 = vpop.f32.mrf.mxu0
      %v4589 = vadd.f32 0.0, %v4588
      %v4590 = vpop.f32.mrf.mxu0
      %4591 = vmatprep.mubr.f32.mxu0 0.0
      %4592 = vmatmul.mubr.f32.gmra.mxu0 %v4390
      %v4593 = vpop.f32.mrf.mxu0
      %v4594 = vadd.f32 0.0, %v4593
      %v4595 = vpop.f32.mrf.mxu0
      %4596 = vmatprep.mubr.f32.mxu0 0.0
      %4597 = vmatmul.mubr.f32.gmra.mxu0 %v4393
      %v4598 = vpop.f32.mrf.mxu0
      %v4599 = vadd.f32 0.0, %v4598
      %v4600 = vpop.f32.mrf.mxu0
      %4601 = vmatprep.mubr.f32.mxu0 0.0
      %4602 = vmatmul.mubr.f32.gmra.mxu0 %v4396
      %v4603 = vpop.f32.mrf.mxu0
      %v4604 = vadd.f32 0.0, %v4603
      %v4605 = vpop.f32.mrf.mxu0
      %4606 = vmatprep.mubr.f32.mxu0 0.0
      %4607 = vmatmul.mubr.f32.gmra.mxu0 %v4399
      %v4608 = vpop.f32.mrf.mxu0
      %v4609 = vadd.f32 0.0, %v4608
      %v4610 = vpop.f32.mrf.mxu0
      %4611 = vmatprep.mubr.f32.mxu0 0.0
      %4612 = vmatmul.mubr.f32.gmra.mxu0 %v4402
      %v4613 = vpop.f32.mrf.mxu0
      %v4614 = vadd.f32 0.0, %v4613
      %v4615 = vpop.f32.mrf.mxu0
      %4616 = vmatprep.mubr.f32.mxu0 0.0
      %4617 = vmatmul.mubr.f32.gmra.mxu0 %v4405
      %v4618 = vpop.f32.mrf.mxu0
      %v4619 = vadd.f32 0.0, %v4618
      %v4620 = vpop.f32.mrf.mxu0
      %4621 = vmatprep.mubr.f32.mxu0 0.0
      %4622 = vmatmul.mubr.f32.gmra.mxu0 %v4408
      %v4623 = vpop.f32.mrf.mxu0
      %v4624 = vadd.f32 0.0, %v4623
      %v4625 = vpop.f32.mrf.mxu0
      %4626 = vmatprep.mubr.f32.mxu0 0.0
      %4627 = vmatmul.mubr.f32.gmra.mxu0 %v4411
      %v4628 = vpop.f32.mrf.mxu0
      %v4629 = vadd.f32 0.0, %v4628
      %v4630 = vpop.f32.mrf.mxu0
      %4631 = vmatprep.mubr.f32.mxu0 0.0
      %4632 = vmatmul.mubr.f32.gmra.mxu0 %v4414
      %v4633 = vpop.f32.mrf.mxu0
      %v4634 = vadd.f32 0.0, %v4633
      %v4635 = vpop.f32.mrf.mxu0
      %4636 = vmatprep.mubr.f32.mxu0 0.0
      %4637 = vmatmul.mubr.f32.gmra.mxu0 %v4417
      %v4638 = vpop.f32.mrf.mxu0
      %v4639 = vadd.f32 0.0, %v4638
      %v4640 = vpop.f32.mrf.mxu0
      %4641 = vmatprep.mubr.f32.mxu0 0.0
      %4642 = vmatmul.mubr.f32.gmra.mxu0 %v4420
      %v4643 = vpop.f32.mrf.mxu0
      %v4644 = vadd.f32 0.0, %v4643
      %v4645 = vpop.f32.mrf.mxu0
      %4646 = vdwg.mxu0
      %v4647 = vadd.f32 %v4226, %v4489
      %v4648 = vadd.f32 %v4227, %v4494
      %v4649 = vadd.f32 %v4228, %v4499
      %v4650 = vadd.f32 %v4229, %v4504
      %v4651 = vadd.f32 %v4230, %v4509
      %v4652 = vadd.f32 %v4231, %v4514
      %v4653 = vadd.f32 %v4232, %v4519
      %v4654 = vadd.f32 %v4233, %v4524
      %v4655 = vadd.f32 %v4234, %v4529
      %v4656 = vadd.f32 %v4235, %v4534
      %v4657 = vadd.f32 %v4236, %v4539
      %v4658 = vadd.f32 %v4237, %v4544
      %v4659 = vadd.f32 %v4238, %v4549
      %v4660 = vadd.f32 %v4239, %v4554
      %v4661 = vadd.f32 %v4240, %v4559
      %v4662 = vadd.f32 %v4241, %v4564
      %v4663 = vadd.f32 %v4242, %v4569
      %v4664 = vadd.f32 %v4243, %v4574
      %v4665 = vadd.f32 %v4244, %v4579
      %v4666 = vadd.f32 %v4245, %v4584
      %v4667 = vadd.f32 %v4246, %v4589
      %v4668 = vadd.f32 %v4247, %v4594
      %v4669 = vadd.f32 %v4248, %v4599
      %v4670 = vadd.f32 %v4249, %v4604
      %v4671 = vadd.f32 %v4250, %v4609
      %v4672 = vadd.f32 %v4251, %v4614
      %v4673 = vadd.f32 %v4252, %v4619
      %v4674 = vadd.f32 %v4253, %v4624
      %v4675 = vadd.f32 %v4254, %v4629
      %v4676 = vadd.f32 %v4255, %v4634
      %v4677 = vadd.f32 %v4256, %v4639
      %v4678 = vadd.f32 %v4257, %v4644
      %v4679 = vld [vmem:[#allocation2 + $0x27] sm:$0xff]
      %v4680 = vld [vmem:[#allocation2 + $0x2f] sm:$0xff]
      %v4681 = vld [vmem:[#allocation2 + $0x37] sm:$0xff]
      %v4682 = vld [vmem:[#allocation2 + $0x3f] sm:$0xff]
      %v4683 = vld [vmem:[#allocation2 + $0x47] sm:$0xff]
      %v4684 = vld [vmem:[#allocation2 + $0x4f] sm:$0xff]
      %v4685 = vld [vmem:[#allocation2 + $0x57] sm:$0xff]
      %v4686 = vld [vmem:[#allocation2 + $0x5f] sm:$0xff]
      %v4687 = vld [vmem:[#allocation2 + $0x67] sm:$0xff]
      %v4688 = vld [vmem:[#allocation2 + $0x6f] sm:$0xff]
      %v4689 = vld [vmem:[#allocation2 + $0x77] sm:$0xff]
      %v4690 = vld [vmem:[#allocation2 + $0x7f] sm:$0xff]
      %v4691 = vld [vmem:[#allocation2 + $0x87] sm:$0xff]
      %v4692 = vld [vmem:[#allocation2 + $0x8f] sm:$0xff]
      %v4693 = vld [vmem:[#allocation2 + $0x97] sm:$0xff]
      %v4694 = vld [vmem:[#allocation2 + $0x9f] sm:$0xff]
      %v4695 = vld [vmem:[#allocation2 + $0xa7] sm:$0xff]
      %v4696 = vld [vmem:[#allocation2 + $0xaf] sm:$0xff]
      %v4697 = vld [vmem:[#allocation2 + $0xb7] sm:$0xff]
      %v4698 = vld [vmem:[#allocation2 + $0xbf] sm:$0xff]
      %v4699 = vld [vmem:[#allocation2 + $0xc7] sm:$0xff]
      %v4700 = vld [vmem:[#allocation2 + $0xcf] sm:$0xff]
      %v4701 = vld [vmem:[#allocation2 + $0xd7] sm:$0xff]
      %v4702 = vld [vmem:[#allocation2 + $0xdf] sm:$0xff]
      %v4703 = vld [vmem:[#allocation2 + $0xe7] sm:$0xff]
      %v4704 = vld [vmem:[#allocation2 + $0xef] sm:$0xff]
      %v4705 = vld [vmem:[#allocation2 + $0xf7] sm:$0xff]
      %v4706 = vld [vmem:[#allocation2 + $0xff] sm:$0xff]
      %v4707 = vld [vmem:[#allocation2 + $0x107] sm:$0xff]
      %v4708 = vld [vmem:[#allocation2 + $0x10f] sm:$0xff]
      %v4709 = vld [vmem:[#allocation2 + $0x117] sm:$0xff]
      %v4710 = vld [vmem:[#allocation2 + $0x11f] sm:$0xff]
      %v4711 = vsel %vm2217, %v4679, 0.0
      %v4712 = vsel %vm2218, %v4680, 0.0
      %v4713 = vsel %vm2219, %v4681, 0.0
      %v4714 = vsel %vm2220, %v4682, 0.0
      %v4715 = vsel %vm2221, %v4683, 0.0
      %v4716 = vsel %vm2222, %v4684, 0.0
      %v4717 = vsel %vm2223, %v4685, 0.0
      %v4718 = vsel %vm2224, %v4686, 0.0
      %v4719 = vsel %vm2225, %v4687, 0.0
      %v4720 = vsel %vm2226, %v4688, 0.0
      %v4721 = vsel %vm2227, %v4689, 0.0
      %v4722 = vsel %vm2228, %v4690, 0.0
      %v4723 = vsel %vm2229, %v4691, 0.0
      %v4724 = vsel %vm2230, %v4692, 0.0
      %v4725 = vsel %vm2231, %v4693, 0.0
      %v4726 = vsel %vm2232, %v4694, 0.0
      %v4727 = vsel %vm2233, %v4695, 0.0
      %v4728 = vsel %vm2234, %v4696, 0.0
      %v4729 = vsel %vm2235, %v4697, 0.0
      %v4730 = vsel %vm2236, %v4698, 0.0
      %v4731 = vsel %vm2237, %v4699, 0.0
      %v4732 = vsel %vm2238, %v4700, 0.0
      %v4733 = vsel %vm2239, %v4701, 0.0
      %v4734 = vsel %vm2240, %v4702, 0.0
      %v4735 = vsel %vm2241, %v4703, 0.0
      %v4736 = vsel %vm2242, %v4704, 0.0
      %v4737 = vsel %vm2243, %v4705, 0.0
      %v4738 = vsel %vm2244, %v4706, 0.0
      %v4739 = vsel %vm2245, %v4707, 0.0
      %v4740 = vsel %vm2246, %v4708, 0.0
      %v4741 = vsel %vm2247, %v4709, 0.0
      %v4742 = vsel %vm2248, %v4710, 0.0
      %v4743 = vld [vmem:[%s6 + $0xc0] sm:$0xff]
      %v4744 = vld [vmem:[%s6 + $0xc8] sm:$0xff]
      %v4745 = vld [vmem:[%s6 + $0xd0] sm:$0xff]
      %v4746 = vld [vmem:[%s6 + $0xd8] sm:$0xff]
      %v4748 = vsel %vm370, %v4711, 0
      %v4751 = vsel %vm370, %v4712, 0
      %v4754 = vsel %vm370, %v4713, 0
      %v4757 = vsel %vm370, %v4714, 0
      %v4760 = vsel %vm370, %v4715, 0
      %v4763 = vsel %vm370, %v4716, 0
      %v4766 = vsel %vm370, %v4717, 0
      %v4769 = vsel %vm370, %v4718, 0
      %v4772 = vsel %vm370, %v4719, 0
      %v4775 = vsel %vm370, %v4720, 0
      %v4778 = vsel %vm370, %v4721, 0
      %v4781 = vsel %vm370, %v4722, 0
      %v4784 = vsel %vm370, %v4723, 0
      %v4787 = vsel %vm370, %v4724, 0
      %v4790 = vsel %vm370, %v4725, 0
      %v4793 = vsel %vm370, %v4726, 0
      %v4796 = vsel %vm370, %v4727, 0
      %v4799 = vsel %vm370, %v4728, 0
      %v4802 = vsel %vm370, %v4729, 0
      %v4805 = vsel %vm370, %v4730, 0
      %v4808 = vsel %vm370, %v4731, 0
      %v4811 = vsel %vm370, %v4732, 0
      %v4814 = vsel %vm370, %v4733, 0
      %v4817 = vsel %vm370, %v4734, 0
      %v4820 = vsel %vm370, %v4735, 0
      %v4823 = vsel %vm370, %v4736, 0
      %v4826 = vsel %vm370, %v4737, 0
      %v4829 = vsel %vm370, %v4738, 0
      %v4832 = vsel %vm370, %v4739, 0
      %v4835 = vsel %vm370, %v4740, 0
      %v4838 = vsel %vm370, %v4741, 0
      %v4841 = vsel %vm370, %v4742, 0
      %4843 = vmatprep.subr.mxu0 0.0
      %4844 = vmatpush1.msra.mxu0 0.0
      %4845 = vmatprep.subr.mxu0 0.0
      %4846 = vmatpush1.msra.mxu0 0.0
      %4847 = vmatprep.subr.mxu0 0.0
      %4848 = vmatpush1.msra.mxu0 0.0
      %4849 = vmatprep.subr.mxu0 0.0
      %4850 = vmatpush1.msra.mxu0 0.0
      %4851 = vmatprep.subr.mxu0 0.0
      %4852 = vmatpush1.msra.mxu0 0.0
      %4853 = vmatprep.subr.mxu0 0.0
      %4854 = vmatpush1.msra.mxu0 0.0
      %4855 = vmatprep.subr.mxu0 0.0
      %4856 = vmatpush1.msra.mxu0 0.0
      %4857 = vmatprep.subr.mxu0 0.0
      %4858 = vmatpush1.msra.mxu0 0.0
      %4859 = vmatprep.subr.mxu0 0.0
      %4860 = vmatpush1.msra.mxu0 0.0
      %4861 = vmatprep.subr.mxu0 0.0
      %4862 = vmatpush1.msra.mxu0 0.0
      %4863 = vmatprep.subr.mxu0 0.0
      %4864 = vmatpush1.msra.mxu0 0.0
      %4865 = vmatprep.subr.mxu0 0.0
      %4866 = vmatpush1.msra.mxu0 0.0
      %4867 = vmatprep.subr.mxu0 0.0
      %4868 = vmatpush1.msra.mxu0 %v4746
      %4869 = vmatprep.subr.mxu0 0.0
      %4870 = vmatpush1.msra.mxu0 %v4745
      %4871 = vmatprep.subr.mxu0 0.0
      %4872 = vmatpush1.msra.mxu0 %v4744
      %4873 = vmatprep.subr.mxu0 0.0
      %4874 = vmatpush1.msra.mxu0 %v4743
      %4875 = vmatprep.subr.mxu0 0.0
      %4876 = vmatpush2.msra.mxu0 0.0
      %4877 = vmatprep.subr.mxu0 0.0
      %4878 = vmatpush2.msra.mxu0 0.0
      %4879 = vmatprep.subr.mxu0 0.0
      %4880 = vmatpush2.msra.mxu0 0.0
      %4881 = vmatprep.subr.mxu0 0.0
      %4882 = vmatpush2.msra.mxu0 0.0
      %4883 = vmatprep.subr.mxu0 0.0
      %4884 = vmatpush2.msra.mxu0 0.0
      %4885 = vmatprep.subr.mxu0 0.0
      %4886 = vmatpush2.msra.mxu0 0.0
      %4887 = vmatprep.subr.mxu0 0.0
      %4888 = vmatpush2.msra.mxu0 0.0
      %4889 = vmatprep.subr.mxu0 0.0
      %4890 = vmatpush2.msra.mxu0 0.0
      %4891 = vmatprep.subr.mxu0 0.0
      %4892 = vmatpush2.msra.mxu0 0.0
      %4893 = vmatprep.subr.mxu0 0.0
      %4894 = vmatpush2.msra.mxu0 0.0
      %4895 = vmatprep.subr.mxu0 0.0
      %4896 = vmatpush2.msra.mxu0 0.0
      %4897 = vmatprep.subr.mxu0 0.0
      %4898 = vmatpush2.msra.mxu0 0.0
      %4899 = vmatprep.subr.mxu0 0.0
      %4900 = vmatpush2.msra.mxu0 0.0
      %4901 = vmatprep.subr.mxu0 0.0
      %4902 = vmatpush2.msra.mxu0 0.0
      %4903 = vmatprep.subr.mxu0 0.0
      %4904 = vmatpush2.msra.mxu0 0.0
      %4905 = vmatprep.subr.mxu0 0.0
      %4906 = vmatpush2.msra.mxu0 0.0
      %4907 = vmatprep.mubr.f32.mxu0 0.0
      %4908 = vmatmul.mubr.f32.gmra.mxu0 %v4748
      %v4909 = vpop.f32.mrf.mxu0
      %v4910 = vadd.f32 0.0, %v4909
      %v4911 = vpop.f32.mrf.mxu0
      %4912 = vmatprep.mubr.f32.mxu0 0.0
      %4913 = vmatmul.mubr.f32.gmra.mxu0 %v4751
      %v4914 = vpop.f32.mrf.mxu0
      %v4915 = vadd.f32 0.0, %v4914
      %v4916 = vpop.f32.mrf.mxu0
      %4917 = vmatprep.mubr.f32.mxu0 0.0
      %4918 = vmatmul.mubr.f32.gmra.mxu0 %v4754
      %v4919 = vpop.f32.mrf.mxu0
      %v4920 = vadd.f32 0.0, %v4919
      %v4921 = vpop.f32.mrf.mxu0
      %4922 = vmatprep.mubr.f32.mxu0 0.0
      %4923 = vmatmul.mubr.f32.gmra.mxu0 %v4757
      %v4924 = vpop.f32.mrf.mxu0
      %v4925 = vadd.f32 0.0, %v4924
      %v4926 = vpop.f32.mrf.mxu0
      %4927 = vmatprep.mubr.f32.mxu0 0.0
      %4928 = vmatmul.mubr.f32.gmra.mxu0 %v4760
      %v4929 = vpop.f32.mrf.mxu0
      %v4930 = vadd.f32 0.0, %v4929
      %v4931 = vpop.f32.mrf.mxu0
      %4932 = vmatprep.mubr.f32.mxu0 0.0
      %4933 = vmatmul.mubr.f32.gmra.mxu0 %v4763
      %v4934 = vpop.f32.mrf.mxu0
      %v4935 = vadd.f32 0.0, %v4934
      %v4936 = vpop.f32.mrf.mxu0
      %4937 = vmatprep.mubr.f32.mxu0 0.0
      %4938 = vmatmul.mubr.f32.gmra.mxu0 %v4766
      %v4939 = vpop.f32.mrf.mxu0
      %v4940 = vadd.f32 0.0, %v4939
      %v4941 = vpop.f32.mrf.mxu0
      %4942 = vmatprep.mubr.f32.mxu0 0.0
      %4943 = vmatmul.mubr.f32.gmra.mxu0 %v4769
      %v4944 = vpop.f32.mrf.mxu0
      %v4945 = vadd.f32 0.0, %v4944
      %v4946 = vpop.f32.mrf.mxu0
      %4947 = vmatprep.mubr.f32.mxu0 0.0
      %4948 = vmatmul.mubr.f32.gmra.mxu0 %v4772
      %v4949 = vpop.f32.mrf.mxu0
      %v4950 = vadd.f32 0.0, %v4949
      %v4951 = vpop.f32.mrf.mxu0
      %4952 = vmatprep.mubr.f32.mxu0 0.0
      %4953 = vmatmul.mubr.f32.gmra.mxu0 %v4775
      %v4954 = vpop.f32.mrf.mxu0
      %v4955 = vadd.f32 0.0, %v4954
      %v4956 = vpop.f32.mrf.mxu0
      %4957 = vmatprep.mubr.f32.mxu0 0.0
      %4958 = vmatmul.mubr.f32.gmra.mxu0 %v4778
      %v4959 = vpop.f32.mrf.mxu0
      %v4960 = vadd.f32 0.0, %v4959
      %v4961 = vpop.f32.mrf.mxu0
      %4962 = vmatprep.mubr.f32.mxu0 0.0
      %4963 = vmatmul.mubr.f32.gmra.mxu0 %v4781
      %v4964 = vpop.f32.mrf.mxu0
      %v4965 = vadd.f32 0.0, %v4964
      %v4966 = vpop.f32.mrf.mxu0
      %4967 = vmatprep.mubr.f32.mxu0 0.0
      %4968 = vmatmul.mubr.f32.gmra.mxu0 %v4784
      %v4969 = vpop.f32.mrf.mxu0
      %v4970 = vadd.f32 0.0, %v4969
      %v4971 = vpop.f32.mrf.mxu0
      %4972 = vmatprep.mubr.f32.mxu0 0.0
      %4973 = vmatmul.mubr.f32.gmra.mxu0 %v4787
      %v4974 = vpop.f32.mrf.mxu0
      %v4975 = vadd.f32 0.0, %v4974
      %v4976 = vpop.f32.mrf.mxu0
      %4977 = vmatprep.mubr.f32.mxu0 0.0
      %4978 = vmatmul.mubr.f32.gmra.mxu0 %v4790
      %v4979 = vpop.f32.mrf.mxu0
      %v4980 = vadd.f32 0.0, %v4979
      %v4981 = vpop.f32.mrf.mxu0
      %4982 = vmatprep.mubr.f32.mxu0 0.0
      %4983 = vmatmul.mubr.f32.gmra.mxu0 %v4793
      %v4984 = vpop.f32.mrf.mxu0
      %v4985 = vadd.f32 0.0, %v4984
      %v4986 = vpop.f32.mrf.mxu0
      %4987 = vmatprep.mubr.f32.mxu0 0.0
      %4988 = vmatmul.mubr.f32.gmra.mxu0 %v4796
      %v4989 = vpop.f32.mrf.mxu0
      %v4990 = vadd.f32 0.0, %v4989
      %v4991 = vpop.f32.mrf.mxu0
      %4992 = vmatprep.mubr.f32.mxu0 0.0
      %4993 = vmatmul.mubr.f32.gmra.mxu0 %v4799
      %v4994 = vpop.f32.mrf.mxu0
      %v4995 = vadd.f32 0.0, %v4994
      %v4996 = vpop.f32.mrf.mxu0
      %4997 = vmatprep.mubr.f32.mxu0 0.0
      %4998 = vmatmul.mubr.f32.gmra.mxu0 %v4802
      %v4999 = vpop.f32.mrf.mxu0
      %v5000 = vadd.f32 0.0, %v4999
      %v5001 = vpop.f32.mrf.mxu0
      %5002 = vmatprep.mubr.f32.mxu0 0.0
      %5003 = vmatmul.mubr.f32.gmra.mxu0 %v4805
      %v5004 = vpop.f32.mrf.mxu0
      %v5005 = vadd.f32 0.0, %v5004
      %v5006 = vpop.f32.mrf.mxu0
      %5007 = vmatprep.mubr.f32.mxu0 0.0
      %5008 = vmatmul.mubr.f32.gmra.mxu0 %v4808
      %v5009 = vpop.f32.mrf.mxu0
      %v5010 = vadd.f32 0.0, %v5009
      %v5011 = vpop.f32.mrf.mxu0
      %5012 = vmatprep.mubr.f32.mxu0 0.0
      %5013 = vmatmul.mubr.f32.gmra.mxu0 %v4811
      %v5014 = vpop.f32.mrf.mxu0
      %v5015 = vadd.f32 0.0, %v5014
      %v5016 = vpop.f32.mrf.mxu0
      %5017 = vmatprep.mubr.f32.mxu0 0.0
      %5018 = vmatmul.mubr.f32.gmra.mxu0 %v4814
      %v5019 = vpop.f32.mrf.mxu0
      %v5020 = vadd.f32 0.0, %v5019
      %v5021 = vpop.f32.mrf.mxu0
      %5022 = vmatprep.mubr.f32.mxu0 0.0
      %5023 = vmatmul.mubr.f32.gmra.mxu0 %v4817
      %v5024 = vpop.f32.mrf.mxu0
      %v5025 = vadd.f32 0.0, %v5024
      %v5026 = vpop.f32.mrf.mxu0
      %5027 = vmatprep.mubr.f32.mxu0 0.0
      %5028 = vmatmul.mubr.f32.gmra.mxu0 %v4820
      %v5029 = vpop.f32.mrf.mxu0
      %v5030 = vadd.f32 0.0, %v5029
      %v5031 = vpop.f32.mrf.mxu0
      %5032 = vmatprep.mubr.f32.mxu0 0.0
      %5033 = vmatmul.mubr.f32.gmra.mxu0 %v4823
      %v5034 = vpop.f32.mrf.mxu0
      %v5035 = vadd.f32 0.0, %v5034
      %v5036 = vpop.f32.mrf.mxu0
      %5037 = vmatprep.mubr.f32.mxu0 0.0
      %5038 = vmatmul.mubr.f32.gmra.mxu0 %v4826
      %v5039 = vpop.f32.mrf.mxu0
      %v5040 = vadd.f32 0.0, %v5039
      %v5041 = vpop.f32.mrf.mxu0
      %5042 = vmatprep.mubr.f32.mxu0 0.0
      %5043 = vmatmul.mubr.f32.gmra.mxu0 %v4829
      %v5044 = vpop.f32.mrf.mxu0
      %v5045 = vadd.f32 0.0, %v5044
      %v5046 = vpop.f32.mrf.mxu0
      %5047 = vmatprep.mubr.f32.mxu0 0.0
      %5048 = vmatmul.mubr.f32.gmra.mxu0 %v4832
      %v5049 = vpop.f32.mrf.mxu0
      %v5050 = vadd.f32 0.0, %v5049
      %v5051 = vpop.f32.mrf.mxu0
      %5052 = vmatprep.mubr.f32.mxu0 0.0
      %5053 = vmatmul.mubr.f32.gmra.mxu0 %v4835
      %v5054 = vpop.f32.mrf.mxu0
      %v5055 = vadd.f32 0.0, %v5054
      %v5056 = vpop.f32.mrf.mxu0
      %5057 = vmatprep.mubr.f32.mxu0 0.0
      %5058 = vmatmul.mubr.f32.gmra.mxu0 %v4838
      %v5059 = vpop.f32.mrf.mxu0
      %v5060 = vadd.f32 0.0, %v5059
      %v5061 = vpop.f32.mrf.mxu0
      %5062 = vmatprep.mubr.f32.mxu0 0.0
      %5063 = vmatmul.mubr.f32.gmra.mxu0 %v4841
      %v5064 = vpop.f32.mrf.mxu0
      %v5065 = vadd.f32 0.0, %v5064
      %v5066 = vpop.f32.mrf.mxu0
      %5067 = vdwg.mxu0
      %v5068 = vadd.f32 %v4647, %v4910
      %v5069 = vadd.f32 %v4648, %v4915
      %v5070 = vadd.f32 %v4649, %v4920
      %v5071 = vadd.f32 %v4650, %v4925
      %v5072 = vadd.f32 %v4651, %v4930
      %v5073 = vadd.f32 %v4652, %v4935
      %v5074 = vadd.f32 %v4653, %v4940
      %v5075 = vadd.f32 %v4654, %v4945
      %v5076 = vadd.f32 %v4655, %v4950
      %v5077 = vadd.f32 %v4656, %v4955
      %v5078 = vadd.f32 %v4657, %v4960
      %v5079 = vadd.f32 %v4658, %v4965
      %v5080 = vadd.f32 %v4659, %v4970
      %v5081 = vadd.f32 %v4660, %v4975
      %v5082 = vadd.f32 %v4661, %v4980
      %v5083 = vadd.f32 %v4662, %v4985
      %v5084 = vadd.f32 %v4663, %v4990
      %v5085 = vadd.f32 %v4664, %v4995
      %v5086 = vadd.f32 %v4665, %v5000
      %v5087 = vadd.f32 %v4666, %v5005
      %v5088 = vadd.f32 %v4667, %v5010
      %v5089 = vadd.f32 %v4668, %v5015
      %v5090 = vadd.f32 %v4669, %v5020
      %v5091 = vadd.f32 %v4670, %v5025
      %v5092 = vadd.f32 %v4671, %v5030
      %v5093 = vadd.f32 %v4672, %v5035
      %v5094 = vadd.f32 %v4673, %v5040
      %v5095 = vadd.f32 %v4674, %v5045
      %v5096 = vadd.f32 %v4675, %v5050
      %v5097 = vadd.f32 %v4676, %v5055
      %v5098 = vadd.f32 %v4677, %v5060
      %v5099 = vadd.f32 %v4678, %v5065
      %v5100 = vld [vmem:[#allocation2 + $0x28] sm:$0xff]
      %v5101 = vld [vmem:[#allocation2 + $0x30] sm:$0xff]
      %v5102 = vld [vmem:[#allocation2 + $0x38] sm:$0xff]
      %v5103 = vld [vmem:[#allocation2 + $0x40] sm:$0xff]
      %v5104 = vld [vmem:[#allocation2 + $0x48] sm:$0xff]
      %v5105 = vld [vmem:[#allocation2 + $0x50] sm:$0xff]
      %v5106 = vld [vmem:[#allocation2 + $0x58] sm:$0xff]
      %v5107 = vld [vmem:[#allocation2 + $0x60] sm:$0xff]
      %v5108 = vld [vmem:[#allocation2 + $0x68] sm:$0xff]
      %v5109 = vld [vmem:[#allocation2 + $0x70] sm:$0xff]
      %v5110 = vld [vmem:[#allocation2 + $0x78] sm:$0xff]
      %v5111 = vld [vmem:[#allocation2 + $0x80] sm:$0xff]
      %v5112 = vld [vmem:[#allocation2 + $0x88] sm:$0xff]
      %v5113 = vld [vmem:[#allocation2 + $0x90] sm:$0xff]
      %v5114 = vld [vmem:[#allocation2 + $0x98] sm:$0xff]
      %v5115 = vld [vmem:[#allocation2 + $0xa0] sm:$0xff]
      %v5116 = vld [vmem:[#allocation2 + $0xa8] sm:$0xff]
      %v5117 = vld [vmem:[#allocation2 + $0xb0] sm:$0xff]
      %v5118 = vld [vmem:[#allocation2 + $0xb8] sm:$0xff]
      %v5119 = vld [vmem:[#allocation2 + $0xc0] sm:$0xff]
      %v5120 = vld [vmem:[#allocation2 + $0xc8] sm:$0xff]
      %v5121 = vld [vmem:[#allocation2 + $0xd0] sm:$0xff]
      %v5122 = vld [vmem:[#allocation2 + $0xd8] sm:$0xff]
      %v5123 = vld [vmem:[#allocation2 + $0xe0] sm:$0xff]
      %v5124 = vld [vmem:[#allocation2 + $0xe8] sm:$0xff]
      %v5125 = vld [vmem:[#allocation2 + $0xf0] sm:$0xff]
      %v5126 = vld [vmem:[#allocation2 + $0xf8] sm:$0xff]
      %v5127 = vld [vmem:[#allocation2 + $0x100] sm:$0xff]
      %v5128 = vld [vmem:[#allocation2 + $0x108] sm:$0xff]
      %v5129 = vld [vmem:[#allocation2 + $0x110] sm:$0xff]
      %v5130 = vld [vmem:[#allocation2 + $0x118] sm:$0xff]
      %v5131 = vld [vmem:[#allocation2 + $0x120] sm:$0xff]
      %v5132 = vld [vmem:[%s6 + $0xe0] sm:$0xff]
      %v5133 = vld [vmem:[%s6 + $0xe8] sm:$0xff]
      %v5134 = vld [vmem:[%s6 + $0xf0] sm:$0xff]
      %v5135 = vld [vmem:[%s6 + $0xf8] sm:$0xff]
      %v5137 = vsel %vm370, %v5100, 0
      %v5140 = vsel %vm370, %v5101, 0
      %v5143 = vsel %vm370, %v5102, 0
      %v5146 = vsel %vm370, %v5103, 0
      %v5149 = vsel %vm370, %v5104, 0
      %v5152 = vsel %vm370, %v5105, 0
      %v5155 = vsel %vm370, %v5106, 0
      %v5158 = vsel %vm370, %v5107, 0
      %v5161 = vsel %vm370, %v5108, 0
      %v5164 = vsel %vm370, %v5109, 0
      %v5167 = vsel %vm370, %v5110, 0
      %v5170 = vsel %vm370, %v5111, 0
      %v5173 = vsel %vm370, %v5112, 0
      %v5176 = vsel %vm370, %v5113, 0
      %v5179 = vsel %vm370, %v5114, 0
      %v5182 = vsel %vm370, %v5115, 0
      %v5185 = vsel %vm370, %v5116, 0
      %v5188 = vsel %vm370, %v5117, 0
      %v5191 = vsel %vm370, %v5118, 0
      %v5194 = vsel %vm370, %v5119, 0
      %v5197 = vsel %vm370, %v5120, 0
      %v5200 = vsel %vm370, %v5121, 0
      %v5203 = vsel %vm370, %v5122, 0
      %v5206 = vsel %vm370, %v5123, 0
      %v5209 = vsel %vm370, %v5124, 0
      %v5212 = vsel %vm370, %v5125, 0
      %v5215 = vsel %vm370, %v5126, 0
      %v5218 = vsel %vm370, %v5127, 0
      %v5221 = vsel %vm370, %v5128, 0
      %v5224 = vsel %vm370, %v5129, 0
      %v5227 = vsel %vm370, %v5130, 0
      %v5230 = vsel %vm370, %v5131, 0
      %5232 = vmatprep.subr.mxu0 0.0
      %5233 = vmatpush1.msra.mxu0 0.0
      %5234 = vmatprep.subr.mxu0 0.0
      %5235 = vmatpush1.msra.mxu0 0.0
      %5236 = vmatprep.subr.mxu0 0.0
      %5237 = vmatpush1.msra.mxu0 0.0
      %5238 = vmatprep.subr.mxu0 0.0
      %5239 = vmatpush1.msra.mxu0 0.0
      %5240 = vmatprep.subr.mxu0 0.0
      %5241 = vmatpush1.msra.mxu0 0.0
      %5242 = vmatprep.subr.mxu0 0.0
      %5243 = vmatpush1.msra.mxu0 0.0
      %5244 = vmatprep.subr.mxu0 0.0
      %5245 = vmatpush1.msra.mxu0 0.0
      %5246 = vmatprep.subr.mxu0 0.0
      %5247 = vmatpush1.msra.mxu0 0.0
      %5248 = vmatprep.subr.mxu0 0.0
      %5249 = vmatpush1.msra.mxu0 0.0
      %5250 = vmatprep.subr.mxu0 0.0
      %5251 = vmatpush1.msra.mxu0 0.0
      %5252 = vmatprep.subr.mxu0 0.0
      %5253 = vmatpush1.msra.mxu0 0.0
      %5254 = vmatprep.subr.mxu0 0.0
      %5255 = vmatpush1.msra.mxu0 0.0
      %5256 = vmatprep.subr.mxu0 0.0
      %5257 = vmatpush1.msra.mxu0 %v5135
      %5258 = vmatprep.subr.mxu0 0.0
      %5259 = vmatpush1.msra.mxu0 %v5134
      %5260 = vmatprep.subr.mxu0 0.0
      %5261 = vmatpush1.msra.mxu0 %v5133
      %5262 = vmatprep.subr.mxu0 0.0
      %5263 = vmatpush1.msra.mxu0 %v5132
      %5264 = vmatprep.subr.mxu0 0.0
      %5265 = vmatpush2.msra.mxu0 0.0
      %5266 = vmatprep.subr.mxu0 0.0
      %5267 = vmatpush2.msra.mxu0 0.0
      %5268 = vmatprep.subr.mxu0 0.0
      %5269 = vmatpush2.msra.mxu0 0.0
      %5270 = vmatprep.subr.mxu0 0.0
      %5271 = vmatpush2.msra.mxu0 0.0
      %5272 = vmatprep.subr.mxu0 0.0
      %5273 = vmatpush2.msra.mxu0 0.0
      %5274 = vmatprep.subr.mxu0 0.0
      %5275 = vmatpush2.msra.mxu0 0.0
      %5276 = vmatprep.subr.mxu0 0.0
      %5277 = vmatpush2.msra.mxu0 0.0
      %5278 = vmatprep.subr.mxu0 0.0
      %5279 = vmatpush2.msra.mxu0 0.0
      %5280 = vmatprep.subr.mxu0 0.0
      %5281 = vmatpush2.msra.mxu0 0.0
      %5282 = vmatprep.subr.mxu0 0.0
      %5283 = vmatpush2.msra.mxu0 0.0
      %5284 = vmatprep.subr.mxu0 0.0
      %5285 = vmatpush2.msra.mxu0 0.0
      %5286 = vmatprep.subr.mxu0 0.0
      %5287 = vmatpush2.msra.mxu0 0.0
      %5288 = vmatprep.subr.mxu0 0.0
      %5289 = vmatpush2.msra.mxu0 0.0
      %5290 = vmatprep.subr.mxu0 0.0
      %5291 = vmatpush2.msra.mxu0 0.0
      %5292 = vmatprep.subr.mxu0 0.0
      %5293 = vmatpush2.msra.mxu0 0.0
      %5294 = vmatprep.subr.mxu0 0.0
      %5295 = vmatpush2.msra.mxu0 0.0
      %5296 = vmatprep.mubr.f32.mxu0 0.0
      %5297 = vmatmul.mubr.f32.gmra.mxu0 %v5137
      %v5298 = vpop.f32.mrf.mxu0
      %v5299 = vadd.f32 0.0, %v5298
      %v5300 = vpop.f32.mrf.mxu0
      %5301 = vmatprep.mubr.f32.mxu0 0.0
      %5302 = vmatmul.mubr.f32.gmra.mxu0 %v5140
      %v5303 = vpop.f32.mrf.mxu0
      %v5304 = vadd.f32 0.0, %v5303
      %v5305 = vpop.f32.mrf.mxu0
      %5306 = vmatprep.mubr.f32.mxu0 0.0
      %5307 = vmatmul.mubr.f32.gmra.mxu0 %v5143
      %v5308 = vpop.f32.mrf.mxu0
      %v5309 = vadd.f32 0.0, %v5308
      %v5310 = vpop.f32.mrf.mxu0
      %5311 = vmatprep.mubr.f32.mxu0 0.0
      %5312 = vmatmul.mubr.f32.gmra.mxu0 %v5146
      %v5313 = vpop.f32.mrf.mxu0
      %v5314 = vadd.f32 0.0, %v5313
      %v5315 = vpop.f32.mrf.mxu0
      %5316 = vmatprep.mubr.f32.mxu0 0.0
      %5317 = vmatmul.mubr.f32.gmra.mxu0 %v5149
      %v5318 = vpop.f32.mrf.mxu0
      %v5319 = vadd.f32 0.0, %v5318
      %v5320 = vpop.f32.mrf.mxu0
      %5321 = vmatprep.mubr.f32.mxu0 0.0
      %5322 = vmatmul.mubr.f32.gmra.mxu0 %v5152
      %v5323 = vpop.f32.mrf.mxu0
      %v5324 = vadd.f32 0.0, %v5323
      %v5325 = vpop.f32.mrf.mxu0
      %5326 = vmatprep.mubr.f32.mxu0 0.0
      %5327 = vmatmul.mubr.f32.gmra.mxu0 %v5155
      %v5328 = vpop.f32.mrf.mxu0
      %v5329 = vadd.f32 0.0, %v5328
      %v5330 = vpop.f32.mrf.mxu0
      %5331 = vmatprep.mubr.f32.mxu0 0.0
      %5332 = vmatmul.mubr.f32.gmra.mxu0 %v5158
      %v5333 = vpop.f32.mrf.mxu0
      %v5334 = vadd.f32 0.0, %v5333
      %v5335 = vpop.f32.mrf.mxu0
      %5336 = vmatprep.mubr.f32.mxu0 0.0
      %5337 = vmatmul.mubr.f32.gmra.mxu0 %v5161
      %v5338 = vpop.f32.mrf.mxu0
      %v5339 = vadd.f32 0.0, %v5338
      %v5340 = vpop.f32.mrf.mxu0
      %5341 = vmatprep.mubr.f32.mxu0 0.0
      %5342 = vmatmul.mubr.f32.gmra.mxu0 %v5164
      %v5343 = vpop.f32.mrf.mxu0
      %v5344 = vadd.f32 0.0, %v5343
      %v5345 = vpop.f32.mrf.mxu0
      %5346 = vmatprep.mubr.f32.mxu0 0.0
      %5347 = vmatmul.mubr.f32.gmra.mxu0 %v5167
      %v5348 = vpop.f32.mrf.mxu0
      %v5349 = vadd.f32 0.0, %v5348
      %v5350 = vpop.f32.mrf.mxu0
      %5351 = vmatprep.mubr.f32.mxu0 0.0
      %5352 = vmatmul.mubr.f32.gmra.mxu0 %v5170
      %v5353 = vpop.f32.mrf.mxu0
      %v5354 = vadd.f32 0.0, %v5353
      %v5355 = vpop.f32.mrf.mxu0
      %5356 = vmatprep.mubr.f32.mxu0 0.0
      %5357 = vmatmul.mubr.f32.gmra.mxu0 %v5173
      %v5358 = vpop.f32.mrf.mxu0
      %v5359 = vadd.f32 0.0, %v5358
      %v5360 = vpop.f32.mrf.mxu0
      %5361 = vmatprep.mubr.f32.mxu0 0.0
      %5362 = vmatmul.mubr.f32.gmra.mxu0 %v5176
      %v5363 = vpop.f32.mrf.mxu0
      %v5364 = vadd.f32 0.0, %v5363
      %v5365 = vpop.f32.mrf.mxu0
      %5366 = vmatprep.mubr.f32.mxu0 0.0
      %5367 = vmatmul.mubr.f32.gmra.mxu0 %v5179
      %v5368 = vpop.f32.mrf.mxu0
      %v5369 = vadd.f32 0.0, %v5368
      %v5370 = vpop.f32.mrf.mxu0
      %5371 = vmatprep.mubr.f32.mxu0 0.0
      %5372 = vmatmul.mubr.f32.gmra.mxu0 %v5182
      %v5373 = vpop.f32.mrf.mxu0
      %v5374 = vadd.f32 0.0, %v5373
      %v5375 = vpop.f32.mrf.mxu0
      %5376 = vmatprep.mubr.f32.mxu0 0.0
      %5377 = vmatmul.mubr.f32.gmra.mxu0 %v5185
      %v5378 = vpop.f32.mrf.mxu0
      %v5379 = vadd.f32 0.0, %v5378
      %v5380 = vpop.f32.mrf.mxu0
      %5381 = vmatprep.mubr.f32.mxu0 0.0
      %5382 = vmatmul.mubr.f32.gmra.mxu0 %v5188
      %v5383 = vpop.f32.mrf.mxu0
      %v5384 = vadd.f32 0.0, %v5383
      %v5385 = vpop.f32.mrf.mxu0
      %5386 = vmatprep.mubr.f32.mxu0 0.0
      %5387 = vmatmul.mubr.f32.gmra.mxu0 %v5191
      %v5388 = vpop.f32.mrf.mxu0
      %v5389 = vadd.f32 0.0, %v5388
      %v5390 = vpop.f32.mrf.mxu0
      %5391 = vmatprep.mubr.f32.mxu0 0.0
      %5392 = vmatmul.mubr.f32.gmra.mxu0 %v5194
      %v5393 = vpop.f32.mrf.mxu0
      %v5394 = vadd.f32 0.0, %v5393
      %v5395 = vpop.f32.mrf.mxu0
      %5396 = vmatprep.mubr.f32.mxu0 0.0
      %5397 = vmatmul.mubr.f32.gmra.mxu0 %v5197
      %v5398 = vpop.f32.mrf.mxu0
      %v5399 = vadd.f32 0.0, %v5398
      %v5400 = vpop.f32.mrf.mxu0
      %5401 = vmatprep.mubr.f32.mxu0 0.0
      %5402 = vmatmul.mubr.f32.gmra.mxu0 %v5200
      %v5403 = vpop.f32.mrf.mxu0
      %v5404 = vadd.f32 0.0, %v5403
      %v5405 = vpop.f32.mrf.mxu0
      %5406 = vmatprep.mubr.f32.mxu0 0.0
      %5407 = vmatmul.mubr.f32.gmra.mxu0 %v5203
      %v5408 = vpop.f32.mrf.mxu0
      %v5409 = vadd.f32 0.0, %v5408
      %v5410 = vpop.f32.mrf.mxu0
      %5411 = vmatprep.mubr.f32.mxu0 0.0
      %5412 = vmatmul.mubr.f32.gmra.mxu0 %v5206
      %v5413 = vpop.f32.mrf.mxu0
      %v5414 = vadd.f32 0.0, %v5413
      %v5415 = vpop.f32.mrf.mxu0
      %5416 = vmatprep.mubr.f32.mxu0 0.0
      %5417 = vmatmul.mubr.f32.gmra.mxu0 %v5209
      %v5418 = vpop.f32.mrf.mxu0
      %v5419 = vadd.f32 0.0, %v5418
      %v5420 = vpop.f32.mrf.mxu0
      %5421 = vmatprep.mubr.f32.mxu0 0.0
      %5422 = vmatmul.mubr.f32.gmra.mxu0 %v5212
      %v5423 = vpop.f32.mrf.mxu0
      %v5424 = vadd.f32 0.0, %v5423
      %v5425 = vpop.f32.mrf.mxu0
      %5426 = vmatprep.mubr.f32.mxu0 0.0
      %5427 = vmatmul.mubr.f32.gmra.mxu0 %v5215
      %v5428 = vpop.f32.mrf.mxu0
      %v5429 = vadd.f32 0.0, %v5428
      %v5430 = vpop.f32.mrf.mxu0
      %5431 = vmatprep.mubr.f32.mxu0 0.0
      %5432 = vmatmul.mubr.f32.gmra.mxu0 %v5218
      %v5433 = vpop.f32.mrf.mxu0
      %v5434 = vadd.f32 0.0, %v5433
      %v5435 = vpop.f32.mrf.mxu0
      %5436 = vmatprep.mubr.f32.mxu0 0.0
      %5437 = vmatmul.mubr.f32.gmra.mxu0 %v5221
      %v5438 = vpop.f32.mrf.mxu0
      %v5439 = vadd.f32 0.0, %v5438
      %v5440 = vpop.f32.mrf.mxu0
      %5441 = vmatprep.mubr.f32.mxu0 0.0
      %5442 = vmatmul.mubr.f32.gmra.mxu0 %v5224
      %v5443 = vpop.f32.mrf.mxu0
      %v5444 = vadd.f32 0.0, %v5443
      %v5445 = vpop.f32.mrf.mxu0
      %5446 = vmatprep.mubr.f32.mxu0 0.0
      %5447 = vmatmul.mubr.f32.gmra.mxu0 %v5227
      %v5448 = vpop.f32.mrf.mxu0
      %v5449 = vadd.f32 0.0, %v5448
      %v5450 = vpop.f32.mrf.mxu0
      %5451 = vmatprep.mubr.f32.mxu0 0.0
      %5452 = vmatmul.mubr.f32.gmra.mxu0 %v5230
      %v5453 = vpop.f32.mrf.mxu0
      %v5454 = vadd.f32 0.0, %v5453
      %v5455 = vpop.f32.mrf.mxu0
      %5456 = vdwg.mxu0
      %v5457 = vadd.f32 %v5068, %v5299
      %v5458 = vadd.f32 %v5069, %v5304
      %v5459 = vadd.f32 %v5070, %v5309
      %v5460 = vadd.f32 %v5071, %v5314
      %v5461 = vadd.f32 %v5072, %v5319
      %v5462 = vadd.f32 %v5073, %v5324
      %v5463 = vadd.f32 %v5074, %v5329
      %v5464 = vadd.f32 %v5075, %v5334
      %v5465 = vadd.f32 %v5076, %v5339
      %v5466 = vadd.f32 %v5077, %v5344
      %v5467 = vadd.f32 %v5078, %v5349
      %v5468 = vadd.f32 %v5079, %v5354
      %v5469 = vadd.f32 %v5080, %v5359
      %v5470 = vadd.f32 %v5081, %v5364
      %v5471 = vadd.f32 %v5082, %v5369
      %v5472 = vadd.f32 %v5083, %v5374
      %v5473 = vadd.f32 %v5084, %v5379
      %v5474 = vadd.f32 %v5085, %v5384
      %v5475 = vadd.f32 %v5086, %v5389
      %v5476 = vadd.f32 %v5087, %v5394
      %v5477 = vadd.f32 %v5088, %v5399
      %v5478 = vadd.f32 %v5089, %v5404
      %v5479 = vadd.f32 %v5090, %v5409
      %v5480 = vadd.f32 %v5091, %v5414
      %v5481 = vadd.f32 %v5092, %v5419
      %v5482 = vadd.f32 %v5093, %v5424
      %v5483 = vadd.f32 %v5094, %v5429
      %v5484 = vadd.f32 %v5095, %v5434
      %v5485 = vadd.f32 %v5096, %v5439
      %v5486 = vadd.f32 %v5097, %v5444
      %v5487 = vadd.f32 %v5098, %v5449
      %v5488 = vadd.f32 %v5099, %v5454
      %v5489 = vld [vmem:[#allocation2 + $0x29] sm:$0xff]
      %v5490 = vld [vmem:[#allocation2 + $0x31] sm:$0xff]
      %v5491 = vld [vmem:[#allocation2 + $0x39] sm:$0xff]
      %v5492 = vld [vmem:[#allocation2 + $0x41] sm:$0xff]
      %v5493 = vld [vmem:[#allocation2 + $0x49] sm:$0xff]
      %v5494 = vld [vmem:[#allocation2 + $0x51] sm:$0xff]
      %v5495 = vld [vmem:[#allocation2 + $0x59] sm:$0xff]
      %v5496 = vld [vmem:[#allocation2 + $0x61] sm:$0xff]
      %v5497 = vld [vmem:[#allocation2 + $0x69] sm:$0xff]
      %v5498 = vld [vmem:[#allocation2 + $0x71] sm:$0xff]
      %v5499 = vld [vmem:[#allocation2 + $0x79] sm:$0xff]
      %v5500 = vld [vmem:[#allocation2 + $0x81] sm:$0xff]
      %v5501 = vld [vmem:[#allocation2 + $0x89] sm:$0xff]
      %v5502 = vld [vmem:[#allocation2 + $0x91] sm:$0xff]
      %v5503 = vld [vmem:[#allocation2 + $0x99] sm:$0xff]
      %v5504 = vld [vmem:[#allocation2 + $0xa1] sm:$0xff]
      %v5505 = vld [vmem:[#allocation2 + $0xa9] sm:$0xff]
      %v5506 = vld [vmem:[#allocation2 + $0xb1] sm:$0xff]
      %v5507 = vld [vmem:[#allocation2 + $0xb9] sm:$0xff]
      %v5508 = vld [vmem:[#allocation2 + $0xc1] sm:$0xff]
      %v5509 = vld [vmem:[#allocation2 + $0xc9] sm:$0xff]
      %v5510 = vld [vmem:[#allocation2 + $0xd1] sm:$0xff]
      %v5511 = vld [vmem:[#allocation2 + $0xd9] sm:$0xff]
      %v5512 = vld [vmem:[#allocation2 + $0xe1] sm:$0xff]
      %v5513 = vld [vmem:[#allocation2 + $0xe9] sm:$0xff]
      %v5514 = vld [vmem:[#allocation2 + $0xf1] sm:$0xff]
      %v5515 = vld [vmem:[#allocation2 + $0xf9] sm:$0xff]
      %v5516 = vld [vmem:[#allocation2 + $0x101] sm:$0xff]
      %v5517 = vld [vmem:[#allocation2 + $0x109] sm:$0xff]
      %v5518 = vld [vmem:[#allocation2 + $0x111] sm:$0xff]
      %v5519 = vld [vmem:[#allocation2 + $0x119] sm:$0xff]
      %v5520 = vld [vmem:[#allocation2 + $0x121] sm:$0xff]
      %v5521 = vsel %vm3027, %v5489, 0.0
      %v5522 = vsel %vm3028, %v5490, 0.0
      %v5523 = vsel %vm3029, %v5491, 0.0
      %v5524 = vsel %vm3030, %v5492, 0.0
      %v5525 = vsel %vm3031, %v5493, 0.0
      %v5526 = vsel %vm3032, %v5494, 0.0
      %v5527 = vsel %vm3033, %v5495, 0.0
      %v5528 = vsel %vm3034, %v5496, 0.0
      %v5529 = vsel %vm3035, %v5497, 0.0
      %v5530 = vsel %vm3036, %v5498, 0.0
      %v5531 = vsel %vm3037, %v5499, 0.0
      %v5532 = vsel %vm3038, %v5500, 0.0
      %v5533 = vsel %vm3039, %v5501, 0.0
      %v5534 = vsel %vm3040, %v5502, 0.0
      %v5535 = vsel %vm3041, %v5503, 0.0
      %v5536 = vsel %vm3042, %v5504, 0.0
      %v5537 = vsel %vm3043, %v5505, 0.0
      %v5538 = vsel %vm3044, %v5506, 0.0
      %v5539 = vsel %vm3045, %v5507, 0.0
      %v5540 = vsel %vm3046, %v5508, 0.0
      %v5541 = vsel %vm3047, %v5509, 0.0
      %v5542 = vsel %vm3048, %v5510, 0.0
      %v5543 = vsel %vm3049, %v5511, 0.0
      %v5544 = vsel %vm3050, %v5512, 0.0
      %v5545 = vsel %vm3051, %v5513, 0.0
      %v5546 = vsel %vm3052, %v5514, 0.0
      %v5547 = vsel %vm3053, %v5515, 0.0
      %v5548 = vsel %vm3054, %v5516, 0.0
      %v5549 = vsel %vm3055, %v5517, 0.0
      %v5550 = vsel %vm3056, %v5518, 0.0
      %v5551 = vsel %vm3057, %v5519, 0.0
      %v5552 = vsel %vm3058, %v5520, 0.0
      %v5553 = vld [vmem:[%s6 + $0x100] sm:$0xff]
      %v5554 = vld [vmem:[%s6 + $0x108] sm:$0xff]
      %v5555 = vld [vmem:[%s6 + $0x110] sm:$0xff]
      %v5556 = vld [vmem:[%s6 + $0x118] sm:$0xff]
      %v5558 = vsel %vm370, %v5521, 0
      %v5561 = vsel %vm370, %v5522, 0
      %v5564 = vsel %vm370, %v5523, 0
      %v5567 = vsel %vm370, %v5524, 0
      %v5570 = vsel %vm370, %v5525, 0
      %v5573 = vsel %vm370, %v5526, 0
      %v5576 = vsel %vm370, %v5527, 0
      %v5579 = vsel %vm370, %v5528, 0
      %v5582 = vsel %vm370, %v5529, 0
      %v5585 = vsel %vm370, %v5530, 0
      %v5588 = vsel %vm370, %v5531, 0
      %v5591 = vsel %vm370, %v5532, 0
      %v5594 = vsel %vm370, %v5533, 0
      %v5597 = vsel %vm370, %v5534, 0
      %v5600 = vsel %vm370, %v5535, 0
      %v5603 = vsel %vm370, %v5536, 0
      %v5606 = vsel %vm370, %v5537, 0
      %v5609 = vsel %vm370, %v5538, 0
      %v5612 = vsel %vm370, %v5539, 0
      %v5615 = vsel %vm370, %v5540, 0
      %v5618 = vsel %vm370, %v5541, 0
      %v5621 = vsel %vm370, %v5542, 0
      %v5624 = vsel %vm370, %v5543, 0
      %v5627 = vsel %vm370, %v5544, 0
      %v5630 = vsel %vm370, %v5545, 0
      %v5633 = vsel %vm370, %v5546, 0
      %v5636 = vsel %vm370, %v5547, 0
      %v5639 = vsel %vm370, %v5548, 0
      %v5642 = vsel %vm370, %v5549, 0
      %v5645 = vsel %vm370, %v5550, 0
      %v5648 = vsel %vm370, %v5551, 0
      %v5651 = vsel %vm370, %v5552, 0
      %5653 = vmatprep.subr.mxu0 0.0
      %5654 = vmatpush1.msra.mxu0 0.0
      %5655 = vmatprep.subr.mxu0 0.0
      %5656 = vmatpush1.msra.mxu0 0.0
      %5657 = vmatprep.subr.mxu0 0.0
      %5658 = vmatpush1.msra.mxu0 0.0
      %5659 = vmatprep.subr.mxu0 0.0
      %5660 = vmatpush1.msra.mxu0 0.0
      %5661 = vmatprep.subr.mxu0 0.0
      %5662 = vmatpush1.msra.mxu0 0.0
      %5663 = vmatprep.subr.mxu0 0.0
      %5664 = vmatpush1.msra.mxu0 0.0
      %5665 = vmatprep.subr.mxu0 0.0
      %5666 = vmatpush1.msra.mxu0 0.0
      %5667 = vmatprep.subr.mxu0 0.0
      %5668 = vmatpush1.msra.mxu0 0.0
      %5669 = vmatprep.subr.mxu0 0.0
      %5670 = vmatpush1.msra.mxu0 0.0
      %5671 = vmatprep.subr.mxu0 0.0
      %5672 = vmatpush1.msra.mxu0 0.0
      %5673 = vmatprep.subr.mxu0 0.0
      %5674 = vmatpush1.msra.mxu0 0.0
      %5675 = vmatprep.subr.mxu0 0.0
      %5676 = vmatpush1.msra.mxu0 0.0
      %5677 = vmatprep.subr.mxu0 0.0
      %5678 = vmatpush1.msra.mxu0 %v5556
      %5679 = vmatprep.subr.mxu0 0.0
      %5680 = vmatpush1.msra.mxu0 %v5555
      %5681 = vmatprep.subr.mxu0 0.0
      %5682 = vmatpush1.msra.mxu0 %v5554
      %5683 = vmatprep.subr.mxu0 0.0
      %5684 = vmatpush1.msra.mxu0 %v5553
      %5685 = vmatprep.subr.mxu0 0.0
      %5686 = vmatpush2.msra.mxu0 0.0
      %5687 = vmatprep.subr.mxu0 0.0
      %5688 = vmatpush2.msra.mxu0 0.0
      %5689 = vmatprep.subr.mxu0 0.0
      %5690 = vmatpush2.msra.mxu0 0.0
      %5691 = vmatprep.subr.mxu0 0.0
      %5692 = vmatpush2.msra.mxu0 0.0
      %5693 = vmatprep.subr.mxu0 0.0
      %5694 = vmatpush2.msra.mxu0 0.0
      %5695 = vmatprep.subr.mxu0 0.0
      %5696 = vmatpush2.msra.mxu0 0.0
      %5697 = vmatprep.subr.mxu0 0.0
      %5698 = vmatpush2.msra.mxu0 0.0
      %5699 = vmatprep.subr.mxu0 0.0
      %5700 = vmatpush2.msra.mxu0 0.0
      %5701 = vmatprep.subr.mxu0 0.0
      %5702 = vmatpush2.msra.mxu0 0.0
      %5703 = vmatprep.subr.mxu0 0.0
      %5704 = vmatpush2.msra.mxu0 0.0
      %5705 = vmatprep.subr.mxu0 0.0
      %5706 = vmatpush2.msra.mxu0 0.0
      %5707 = vmatprep.subr.mxu0 0.0
      %5708 = vmatpush2.msra.mxu0 0.0
      %5709 = vmatprep.subr.mxu0 0.0
      %5710 = vmatpush2.msra.mxu0 0.0
      %5711 = vmatprep.subr.mxu0 0.0
      %5712 = vmatpush2.msra.mxu0 0.0
      %5713 = vmatprep.subr.mxu0 0.0
      %5714 = vmatpush2.msra.mxu0 0.0
      %5715 = vmatprep.subr.mxu0 0.0
      %5716 = vmatpush2.msra.mxu0 0.0
      %5717 = vmatprep.mubr.f32.mxu0 0.0
      %5718 = vmatmul.mubr.f32.gmra.mxu0 %v5558
      %v5719 = vpop.f32.mrf.mxu0
      %v5720 = vadd.f32 0.0, %v5719
      %v5721 = vpop.f32.mrf.mxu0
      %5722 = vmatprep.mubr.f32.mxu0 0.0
      %5723 = vmatmul.mubr.f32.gmra.mxu0 %v5561
      %v5724 = vpop.f32.mrf.mxu0
      %v5725 = vadd.f32 0.0, %v5724
      %v5726 = vpop.f32.mrf.mxu0
      %5727 = vmatprep.mubr.f32.mxu0 0.0
      %5728 = vmatmul.mubr.f32.gmra.mxu0 %v5564
      %v5729 = vpop.f32.mrf.mxu0
      %v5730 = vadd.f32 0.0, %v5729
      %v5731 = vpop.f32.mrf.mxu0
      %5732 = vmatprep.mubr.f32.mxu0 0.0
      %5733 = vmatmul.mubr.f32.gmra.mxu0 %v5567
      %v5734 = vpop.f32.mrf.mxu0
      %v5735 = vadd.f32 0.0, %v5734
      %v5736 = vpop.f32.mrf.mxu0
      %5737 = vmatprep.mubr.f32.mxu0 0.0
      %5738 = vmatmul.mubr.f32.gmra.mxu0 %v5570
      %v5739 = vpop.f32.mrf.mxu0
      %v5740 = vadd.f32 0.0, %v5739
      %v5741 = vpop.f32.mrf.mxu0
      %5742 = vmatprep.mubr.f32.mxu0 0.0
      %5743 = vmatmul.mubr.f32.gmra.mxu0 %v5573
      %v5744 = vpop.f32.mrf.mxu0
      %v5745 = vadd.f32 0.0, %v5744
      %v5746 = vpop.f32.mrf.mxu0
      %5747 = vmatprep.mubr.f32.mxu0 0.0
      %5748 = vmatmul.mubr.f32.gmra.mxu0 %v5576
      %v5749 = vpop.f32.mrf.mxu0
      %v5750 = vadd.f32 0.0, %v5749
      %v5751 = vpop.f32.mrf.mxu0
      %5752 = vmatprep.mubr.f32.mxu0 0.0
      %5753 = vmatmul.mubr.f32.gmra.mxu0 %v5579
      %v5754 = vpop.f32.mrf.mxu0
      %v5755 = vadd.f32 0.0, %v5754
      %v5756 = vpop.f32.mrf.mxu0
      %5757 = vmatprep.mubr.f32.mxu0 0.0
      %5758 = vmatmul.mubr.f32.gmra.mxu0 %v5582
      %v5759 = vpop.f32.mrf.mxu0
      %v5760 = vadd.f32 0.0, %v5759
      %v5761 = vpop.f32.mrf.mxu0
      %5762 = vmatprep.mubr.f32.mxu0 0.0
      %5763 = vmatmul.mubr.f32.gmra.mxu0 %v5585
      %v5764 = vpop.f32.mrf.mxu0
      %v5765 = vadd.f32 0.0, %v5764
      %v5766 = vpop.f32.mrf.mxu0
      %5767 = vmatprep.mubr.f32.mxu0 0.0
      %5768 = vmatmul.mubr.f32.gmra.mxu0 %v5588
      %v5769 = vpop.f32.mrf.mxu0
      %v5770 = vadd.f32 0.0, %v5769
      %v5771 = vpop.f32.mrf.mxu0
      %5772 = vmatprep.mubr.f32.mxu0 0.0
      %5773 = vmatmul.mubr.f32.gmra.mxu0 %v5591
      %v5774 = vpop.f32.mrf.mxu0
      %v5775 = vadd.f32 0.0, %v5774
      %v5776 = vpop.f32.mrf.mxu0
      %5777 = vmatprep.mubr.f32.mxu0 0.0
      %5778 = vmatmul.mubr.f32.gmra.mxu0 %v5594
      %v5779 = vpop.f32.mrf.mxu0
      %v5780 = vadd.f32 0.0, %v5779
      %v5781 = vpop.f32.mrf.mxu0
      %5782 = vmatprep.mubr.f32.mxu0 0.0
      %5783 = vmatmul.mubr.f32.gmra.mxu0 %v5597
      %v5784 = vpop.f32.mrf.mxu0
      %v5785 = vadd.f32 0.0, %v5784
      %v5786 = vpop.f32.mrf.mxu0
      %5787 = vmatprep.mubr.f32.mxu0 0.0
      %5788 = vmatmul.mubr.f32.gmra.mxu0 %v5600
      %v5789 = vpop.f32.mrf.mxu0
      %v5790 = vadd.f32 0.0, %v5789
      %v5791 = vpop.f32.mrf.mxu0
      %5792 = vmatprep.mubr.f32.mxu0 0.0
      %5793 = vmatmul.mubr.f32.gmra.mxu0 %v5603
      %v5794 = vpop.f32.mrf.mxu0
      %v5795 = vadd.f32 0.0, %v5794
      %v5796 = vpop.f32.mrf.mxu0
      %5797 = vmatprep.mubr.f32.mxu0 0.0
      %5798 = vmatmul.mubr.f32.gmra.mxu0 %v5606
      %v5799 = vpop.f32.mrf.mxu0
      %v5800 = vadd.f32 0.0, %v5799
      %v5801 = vpop.f32.mrf.mxu0
      %5802 = vmatprep.mubr.f32.mxu0 0.0
      %5803 = vmatmul.mubr.f32.gmra.mxu0 %v5609
      %v5804 = vpop.f32.mrf.mxu0
      %v5805 = vadd.f32 0.0, %v5804
      %v5806 = vpop.f32.mrf.mxu0
      %5807 = vmatprep.mubr.f32.mxu0 0.0
      %5808 = vmatmul.mubr.f32.gmra.mxu0 %v5612
      %v5809 = vpop.f32.mrf.mxu0
      %v5810 = vadd.f32 0.0, %v5809
      %v5811 = vpop.f32.mrf.mxu0
      %5812 = vmatprep.mubr.f32.mxu0 0.0
      %5813 = vmatmul.mubr.f32.gmra.mxu0 %v5615
      %v5814 = vpop.f32.mrf.mxu0
      %v5815 = vadd.f32 0.0, %v5814
      %v5816 = vpop.f32.mrf.mxu0
      %5817 = vmatprep.mubr.f32.mxu0 0.0
      %5818 = vmatmul.mubr.f32.gmra.mxu0 %v5618
      %v5819 = vpop.f32.mrf.mxu0
      %v5820 = vadd.f32 0.0, %v5819
      %v5821 = vpop.f32.mrf.mxu0
      %5822 = vmatprep.mubr.f32.mxu0 0.0
      %5823 = vmatmul.mubr.f32.gmra.mxu0 %v5621
      %v5824 = vpop.f32.mrf.mxu0
      %v5825 = vadd.f32 0.0, %v5824
      %v5826 = vpop.f32.mrf.mxu0
      %5827 = vmatprep.mubr.f32.mxu0 0.0
      %5828 = vmatmul.mubr.f32.gmra.mxu0 %v5624
      %v5829 = vpop.f32.mrf.mxu0
      %v5830 = vadd.f32 0.0, %v5829
      %v5831 = vpop.f32.mrf.mxu0
      %5832 = vmatprep.mubr.f32.mxu0 0.0
      %5833 = vmatmul.mubr.f32.gmra.mxu0 %v5627
      %v5834 = vpop.f32.mrf.mxu0
      %v5835 = vadd.f32 0.0, %v5834
      %v5836 = vpop.f32.mrf.mxu0
      %5837 = vmatprep.mubr.f32.mxu0 0.0
      %5838 = vmatmul.mubr.f32.gmra.mxu0 %v5630
      %v5839 = vpop.f32.mrf.mxu0
      %v5840 = vadd.f32 0.0, %v5839
      %v5841 = vpop.f32.mrf.mxu0
      %5842 = vmatprep.mubr.f32.mxu0 0.0
      %5843 = vmatmul.mubr.f32.gmra.mxu0 %v5633
      %v5844 = vpop.f32.mrf.mxu0
      %v5845 = vadd.f32 0.0, %v5844
      %v5846 = vpop.f32.mrf.mxu0
      %5847 = vmatprep.mubr.f32.mxu0 0.0
      %5848 = vmatmul.mubr.f32.gmra.mxu0 %v5636
      %v5849 = vpop.f32.mrf.mxu0
      %v5850 = vadd.f32 0.0, %v5849
      %v5851 = vpop.f32.mrf.mxu0
      %5852 = vmatprep.mubr.f32.mxu0 0.0
      %5853 = vmatmul.mubr.f32.gmra.mxu0 %v5639
      %v5854 = vpop.f32.mrf.mxu0
      %v5855 = vadd.f32 0.0, %v5854
      %v5856 = vpop.f32.mrf.mxu0
      %5857 = vmatprep.mubr.f32.mxu0 0.0
      %5858 = vmatmul.mubr.f32.gmra.mxu0 %v5642
      %v5859 = vpop.f32.mrf.mxu0
      %v5860 = vadd.f32 0.0, %v5859
      %v5861 = vpop.f32.mrf.mxu0
      %5862 = vmatprep.mubr.f32.mxu0 0.0
      %5863 = vmatmul.mubr.f32.gmra.mxu0 %v5645
      %v5864 = vpop.f32.mrf.mxu0
      %v5865 = vadd.f32 0.0, %v5864
      %v5866 = vpop.f32.mrf.mxu0
      %5867 = vmatprep.mubr.f32.mxu0 0.0
      %5868 = vmatmul.mubr.f32.gmra.mxu0 %v5648
      %v5869 = vpop.f32.mrf.mxu0
      %v5870 = vadd.f32 0.0, %v5869
      %v5871 = vpop.f32.mrf.mxu0
      %5872 = vmatprep.mubr.f32.mxu0 0.0
      %5873 = vmatmul.mubr.f32.gmra.mxu0 %v5651
      %v5874 = vpop.f32.mrf.mxu0
      %v5875 = vadd.f32 0.0, %v5874
      %v5876 = vpop.f32.mrf.mxu0
      %5877 = vdwg.mxu0
      %v5878 = vadd.f32 %v5457, %v5720
      %v5879 = vadd.f32 %v5458, %v5725
      %v5880 = vadd.f32 %v5459, %v5730
      %v5881 = vadd.f32 %v5460, %v5735
      %v5882 = vadd.f32 %v5461, %v5740
      %v5883 = vadd.f32 %v5462, %v5745
      %v5884 = vadd.f32 %v5463, %v5750
      %v5885 = vadd.f32 %v5464, %v5755
      %v5886 = vadd.f32 %v5465, %v5760
      %v5887 = vadd.f32 %v5466, %v5765
      %v5888 = vadd.f32 %v5467, %v5770
      %v5889 = vadd.f32 %v5468, %v5775
      %v5890 = vadd.f32 %v5469, %v5780
      %v5891 = vadd.f32 %v5470, %v5785
      %v5892 = vadd.f32 %v5471, %v5790
      %v5893 = vadd.f32 %v5472, %v5795
      %v5894 = vadd.f32 %v5473, %v5800
      %v5895 = vadd.f32 %v5474, %v5805
      %v5896 = vadd.f32 %v5475, %v5810
      %v5897 = vadd.f32 %v5476, %v5815
      %v5898 = vadd.f32 %v5477, %v5820
      %v5899 = vadd.f32 %v5478, %v5825
      %v5900 = vadd.f32 %v5479, %v5830
      %v5901 = vadd.f32 %v5480, %v5835
      %v5902 = vadd.f32 %v5481, %v5840
      %v5903 = vadd.f32 %v5482, %v5845
      %v5904 = vadd.f32 %v5483, %v5850
      %v5905 = vadd.f32 %v5484, %v5855
      %v5906 = vadd.f32 %v5485, %v5860
      %v5907 = vadd.f32 %v5486, %v5865
      %v5908 = vadd.f32 %v5487, %v5870
      %v5909 = vadd.f32 %v5488, %v5875
      %v5910 = vld [vmem:[%s7] sm:$0x1]
      %v5912 = vlaneseq
      %v5913 = vshrl.u32 %v5912, 7
      %v5914 = vsub.s32 0, %v5913
      %v5915 = vrot.slane %v5910, %v5914
      %v5917 = vadd.f32 %v5878, %v5915
      %v5918 = vadd.f32 %v5879, %v5915
      %v5919 = vadd.f32 %v5880, %v5915
      %v5920 = vadd.f32 %v5881, %v5915
      %v5921 = vadd.f32 %v5882, %v5915
      %v5922 = vadd.f32 %v5883, %v5915
      %v5923 = vadd.f32 %v5884, %v5915
      %v5924 = vadd.f32 %v5885, %v5915
      %v5925 = vadd.f32 %v5886, %v5915
      %v5926 = vadd.f32 %v5887, %v5915
      %v5927 = vadd.f32 %v5888, %v5915
      %v5928 = vadd.f32 %v5889, %v5915
      %v5929 = vadd.f32 %v5890, %v5915
      %v5930 = vadd.f32 %v5891, %v5915
      %v5931 = vadd.f32 %v5892, %v5915
      %v5932 = vadd.f32 %v5893, %v5915
      %v5933 = vadd.f32 %v5894, %v5915
      %v5934 = vadd.f32 %v5895, %v5915
      %v5935 = vadd.f32 %v5896, %v5915
      %v5936 = vadd.f32 %v5897, %v5915
      %v5937 = vadd.f32 %v5898, %v5915
      %v5938 = vadd.f32 %v5899, %v5915
      %v5939 = vadd.f32 %v5900, %v5915
      %v5940 = vadd.f32 %v5901, %v5915
      %v5941 = vadd.f32 %v5902, %v5915
      %v5942 = vadd.f32 %v5903, %v5915
      %v5943 = vadd.f32 %v5904, %v5915
      %v5944 = vadd.f32 %v5905, %v5915
      %v5945 = vadd.f32 %v5906, %v5915
      %v5946 = vadd.f32 %v5907, %v5915
      %v5947 = vadd.f32 %v5908, %v5915
      %v5948 = vadd.f32 %v5909, %v5915
      %5949 = vst.msk [vmem:[%s333] sm:$0xff] %vm370, %v5917
      %5950 = vst.msk [vmem:[%s333 + $0x8] sm:$0xff] %vm370, %v5918
      %5951 = vst.msk [vmem:[%s333 + $0x10] sm:$0xff] %vm370, %v5919
      %5952 = vst.msk [vmem:[%s333 + $0x18] sm:$0xff] %vm370, %v5920
      %5953 = vst.msk [vmem:[%s333 + $0x20] sm:$0xff] %vm370, %v5921
      %5954 = vst.msk [vmem:[%s333 + $0x28] sm:$0xff] %vm370, %v5922
      %5955 = vst.msk [vmem:[%s333 + $0x30] sm:$0xff] %vm370, %v5923
      %5956 = vst.msk [vmem:[%s333 + $0x38] sm:$0xff] %vm370, %v5924
      %5957 = vst.msk [vmem:[%s333 + $0x40] sm:$0xff] %vm370, %v5925
      %5958 = vst.msk [vmem:[%s333 + $0x48] sm:$0xff] %vm370, %v5926
      %5959 = vst.msk [vmem:[%s333 + $0x50] sm:$0xff] %vm370, %v5927
      %5960 = vst.msk [vmem:[%s333 + $0x58] sm:$0xff] %vm370, %v5928
      %5961 = vst.msk [vmem:[%s333 + $0x60] sm:$0xff] %vm370, %v5929
      %5962 = vst.msk [vmem:[%s333 + $0x68] sm:$0xff] %vm370, %v5930
      %5963 = vst.msk [vmem:[%s333 + $0x70] sm:$0xff] %vm370, %v5931
      %5964 = vst.msk [vmem:[%s333 + $0x78] sm:$0xff] %vm370, %v5932
      %5965 = vst.msk [vmem:[%s333 + $0x80] sm:$0xff] %vm370, %v5933
      %5966 = vst.msk [vmem:[%s333 + $0x88] sm:$0xff] %vm370, %v5934
      %5967 = vst.msk [vmem:[%s333 + $0x90] sm:$0xff] %vm370, %v5935
      %5968 = vst.msk [vmem:[%s333 + $0x98] sm:$0xff] %vm370, %v5936
      %5969 = vst.msk [vmem:[%s333 + $0xa0] sm:$0xff] %vm370, %v5937
      %5970 = vst.msk [vmem:[%s333 + $0xa8] sm:$0xff] %vm370, %v5938
      %5971 = vst.msk [vmem:[%s333 + $0xb0] sm:$0xff] %vm370, %v5939
      %5972 = vst.msk [vmem:[%s333 + $0xb8] sm:$0xff] %vm370, %v5940
      %5973 = vst.msk [vmem:[%s333 + $0xc0] sm:$0xff] %vm370, %v5941
      %5974 = vst.msk [vmem:[%s333 + $0xc8] sm:$0xff] %vm370, %v5942
      %5975 = vst.msk [vmem:[%s333 + $0xd0] sm:$0xff] %vm370, %v5943
      %5976 = vst.msk [vmem:[%s333 + $0xd8] sm:$0xff] %vm370, %v5944
      %5977 = vst.msk [vmem:[%s333 + $0xe0] sm:$0xff] %vm370, %v5945
      %5978 = vst.msk [vmem:[%s333 + $0xe8] sm:$0xff] %vm370, %v5946
      %5979 = vst.msk [vmem:[%s333 + $0xf0] sm:$0xff] %vm370, %v5947
      %5980 = vst.msk [vmem:[%s333 + $0xf8] sm:$0xff] %vm370, %v5948
      %p5981 = scmp.lt.s32.totalorder %s19, 1
      %s5982 = scalar_select %p5981, %s19, 1
      %s5983 = smul.addr %s5982, 32
      %s5984 = smul.addr %s5983, 8
      %s5985 = scalar_lea.vmem %s8, %s5984
      // Predicated region
      $region53: #{tpu_custom_call.1} parent=51 // pred_check
        %p5986 = pneg %p220
      $region54: #{tpu_custom_call.1} parent=51 // pred_check_branch
        %5988 = sbr.rel (%p5986) target = $region56
      $region55: #{tpu_custom_call.1} parent=51 // pred_region
        _
      $region56: #{tpu_custom_call.1} parent=51 // pred_fallthru
        _
    $region52: #{tpu_custom_call.1} parent=5 // pred_fallthru
      _
    %p5989 = scmp.le.s32.totalorder 2, %s14
    // Predicated region
    $region57: #{tpu_custom_call.1} parent=5 // pred_check
      %p5990 = pneg %p5989
    $region58: #{tpu_custom_call.1} parent=5 // pred_check_branch
      %5992 = sbr.rel (%p5990) target = $region60
    $region59: #{tpu_custom_call.1} parent=5 // pred_region
      %s5993 = ssub.s32 %s14, 2
      // Predicated region
      $region61: #{tpu_custom_call.1} parent=59 // pred_check
        %p5994 = pneg %p226
      $region62: #{tpu_custom_call.1} parent=59 // pred_check_branch
        %5996 = sbr.rel (%p5994) target = $region64
      $region63: #{tpu_custom_call.1} parent=59 // pred_region
        %p5997 = scmp.lt.s32.totalorder %s20, 1
        %s5998 = scalar_select %p5997, %s20, 1
        %s5999 = smul.addr %s5998, 32
        %s6000 = smul.addr %s5999, 8
        %s6001 = scalar_lea.vmem %s8, %s6000
      $region64: #{tpu_custom_call.1} parent=59 // pred_fallthru
        _
    $region60: #{tpu_custom_call.1} parent=5 // pred_fallthru
      _
  $region6: #{tpu_custom_call.1} parent=0 // loop_footer
    %s18 = sadd.s32 1, %s14
  $region7: #{tpu_custom_call.1} parent=0 // loop_footer_branch
    %13 = sbr.rel target = $region3
  $region8: #{tpu_custom_call.1} parent=0 // loop_exit
    _

</llo_original>
